<compile_context>
chip_gen: v7x
topology: tpu7x:2x2x1
jax: 0.10.0
libtpu: 0.0.40
codegen_flags: <defaults>
</compile_context>

<pallas_src>
import jax
import jax.numpy as jnp
from jax.experimental import pallas as pl
from jax.experimental.pallas import tpu as pltpu


def _round_up(x, m):
    return (x + m - 1) // m * m


def _vmem_capacity_bytes():
    """Physical VMEM of the local chip; conservative (v7x-sized) fallback."""
    try:
        return int(pltpu.get_tpu_info().vmem_capacity_bytes)
    except Exception:
        return 64 * 1024 * 1024


def _pick_row_tile(H, Wp, Wo, Cin, Cout_p, budget):
    """Largest divisor of H (preferring multiples of 8) whose working set fits."""
    bf = 2  # bf16 operand bytes
    resident = (2 * (H + 2) * Wp * Cin * bf          # padded image, double-buffered
                + 2 * 3 * (3 * Cin) * Cout_p * bf)   # weights, double-buffered

    def need(th):
        col = (th + 2) * Wp * 3 * Cin * bf           # single-buffered scratch
        out_blk = 2 * th * Wo * Cout_p * 4           # double-buffered f32 out tile
        chunk_tmp = 3 * 8 * Wp * Cout_p * 4 + 3 * 8 * Wp * 3 * Cin * bf
        return resident + col + out_blk + chunk_tmp

    divisors = [d for d in range(1, H + 1) if H % d == 0]
    cands = [d for d in divisors if d % 8 == 0] or divisors
    fits = [d for d in cands if need(d) <= budget]
    if fits:
        return max(fits)
    # Even the smallest tile overflows the budget (huge padded frame).
    # TODO(synk): switch to the halo-tiled manual-DMA path in that regime.
    return min(cands)


def _conv3x3_kernel(x_ref, w_ref, o_ref, col_ref):
    """One (batch, row-tile) step of the 3x3 / stride-1 / pad-1 convolution.

    x_ref:   (H+2, Wp, Cin)      bf16 zero-padded NHWC image (resident per batch)
    w_ref:   (3, 3*Cin, Cout_p)  bf16 weights, indexed [dy, dx*Cin + ci, co]
    o_ref:   (TH, Wo, Cout_p)    f32 output row tile
    col_ref: (TH+2, Wp, 3*Cin)   bf16 scratch: dx-folded (K = 3*Cin) operand
    """
    TH, Wo, Cout_p = o_ref.shape
    THp, Wp, K3 = col_ref.shape
    Cin = x_ref.shape[-1]
    cdt = col_ref.dtype

    i = pl.program_id(1)
    row0 = i * TH
    if TH % 8 == 0:
        row0 = pl.multiple_of(row0, 8)

    # ---- Build the dx-folded operand once per grid step ---------------------
    # col[h, w, dx*Cin + ci] = x_pad[row0 + h, w + dx, ci].  The dx shifts are
    # realized here once (on unpacked f32 rows; cast back to bf16 at the store)
    # rather than as 9 per-tap unaligned sublane slices inside the matmul loop.
    slab_bf = x_ref[pl.ds(row0, THp), :, :]          # aligned, major-axis slice
    slab32 = slab_bf.astype(jnp.float32)
    col_ref[:, :, pl.ds(0, Cin)] = slab_bf
    col_ref[:, :, pl.ds(Cin, Cin)] = jnp.roll(slab32, -1, axis=1).astype(cdt)
    col_ref[:, :, pl.ds(2 * Cin, Cin)] = jnp.roll(slab32, -2, axis=1).astype(cdt)
    # (wrapped columns >= Wo only feed output columns that the wrapper drops)

    # ---- 8-row chunks: 3 big-K matmuls, accumulator written exactly once ----
    CH = 8 if TH % 8 == 0 else TH
    nchunks = TH // CH

    def chunk(c, carry):
        r0 = pl.multiple_of(c * CH, CH)

        def tap(dy):
            a = col_ref[pl.ds(r0 + dy, CH), :, :].reshape(CH * Wp, K3)
            return jnp.dot(a, w_ref[dy], preferred_element_type=jnp.float32)

        acc = tap(0)          # init from the first tap (no zeros + add pass)
        acc += tap(1)
        acc += tap(2)
        acc = acc.reshape(CH, Wp, Cout_p)
        o_ref[pl.ds(r0, CH), :, :] = acc[:, :Wo, :]   # lane-dense f32 store
        return carry

    jax.lax.fori_loop(0, nchunks, chunk, 0, unroll=True)


@jax.jit
def upsample(x, weight):
    """Restormer Upsample: 3x3 conv (no bias) + PixelShuffle(2).

    x:      (B, Cin, H, W)     NCHW, like the PyTorch module
    weight: (Cout, Cin, 3, 3)  OIHW conv weight, Cout == 2 * Cin
    returns (B, Cout // 4, 2H, 2W) NCHW
    """
    B, Cin, H, W = x.shape
    Cout = weight.shape[0]
    assert weight.shape == (Cout, Cin, 3, 3)
    assert Cout % 4 == 0, "PixelShuffle(2) needs Cout % 4 == 0"

    cdt = jnp.bfloat16                    # MXU-native operand dtype
    Cout_p = _round_up(Cout, 128)         # lane-dense output stores
    Wp = _round_up(W + 2, 8)              # conv halo + sublane-aligned width
    Hp = H + 2
    Wo = W if W % 8 == 0 else Wp          # store only real columns when aligned

    # NCHW -> NHWC, zero pad for the 3x3 halo (+ right pad to Wp), cast bf16.
    x_nhwc = jnp.transpose(x, (0, 2, 3, 1))
    x_pad = jnp.pad(x_nhwc, ((0, 0), (1, 1), (1, Wp - W - 1), (0, 0))).astype(cdt)

    # OIHW -> [dy, dx*Cin + ci, co], pad co to Cout_p with zeros, cast bf16.
    w3 = jnp.transpose(weight, (2, 3, 1, 0)).reshape(3, 3 * Cin, Cout)
    w3 = jnp.pad(w3, ((0, 0), (0, 0), (0, Cout_p - Cout))).astype(cdt)

    cap = _vmem_capacity_bytes()
    TH = _pick_row_tile(H, Wp, Wo, Cin, Cout_p, budget=int(0.75 * cap))
    grid = (B, H // TH)

    cost = pl.CostEstimate(
        flops=2 * B * H * Wo * (9 * Cin) * Cout_p,
        transcendentals=0,
        bytes_accessed=(x_pad.size * 2 + w3.size * 2 + B * H * Wo * Cout_p * 4),
    )

    conv = pl.pallas_call(
        _conv3x3_kernel,
        out_shape=jax.ShapeDtypeStruct((B, H, Wo, Cout_p), jnp.float32),
        grid_spec=pltpu.PrefetchScalarGridSpec(
            num_scalar_prefetch=0,
            grid=grid,
            in_specs=[
                # Whole padded image: resident across this batch element's rows.
                pl.BlockSpec((None, Hp, Wp, Cin), lambda b, i: (b, 0, 0, 0)),
                # Weights: constant index map -> fetched once, stays in VMEM.
                pl.BlockSpec((3, 3 * Cin, Cout_p), lambda b, i: (0, 0, 0)),
            ],
            out_specs=pl.BlockSpec((None, TH, Wo, Cout_p),
                                   lambda b, i: (b, i, 0, 0)),
            scratch_shapes=[pltpu.VMEM((TH + 2, Wp, 3 * Cin), cdt)],
        ),
        compiler_params=pltpu.CompilerParams(
            # Row axis "arbitrary": megacore parallelism comes from the batch
            # axis, so one image is never DMA'd/held twice (once per core).
            dimension_semantics=("parallel", "arbitrary"),
            vmem_limit_bytes=int(0.85 * cap),
        ),
        cost_estimate=cost,
    )(x_pad, w3)

    # Drop padded columns/channels, PixelShuffle(2), NHWC -> NCHW: one fused
    # XLA layout pass under jit.
    conv = conv[:, :, :W, :Cout]
    r = 2
    Cps = Cout // (r * r)
    y = conv.reshape(B, H, W, Cps, r, r)
    y = jnp.transpose(y, (0, 1, 4, 2, 5, 3)).reshape(B, H * r, W * r, Cps)
    return jnp.transpose(y, (0, 3, 1, 2)).astype(x.dtype)


if __name__ == "__main__":
    key = jax.random.PRNGKey(0)
    k_x, k_w = jax.random.split(key)

    # Small Restormer-style shapes; n_feat=64 -> Cout=128 (already lane-dense).
    B, n_feat, H, W = 2, 64, 16, 16
    x = jax.random.normal(k_x, (B, n_feat, H, W), dtype=jnp.float32)
    weight = 0.05 * jax.random.normal(k_w, (2 * n_feat, n_feat, 3, 3),
                                      dtype=jnp.float32)

    y = jax.block_until_ready(upsample(x, weight))
    assert y.shape == (B, n_feat // 2, 2 * H, 2 * W)

    # Reference: conv3x3 (pad 1, no bias) + PixelShuffle(2) from the same
    # bf16-rounded operands with f32 accumulation (matches the kernel math).
    xb = x.astype(jnp.bfloat16)
    wb = weight.astype(jnp.bfloat16)
    conv_ref = jax.lax.conv_general_dilated(
        xb, wb, window_strides=(1, 1), padding=((1, 1), (1, 1)),
        dimension_numbers=("NCHW", "OIHW", "NCHW"),
        preferred_element_type=jnp.float32)
    r = 2
    Cps = (2 * n_feat) // (r * r)
    ref = conv_ref.reshape(B, Cps, r, r, H, W)
    ref = jnp.transpose(ref, (0, 1, 4, 2, 5, 3)).reshape(B, Cps, H * r, W * r)

    err = float(jnp.max(jnp.abs(y - ref)))
    assert jnp.allclose(y, ref, atol=1e-2, rtol=1e-2), err
    print("KERNEL_OK")
</pallas_src>

<mosaic_0001>
module attributes {stable_mosaic.version = 11 : i64} {
  func.func @_conv3x3_kernel(%arg0: i32, %arg1: i32, %arg2: memref<1x18x24x64xbf16, #tpu.memory_space<vmem>>, %arg3: memref<3x192x128xbf16, #tpu.memory_space<vmem>>, %arg4: memref<1x16x16x128xf32, #tpu.memory_space<vmem>>, %arg5: memref<18x24x192xbf16, #tpu.memory_space<vmem>>) attributes {dimension_semantics = [#tpu.dimension_semantics<parallel>, #tpu.dimension_semantics<arbitrary>], iteration_bounds = array<i64: 2, 1>, scalar_prefetch = 0 : i64, scratch_operands = 1 : i64, tpu.core_type = #tpu.core_type<tc>, window_params = [{transform_indices = @transform_0, window_bounds = array<i64: 1, 18, 24, 64>}, {pipeline_mode = #tpu.pipeline_mode<synchronous>, transform_indices = @transform_1, window_bounds = array<i64: 3, 192, 128>}, {transform_indices = @transform_2, window_bounds = array<i64: 1, 16, 16, 128>}]} {
    %c16_i32 = arith.constant 16 : i32
    %0 = arith.muli %arg1, %c16_i32 : i32
    %1 = tpu.assume_multiple %0, 8 : i32
    %c0 = arith.constant 0 : index
    %2 = arith.index_cast %1 : i32 to index
    %c0_0 = arith.constant 0 : index
    %c0_1 = arith.constant 0 : index
    %3 = vector.load %arg2[%c0, %2, %c0_0, %c0_1] : memref<1x18x24x64xbf16, #tpu.memory_space<vmem>>, vector<1x18x24x64xbf16>
    %4 = vector.shape_cast %3 : vector<1x18x24x64xbf16> to vector<18x24x64xbf16>
    %5 = arith.extf %4 : vector<18x24x64xbf16> to vector<18x24x64xf32>
    %c0_2 = arith.constant 0 : index
    %c0_3 = arith.constant 0 : index
    %c0_4 = arith.constant 0 : index
    %6 = vector.load %arg5[%c0_2, %c0_3, %c0_4] : memref<18x24x192xbf16, #tpu.memory_space<vmem>>, vector<18x24x64xbf16>
    tpu.vector_store %arg5[%c0_2, %c0_3, %c0_4], %4 {strides = array<i32>} : memref<18x24x192xbf16, #tpu.memory_space<vmem>>, vector<18x24x64xbf16>,
    %7 = vector.extract_strided_slice %5 {offsets = [0, 1, 0], sizes = [18, 23, 64], strides = [1, 1, 1]} : vector<18x24x64xf32> to vector<18x23x64xf32>
    %8 = vector.extract_strided_slice %5 {offsets = [0, 0, 0], sizes = [18, 1, 64], strides = [1, 1, 1]} : vector<18x24x64xf32> to vector<18x1x64xf32>
    %9 = tpu.concatenate %7, %8 in 1 : vector<18x23x64xf32>, vector<18x1x64xf32> -> vector<18x24x64xf32>
    %10 = arith.truncf %9 : vector<18x24x64xf32> to vector<18x24x64xbf16>
    %c0_5 = arith.constant 0 : index
    %c0_6 = arith.constant 0 : index
    %c64 = arith.constant 64 : index
    %11 = vector.load %arg5[%c0_5, %c0_6, %c64] : memref<18x24x192xbf16, #tpu.memory_space<vmem>>, vector<18x24x64xbf16>
    tpu.vector_store %arg5[%c0_5, %c0_6, %c64], %10 {strides = array<i32>} : memref<18x24x192xbf16, #tpu.memory_space<vmem>>, vector<18x24x64xbf16>,
    %12 = vector.extract_strided_slice %5 {offsets = [0, 2, 0], sizes = [18, 22, 64], strides = [1, 1, 1]} : vector<18x24x64xf32> to vector<18x22x64xf32>
    %13 = vector.extract_strided_slice %5 {offsets = [0, 0, 0], sizes = [18, 2, 64], strides = [1, 1, 1]} : vector<18x24x64xf32> to vector<18x2x64xf32>
    %14 = tpu.concatenate %12, %13 in 1 : vector<18x22x64xf32>, vector<18x2x64xf32> -> vector<18x24x64xf32>
    %15 = arith.truncf %14 : vector<18x24x64xf32> to vector<18x24x64xbf16>
    %c0_7 = arith.constant 0 : index
    %c0_8 = arith.constant 0 : index
    %c128 = arith.constant 128 : index
    %16 = vector.load %arg5[%c0_7, %c0_8, %c128] : memref<18x24x192xbf16, #tpu.memory_space<vmem>>, vector<18x24x64xbf16>
    tpu.vector_store %arg5[%c0_7, %c0_8, %c128], %15 {strides = array<i32>} : memref<18x24x192xbf16, #tpu.memory_space<vmem>>, vector<18x24x64xbf16>,
    %c0_i32 = arith.constant 0 : i32
    %c8_i32 = arith.constant 8 : i32
    %17 = arith.muli %c0_i32, %c8_i32 : i32
    %18 = tpu.assume_multiple %17, 8 : i32
    %c0_i32_9 = arith.constant 0 : i32
    %19 = arith.addi %18, %c0_i32_9 : i32
    %20 = arith.index_cast %19 : i32 to index
    %c0_10 = arith.constant 0 : index
    %c0_11 = arith.constant 0 : index
    %21 = vector.load %arg5[%20, %c0_10, %c0_11] : memref<18x24x192xbf16, #tpu.memory_space<vmem>>, vector<8x24x192xbf16>
    %22 = vector.shape_cast %21 : vector<8x24x192xbf16> to vector<192x192xbf16>
    %c0_12 = arith.constant 0 : index
    %c0_13 = arith.constant 0 : index
    %c0_14 = arith.constant 0 : index
    %23 = vector.load %arg3[%c0_12, %c0_13, %c0_14] : memref<3x192x128xbf16, #tpu.memory_space<vmem>>, vector<1x192x128xbf16>
    %24 = vector.shape_cast %23 : vector<1x192x128xbf16> to vector<192x128xbf16>
    %cst = arith.constant dense<0.000000e+00> : vector<192x128xf32>
    %25 = tpu.matmul %22, %24, %cst {dimension_numbers = #tpu.dot_dimension_numbers<[1], [0], [0], [1], [0, 0, 1, 1], [], []>} : vector<192x192xbf16>, vector<192x128xbf16>, vector<192x128xf32> -> vector<192x128xf32>
    %c1_i32 = arith.constant 1 : i32
    %26 = arith.addi %18, %c1_i32 : i32
    %27 = arith.index_cast %26 : i32 to index
    %c0_15 = arith.constant 0 : index
    %c0_16 = arith.constant 0 : index
    %28 = vector.load %arg5[%27, %c0_15, %c0_16] : memref<18x24x192xbf16, #tpu.memory_space<vmem>>, vector<8x24x192xbf16>
    %29 = vector.shape_cast %28 : vector<8x24x192xbf16> to vector<192x192xbf16>
    %c1 = arith.constant 1 : index
    %c0_17 = arith.constant 0 : index
    %c0_18 = arith.constant 0 : index
    %30 = vector.load %arg3[%c1, %c0_17, %c0_18] : memref<3x192x128xbf16, #tpu.memory_space<vmem>>, vector<1x192x128xbf16>
    %31 = vector.shape_cast %30 : vector<1x192x128xbf16> to vector<192x128xbf16>
    %cst_19 = arith.constant dense<0.000000e+00> : vector<192x128xf32>
    %32 = tpu.matmul %29, %31, %cst_19 {dimension_numbers = #tpu.dot_dimension_numbers<[1], [0], [0], [1], [0, 0, 1, 1], [], []>} : vector<192x192xbf16>, vector<192x128xbf16>, vector<192x128xf32> -> vector<192x128xf32>
    %33 = arith.addf %25, %32 : vector<192x128xf32>
    %c2_i32 = arith.constant 2 : i32
    %34 = arith.addi %18, %c2_i32 : i32
    %35 = arith.index_cast %34 : i32 to index
    %c0_20 = arith.constant 0 : index
    %c0_21 = arith.constant 0 : index
    %36 = vector.load %arg5[%35, %c0_20, %c0_21] : memref<18x24x192xbf16, #tpu.memory_space<vmem>>, vector<8x24x192xbf16>
    %37 = vector.shape_cast %36 : vector<8x24x192xbf16> to vector<192x192xbf16>
    %c2 = arith.constant 2 : index
    %c0_22 = arith.constant 0 : index
    %c0_23 = arith.constant 0 : index
    %38 = vector.load %arg3[%c2, %c0_22, %c0_23] : memref<3x192x128xbf16, #tpu.memory_space<vmem>>, vector<1x192x128xbf16>
    %39 = vector.shape_cast %38 : vector<1x192x128xbf16> to vector<192x128xbf16>
    %cst_24 = arith.constant dense<0.000000e+00> : vector<192x128xf32>
    %40 = tpu.matmul %37, %39, %cst_24 {dimension_numbers = #tpu.dot_dimension_numbers<[1], [0], [0], [1], [0, 0, 1, 1], [], []>} : vector<192x192xbf16>, vector<192x128xbf16>, vector<192x128xf32> -> vector<192x128xf32>
    %41 = arith.addf %33, %40 : vector<192x128xf32>
    %42 = vector.shape_cast %41 : vector<192x128xf32> to vector<8x24x128xf32>
    %43 = vector.extract_strided_slice %42 {offsets = [0, 0, 0], sizes = [8, 16, 128], strides = [1, 1, 1]} : vector<8x24x128xf32> to vector<8x16x128xf32>
    %c0_25 = arith.constant 0 : index
    %44 = arith.index_cast %18 : i32 to index
    %c0_26 = arith.constant 0 : index
    %c0_27 = arith.constant 0 : index
    %45 = vector.load %arg4[%c0_25, %44, %c0_26, %c0_27] : memref<1x16x16x128xf32, #tpu.memory_space<vmem>>, vector<1x8x16x128xf32>
    %46 = vector.shape_cast %45 : vector<1x8x16x128xf32> to vector<8x16x128xf32>
    %47 = vector.shape_cast %43 : vector<8x16x128xf32> to vector<1x8x16x128xf32>
    tpu.vector_store %arg4[%c0_25, %44, %c0_26, %c0_27], %47 {strides = array<i32>} : memref<1x16x16x128xf32, #tpu.memory_space<vmem>>, vector<1x8x16x128xf32>,
    %c1_i32_28 = arith.constant 1 : i32
    %c8_i32_29 = arith.constant 8 : i32
    %48 = arith.muli %c1_i32_28, %c8_i32_29 : i32
    %49 = tpu.assume_multiple %48, 8 : i32
    %c0_i32_30 = arith.constant 0 : i32
    %50 = arith.addi %49, %c0_i32_30 : i32
    %51 = arith.index_cast %50 : i32 to index
    %c0_31 = arith.constant 0 : index
    %c0_32 = arith.constant 0 : index
    %52 = vector.load %arg5[%51, %c0_31, %c0_32] : memref<18x24x192xbf16, #tpu.memory_space<vmem>>, vector<8x24x192xbf16>
    %53 = vector.shape_cast %52 : vector<8x24x192xbf16> to vector<192x192xbf16>
    %c0_33 = arith.constant 0 : index
    %c0_34 = arith.constant 0 : index
    %c0_35 = arith.constant 0 : index
    %54 = vector.load %arg3[%c0_33, %c0_34, %c0_35] : memref<3x192x128xbf16, #tpu.memory_space<vmem>>, vector<1x192x128xbf16>
    %55 = vector.shape_cast %54 : vector<1x192x128xbf16> to vector<192x128xbf16>
    %cst_36 = arith.constant dense<0.000000e+00> : vector<192x128xf32>
    %56 = tpu.matmul %53, %55, %cst_36 {dimension_numbers = #tpu.dot_dimension_numbers<[1], [0], [0], [1], [0, 0, 1, 1], [], []>} : vector<192x192xbf16>, vector<192x128xbf16>, vector<192x128xf32> -> vector<192x128xf32>
    %c1_i32_37 = arith.constant 1 : i32
    %57 = arith.addi %49, %c1_i32_37 : i32
    %58 = arith.index_cast %57 : i32 to index
    %c0_38 = arith.constant 0 : index
    %c0_39 = arith.constant 0 : index
    %59 = vector.load %arg5[%58, %c0_38, %c0_39] : memref<18x24x192xbf16, #tpu.memory_space<vmem>>, vector<8x24x192xbf16>
    %60 = vector.shape_cast %59 : vector<8x24x192xbf16> to vector<192x192xbf16>
    %c1_40 = arith.constant 1 : index
    %c0_41 = arith.constant 0 : index
    %c0_42 = arith.constant 0 : index
    %61 = vector.load %arg3[%c1_40, %c0_41, %c0_42] : memref<3x192x128xbf16, #tpu.memory_space<vmem>>, vector<1x192x128xbf16>
    %62 = vector.shape_cast %61 : vector<1x192x128xbf16> to vector<192x128xbf16>
    %cst_43 = arith.constant dense<0.000000e+00> : vector<192x128xf32>
    %63 = tpu.matmul %60, %62, %cst_43 {dimension_numbers = #tpu.dot_dimension_numbers<[1], [0], [0], [1], [0, 0, 1, 1], [], []>} : vector<192x192xbf16>, vector<192x128xbf16>, vector<192x128xf32> -> vector<192x128xf32>
    %64 = arith.addf %56, %63 : vector<192x128xf32>
    %c2_i32_44 = arith.constant 2 : i32
    %65 = arith.addi %49, %c2_i32_44 : i32
    %66 = arith.index_cast %65 : i32 to index
    %c0_45 = arith.constant 0 : index
    %c0_46 = arith.constant 0 : index
    %67 = vector.load %arg5[%66, %c0_45, %c0_46] : memref<18x24x192xbf16, #tpu.memory_space<vmem>>, vector<8x24x192xbf16>
    %68 = vector.shape_cast %67 : vector<8x24x192xbf16> to vector<192x192xbf16>
    %c2_47 = arith.constant 2 : index
    %c0_48 = arith.constant 0 : index
    %c0_49 = arith.constant 0 : index
    %69 = vector.load %arg3[%c2_47, %c0_48, %c0_49] : memref<3x192x128xbf16, #tpu.memory_space<vmem>>, vector<1x192x128xbf16>
    %70 = vector.shape_cast %69 : vector<1x192x128xbf16> to vector<192x128xbf16>
    %cst_50 = arith.constant dense<0.000000e+00> : vector<192x128xf32>
    %71 = tpu.matmul %68, %70, %cst_50 {dimension_numbers = #tpu.dot_dimension_numbers<[1], [0], [0], [1], [0, 0, 1, 1], [], []>} : vector<192x192xbf16>, vector<192x128xbf16>, vector<192x128xf32> -> vector<192x128xf32>
    %72 = arith.addf %64, %71 : vector<192x128xf32>
    %73 = vector.shape_cast %72 : vector<192x128xf32> to vector<8x24x128xf32>
    %74 = vector.extract_strided_slice %73 {offsets = [0, 0, 0], sizes = [8, 16, 128], strides = [1, 1, 1]} : vector<8x24x128xf32> to vector<8x16x128xf32>
    %c0_51 = arith.constant 0 : index
    %75 = arith.index_cast %49 : i32 to index
    %c0_52 = arith.constant 0 : index
    %c0_53 = arith.constant 0 : index
    %76 = vector.load %arg4[%c0_51, %75, %c0_52, %c0_53] : memref<1x16x16x128xf32, #tpu.memory_space<vmem>>, vector<1x8x16x128xf32>
    %77 = vector.shape_cast %76 : vector<1x8x16x128xf32> to vector<8x16x128xf32>
    %78 = vector.shape_cast %74 : vector<8x16x128xf32> to vector<1x8x16x128xf32>
    tpu.vector_store %arg4[%c0_51, %75, %c0_52, %c0_53], %78 {strides = array<i32>} : memref<1x16x16x128xf32, #tpu.memory_space<vmem>>, vector<1x8x16x128xf32>,
    %c2_i32_54 = arith.constant 2 : i32
    return
  }
  func.func @transform_0(%arg0: i32, %arg1: i32) -> (i32, i32, i32, i32) {
    %c0_i32 = arith.constant 0 : i32
    %c0_i32_0 = arith.constant 0 : i32
    %c0_i32_1 = arith.constant 0 : i32
    %c0_i32_2 = arith.constant 0 : i32
    return %arg0, %c0_i32, %c0_i32_0, %c0_i32_1 : i32, i32, i32, i32
  }
  func.func @transform_1(%arg0: i32, %arg1: i32) -> (i32, i32, i32) {
    %c0_i32 = arith.constant 0 : i32
    %c0_i32_0 = arith.constant 0 : i32
    %c0_i32_1 = arith.constant 0 : i32
    %c0_i32_2 = arith.constant 0 : i32
    return %c0_i32, %c0_i32_0, %c0_i32_1 : i32, i32, i32
  }
  func.func @transform_2(%arg0: i32, %arg1: i32) -> (i32, i32, i32, i32) {
    %c0_i32 = arith.constant 0 : i32
    %c0_i32_0 = arith.constant 0 : i32
    %c0_i32_1 = arith.constant 0 : i32
    return %arg0, %arg1, %c0_i32, %c0_i32_0 : i32, i32, i32, i32
  }
}

</mosaic_0001>

<llo_original>
// kernel: upsample.1
$region0: #{upsample.1}
  #allocation0 [shape = 'u32[]', space=smem, size = 0x4, offset = 0x4, fixed_abs, tag = 'smem constant byte address 0x4 - core index']
  #allocation1 [shape = 'u32[144,128]{1,0:T(1,128)}', space=vmem, size = 0x12000, scoped, tag = 'internal scratch']
  #allocation2 [shape = 'bf16[18,24,192]{2,1,0:T(8,128)(2,1)}', space=vmem, size = 0x36000, scoped, tag = 'scratch operand']
  %s0 = inlined_call_operand.vmem [shape: bf16[2,18,24,64], index: 0, kind: input, shape index: {}]
  %s1 = inlined_call_operand.vmem [shape: bf16[3,192,128], index: 1, kind: input, shape index: {}]
  %s2 = inlined_call_operand.vmem [shape: f32[2,16,16,128], index: 2, kind: output, shape index: {}]
  %s3 = sld [smem:[#allocation0]]
  $region41: #{upsample.1} parent=0
    _
  %s5 = ssub.s32 1, %s3
  %s6 = scalar_select 0, %s5, %s3
  loop: start=0, step=1, limit=4
  $region2: #{upsample.1} parent=0 // loop_pre_header
    _
  $region3: #{upsample.1} parent=0 // loop_header
    %s8 = sphi 0, %s12
    %p9 = scmp.ge.s32.totalorder %s8, 4
    %s15 = sphi 0, %s27
    %s16 = sphi 0, %s23
    %s17 = sphi 0, %s15
    %s18 = sphi 0, %s16
    %s19 = sphi 0, %s17
    %s20 = sphi 0, %s18
    %s30 = sphi 0, %s32
    %s33 = sphi 0, %s30
    %s34 = sphi 0, %s33
    %s50 = sphi 0, %s34
    %s54 = sphi 0, %s54
    %s56 = sphi 0, %s54
    %s57 = sphi 0, %s56
    %s71 = sphi 0, %s57
    %s79 = sphi 0, %s81
    %s82 = sphi 0, %s79
    %s83 = sphi 0, %s82
    %s99 = sphi 0, %s83
  $region4: #{upsample.1} parent=0 // loop_header_branch
    %11 = sbr.rel (%p9) target = $region8
  $region5: #{upsample.1} parent=0 // loop_body
    %s13 = ssub.s32 %s8, 1
    %s14 = ssub.s32 %s8, 2
    %s21 = sadd.s32 1, %s16
    %p22 = scmp.ge.s32.totalorder %s21, 1
    %s23 = scalar_select %p22, 0, %s21
    %s24 = sadd.s32 1, %s15
    %s25 = scalar_select %p22, %s24, %s15
    %p26 = scmp.ge.s32.totalorder %s25, 2
    %s27 = scalar_select %p26, 0, %s25
    %s28 = ssub.s32 %s15, %s27
    %p29 = scmp.eq.s32.totalorder %s28, 0
    %s31 = sadd.s32 %s30, 1
    %s32 = scalar_select %p29, %s30, %s31
    %p35 = pneg %p29
    %p36 = scmp.eq.s32.totalorder %s8, 1
    %p37 = por %p35, %p36
    %p38 = scmp.ne.s32.totalorder %s30, %s33
    %p39 = scmp.eq.s32.totalorder %s8, 0
    %p40 = por %p38, %p39
    %p41 = scmp.ne.s32.totalorder %s30, %s33
    %p42 = scmp.eq.s32.totalorder %s13, 1
    %p43 = por %p41, %p42
    %p44 = scmp.ne.s32.totalorder %s33, %s34
    %p45 = scmp.eq.s32.totalorder %s13, 0
    %p46 = por %p44, %p45
    %p47 = scmp.ne.s32.totalorder %s33, %s34
    %p48 = scmp.eq.s32.totalorder %s14, 1
    %p49 = por %p47, %p48
    %p51 = scmp.ne.s32.totalorder %s34, %s50
    %p52 = scmp.eq.s32.totalorder %s14, 0
    %p53 = por %p51, %p52
    %s55 = sadd.s32 %s54, 1
    %p58 = scmp.eq.s32.totalorder %s8, 1
    %p59 = scmp.ne.s32.totalorder %s54, %s56
    %p60 = scmp.eq.s32.totalorder %s8, 0
    %p61 = por %p59, %p60
    %p62 = scmp.ne.s32.totalorder %s54, %s56
    %p63 = scmp.eq.s32.totalorder %s13, 1
    %p64 = por %p62, %p63
    %p65 = scmp.ne.s32.totalorder %s56, %s57
    %p66 = scmp.eq.s32.totalorder %s13, 0
    %p67 = por %p65, %p66
    %p68 = scmp.ne.s32.totalorder %s56, %s57
    %p69 = scmp.eq.s32.totalorder %s14, 1
    %p70 = por %p68, %p69
    %p72 = scmp.ne.s32.totalorder %s57, %s71
    %p73 = scmp.eq.s32.totalorder %s14, 0
    %p74 = por %p72, %p73
    %s75 = ssub.s32 %s15, %s27
    %s76 = ssub.s32 %s16, %s23
    %s77 = sor.u32 %s75, %s76
    %p78 = scmp.eq.s32.totalorder %s77, 0
    %s80 = sadd.s32 %s79, 1
    %s81 = scalar_select %p78, %s79, %s80
    %p84 = pneg %p78
    %p85 = scmp.eq.s32.totalorder %s8, 1
    %p86 = por %p84, %p85
    %p87 = scmp.ne.s32.totalorder %s79, %s82
    %p88 = scmp.eq.s32.totalorder %s8, 0
    %p89 = por %p87, %p88
    %p90 = scmp.ne.s32.totalorder %s79, %s82
    %p91 = scmp.eq.s32.totalorder %s13, 1
    %p92 = por %p90, %p91
    %p93 = scmp.ne.s32.totalorder %s82, %s83
    %p94 = scmp.eq.s32.totalorder %s13, 0
    %p95 = por %p93, %p94
    %p96 = scmp.ne.s32.totalorder %s82, %s83
    %p97 = scmp.eq.s32.totalorder %s14, 1
    %p98 = por %p96, %p97
    %p100 = scmp.ne.s32.totalorder %s83, %s99
    %p101 = scmp.eq.s32.totalorder %s14, 0
    %p102 = por %p100, %p101
    %p103 = scmp.le.s32.totalorder 1, %s8
    %p104 = scmp.lt.s32.totalorder %s8, 3
    %p105 = pnand %p103, %p104
    %p106 = pneg %p105
    // Predicated region
    $region9: #{upsample.1} parent=5 // pred_check
      _
    $region10: #{upsample.1} parent=5 // pred_check_branch
      %108 = sbr.rel (%p105) target = $region12
    $region11: #{upsample.1} parent=5 // pred_region
      %s109 = ssub.s32 %s8, 1
      // Predicated region
      $region13: #{upsample.1} parent=11 // pred_check
        %p110 = pneg %p67
      $region14: #{upsample.1} parent=11 // pred_check_branch
        %112 = sbr.rel (%p110) target = $region16
      $region15: #{upsample.1} parent=11 // pred_region
        _
      $region16: #{upsample.1} parent=11 // pred_fallthru
        _
    $region12: #{upsample.1} parent=5 // pred_fallthru
      _
    %p113 = scmp.lt.s32.totalorder %s8, 2
    // Predicated region
    $region17: #{upsample.1} parent=5 // pred_check
      %p114 = pneg %p113
    $region18: #{upsample.1} parent=5 // pred_check_branch
      %116 = sbr.rel (%p114) target = $region20
    $region19: #{upsample.1} parent=5 // pred_region
      // Predicated region
      $region21: #{upsample.1} parent=19 // pred_check
        %p117 = pneg %p40
      $region22: #{upsample.1} parent=19 // pred_check_branch
        %119 = sbr.rel (%p117) target = $region24
      $region23: #{upsample.1} parent=19 // pred_region
        %p120 = scmp.lt.s32.totalorder %s15, 1
        %s121 = scalar_select %p120, %s15, 1
        %s122 = smul.addr %s121, 54
        %s123 = smul.addr %s122, 4
        %s124 = scalar_lea.vmem %s0, %s123
      $region24: #{upsample.1} parent=19 // pred_fallthru
        _
    $region20: #{upsample.1} parent=5 // pred_fallthru
      _
    %p125 = scmp.le.s32.totalorder 1, %s8
    %p126 = scmp.lt.s32.totalorder %s8, 3
    %p127 = pnand %p125, %p126
    %p128 = pneg %p127
    // Predicated region
    $region25: #{upsample.1} parent=5 // pred_check
      _
    $region26: #{upsample.1} parent=5 // pred_check_branch
      %130 = sbr.rel (%p127) target = $region28
    $region27: #{upsample.1} parent=5 // pred_region
      %s131 = ssub.s32 %s8, 1
      %p132 = scmp.lt.s32.totalorder %s17, 1
      %s133 = scalar_select %p132, %s17, 1
      %s134 = smul.addr %s133, 54
      %s135 = smul.addr %s134, 4
      %s136 = scalar_lea.vmem %s0, %s135
      %p137 = pneg %p46
      %p138 = pneg %p43
      %p139 = pneg %p67
      %p140 = pneg %p64
      %p141 = pneg %p95
      %p142 = pneg %p92
      %s143 = smul.u32 16, %s18
      %p144 = scmp.lt.s32.totalorder %s17, 1
      %s145 = scalar_select %p144, %s17, 1
      %p146 = scmp.lt.s32.totalorder %s143, 15
      %s147 = scalar_select %p146, %s143, 15
      %s148 = smul.addr %s147, 2
      %s149 = smul.addr %s145, 32
      %s150 = sadd.s32 %s148, %s149
      %s151 = smul.addr %s150, 8
      %s152 = scalar_lea.vmem %s2, %s151
      %p153 = scmp.lt.s32.totalorder %s17, 1
      %s154 = scalar_select %p153, %s17, 1
      %s155 = smul.addr %s154, 54
      %s156 = smul.addr %s155, 4
      %s157 = scalar_lea.vmem %s0, %s156
      %s158 = smul.u32 16, %s18
      %p159 = scmp.lt.s32.totalorder %s17, 1
      %s160 = scalar_select %p159, %s17, 1
      %p161 = scmp.lt.s32.totalorder %s158, 15
      %s162 = scalar_select %p161, %s158, 15
      %s163 = smul.addr %s162, 2
      %s164 = smul.addr %s160, 32
      %s165 = sadd.s32 %s163, %s164
      %s166 = smul.addr %s165, 8
      %s167 = scalar_lea.vmem %s2, %s166
      %s168 = smul.u32 16, %s18
      %s170 = smul.u32 %s18, 16
      %s171 = smul.u32 %s170, 3
      %s172 = smul.addr %s171, 4
      %s173 = scalar_lea.vmem %s157, %s172
      %v174 = vld [vmem:[%s173] sm:$0xf]
      %v175 = vld [vmem:[%s173 + $0x4] sm:$0xf]
      %v176 = vld [vmem:[%s173 + $0x8] sm:$0xf]
      %v177 = vld [vmem:[%s173 + $0xc] sm:$0xf]
      %v178 = vld [vmem:[%s173 + $0x10] sm:$0xf]
      %v179 = vld [vmem:[%s173 + $0x14] sm:$0xf]
      %v180 = vld [vmem:[%s173 + $0x18] sm:$0xf]
      %v181 = vld [vmem:[%s173 + $0x1c] sm:$0xf]
      %v182 = vld [vmem:[%s173 + $0x20] sm:$0xf]
      %v183 = vld [vmem:[%s173 + $0x24] sm:$0xf]
      %v184 = vld [vmem:[%s173 + $0x28] sm:$0xf]
      %v185 = vld [vmem:[%s173 + $0x2c] sm:$0xf]
      %v186 = vld [vmem:[%s173 + $0x30] sm:$0xf]
      %v187 = vld [vmem:[%s173 + $0x34] sm:$0xf]
      %v188 = vld [vmem:[%s173 + $0x38] sm:$0xf]
      %v189 = vld [vmem:[%s173 + $0x3c] sm:$0xf]
      %v190 = vld [vmem:[%s173 + $0x40] sm:$0xf]
      %v191 = vld [vmem:[%s173 + $0x44] sm:$0xf]
      %v192 = vld [vmem:[%s173 + $0x48] sm:$0xf]
      %v193 = vld [vmem:[%s173 + $0x4c] sm:$0xf]
      %v194 = vld [vmem:[%s173 + $0x50] sm:$0xf]
      %v195 = vld [vmem:[%s173 + $0x54] sm:$0xf]
      %v196 = vld [vmem:[%s173 + $0x58] sm:$0xf]
      %v197 = vld [vmem:[%s173 + $0x5c] sm:$0xf]
      %v198 = vld [vmem:[%s173 + $0x60] sm:$0xf]
      %v199 = vld [vmem:[%s173 + $0x64] sm:$0xf]
      %v200 = vld [vmem:[%s173 + $0x68] sm:$0xf]
      %v201 = vld [vmem:[%s173 + $0x6c] sm:$0xf]
      %v202 = vld [vmem:[%s173 + $0x70] sm:$0xf]
      %v203 = vld [vmem:[%s173 + $0x74] sm:$0xf]
      %v204 = vld [vmem:[%s173 + $0x78] sm:$0xf]
      %v205 = vld [vmem:[%s173 + $0x7c] sm:$0xf]
      %v206 = vld [vmem:[%s173 + $0x80] sm:$0xf]
      %v207 = vld [vmem:[%s173 + $0x84] sm:$0xf]
      %v208 = vld [vmem:[%s173 + $0x88] sm:$0xf]
      %v209 = vld [vmem:[%s173 + $0x8c] sm:$0xf]
      %v210 = vld [vmem:[%s173 + $0x90] sm:$0xf]
      %v211 = vld [vmem:[%s173 + $0x94] sm:$0xf]
      %v212 = vld [vmem:[%s173 + $0x98] sm:$0xf]
      %v213 = vld [vmem:[%s173 + $0x9c] sm:$0xf]
      %v214 = vld [vmem:[%s173 + $0xa0] sm:$0xf]
      %v215 = vld [vmem:[%s173 + $0xa4] sm:$0xf]
      %v216 = vld [vmem:[%s173 + $0xa8] sm:$0xf]
      %v217 = vld [vmem:[%s173 + $0xac] sm:$0xf]
      %v218 = vld [vmem:[%s173 + $0xb0] sm:$0xf]
      %v219 = vld [vmem:[%s173 + $0xb4] sm:$0xf]
      %v220 = vld [vmem:[%s173 + $0xb8] sm:$0xf]
      %v221 = vld [vmem:[%s173 + $0xbc] sm:$0xf]
      %v222 = vld [vmem:[%s173 + $0xc0] sm:$0xf]
      %v223 = vld [vmem:[%s173 + $0xc4] sm:$0xf]
      %v224 = vld [vmem:[%s173 + $0xc8] sm:$0xf]
      %v225 = vld [vmem:[%s173 + $0xcc] sm:$0xf]
      %v226 = vld [vmem:[%s173 + $0xd0] sm:$0xf]
      %v227 = vld [vmem:[%s173 + $0xd4] sm:$0xf]
      %v228 = vunpack.c.l.bf16 %v174
      %v229 = vunpack.c.l.bf16 %v175
      %v230 = vunpack.c.l.bf16 %v176
      %v231 = vunpack.c.l.bf16 %v177
      %v232 = vunpack.c.l.bf16 %v178
      %v233 = vunpack.c.l.bf16 %v179
      %v234 = vunpack.c.l.bf16 %v180
      %v235 = vunpack.c.l.bf16 %v181
      %v236 = vunpack.c.l.bf16 %v182
      %v237 = vunpack.c.l.bf16 %v183
      %v238 = vunpack.c.l.bf16 %v184
      %v239 = vunpack.c.l.bf16 %v185
      %v240 = vunpack.c.l.bf16 %v186
      %v241 = vunpack.c.l.bf16 %v187
      %v242 = vunpack.c.l.bf16 %v188
      %v243 = vunpack.c.l.bf16 %v189
      %v244 = vunpack.c.l.bf16 %v190
      %v245 = vunpack.c.l.bf16 %v191
      %v246 = vunpack.c.l.bf16 %v192
      %v247 = vunpack.c.l.bf16 %v193
      %v248 = vunpack.c.l.bf16 %v194
      %v249 = vunpack.c.l.bf16 %v195
      %v250 = vunpack.c.l.bf16 %v196
      %v251 = vunpack.c.l.bf16 %v197
      %v252 = vunpack.c.l.bf16 %v198
      %v253 = vunpack.c.l.bf16 %v199
      %v254 = vunpack.c.l.bf16 %v200
      %v255 = vunpack.c.l.bf16 %v201
      %v256 = vunpack.c.l.bf16 %v202
      %v257 = vunpack.c.l.bf16 %v203
      %v258 = vunpack.c.l.bf16 %v204
      %v259 = vunpack.c.l.bf16 %v205
      %v260 = vunpack.c.l.bf16 %v206
      %v261 = vunpack.c.l.bf16 %v207
      %v262 = vunpack.c.l.bf16 %v208
      %v263 = vunpack.c.l.bf16 %v209
      %v264 = vunpack.c.l.bf16 %v210
      %v265 = vunpack.c.l.bf16 %v211
      %v266 = vunpack.c.l.bf16 %v212
      %v267 = vunpack.c.l.bf16 %v213
      %v268 = vunpack.c.l.bf16 %v214
      %v269 = vunpack.c.l.bf16 %v215
      %v270 = vunpack.c.l.bf16 %v216
      %v271 = vunpack.c.l.bf16 %v217
      %v272 = vunpack.c.l.bf16 %v218
      %v273 = vunpack.c.l.bf16 %v219
      %v274 = vunpack.c.l.bf16 %v220
      %v275 = vunpack.c.l.bf16 %v221
      %v276 = vunpack.c.l.bf16 %v222
      %v277 = vunpack.c.l.bf16 %v223
      %v278 = vunpack.c.l.bf16 %v224
      %v279 = vunpack.c.l.bf16 %v225
      %v280 = vunpack.c.l.bf16 %v226
      %v281 = vunpack.c.l.bf16 %v227
      %vm282 = vcmask 519168
      %283 = vst.msk [vmem:[#allocation2] sm:$0xf] %vm282, %v174
      %284 = vst.msk [vmem:[#allocation2 + $0x8] sm:$0xf] %vm282, %v175
      %285 = vst.msk [vmem:[#allocation2 + $0x10] sm:$0xf] %vm282, %v176
      %286 = vst.msk [vmem:[#allocation2 + $0x18] sm:$0xf] %vm282, %v177
      %287 = vst.msk [vmem:[#allocation2 + $0x20] sm:$0xf] %vm282, %v178
      %288 = vst.msk [vmem:[#allocation2 + $0x28] sm:$0xf] %vm282, %v179
      %289 = vst.msk [vmem:[#allocation2 + $0x30] sm:$0xf] %vm282, %v180
      %290 = vst.msk [vmem:[#allocation2 + $0x38] sm:$0xf] %vm282, %v181
      %291 = vst.msk [vmem:[#allocation2 + $0x40] sm:$0xf] %vm282, %v182
      %292 = vst.msk [vmem:[#allocation2 + $0x48] sm:$0xf] %vm282, %v183
      %293 = vst.msk [vmem:[#allocation2 + $0x50] sm:$0xf] %vm282, %v184
      %294 = vst.msk [vmem:[#allocation2 + $0x58] sm:$0xf] %vm282, %v185
      %295 = vst.msk [vmem:[#allocation2 + $0x60] sm:$0xf] %vm282, %v186
      %296 = vst.msk [vmem:[#allocation2 + $0x68] sm:$0xf] %vm282, %v187
      %297 = vst.msk [vmem:[#allocation2 + $0x70] sm:$0xf] %vm282, %v188
      %298 = vst.msk [vmem:[#allocation2 + $0x78] sm:$0xf] %vm282, %v189
      %299 = vst.msk [vmem:[#allocation2 + $0x80] sm:$0xf] %vm282, %v190
      %300 = vst.msk [vmem:[#allocation2 + $0x88] sm:$0xf] %vm282, %v191
      %301 = vst.msk [vmem:[#allocation2 + $0x90] sm:$0xf] %vm282, %v192
      %302 = vst.msk [vmem:[#allocation2 + $0x98] sm:$0xf] %vm282, %v193
      %303 = vst.msk [vmem:[#allocation2 + $0xa0] sm:$0xf] %vm282, %v194
      %304 = vst.msk [vmem:[#allocation2 + $0xa8] sm:$0xf] %vm282, %v195
      %305 = vst.msk [vmem:[#allocation2 + $0xb0] sm:$0xf] %vm282, %v196
      %306 = vst.msk [vmem:[#allocation2 + $0xb8] sm:$0xf] %vm282, %v197
      %307 = vst.msk [vmem:[#allocation2 + $0xc0] sm:$0xf] %vm282, %v198
      %308 = vst.msk [vmem:[#allocation2 + $0xc8] sm:$0xf] %vm282, %v199
      %309 = vst.msk [vmem:[#allocation2 + $0xd0] sm:$0xf] %vm282, %v200
      %310 = vst.msk [vmem:[#allocation2 + $0xd8] sm:$0xf] %vm282, %v201
      %311 = vst.msk [vmem:[#allocation2 + $0xe0] sm:$0xf] %vm282, %v202
      %312 = vst.msk [vmem:[#allocation2 + $0xe8] sm:$0xf] %vm282, %v203
      %313 = vst.msk [vmem:[#allocation2 + $0xf0] sm:$0xf] %vm282, %v204
      %314 = vst.msk [vmem:[#allocation2 + $0xf8] sm:$0xf] %vm282, %v205
      %315 = vst.msk [vmem:[#allocation2 + $0x100] sm:$0xf] %vm282, %v206
      %316 = vst.msk [vmem:[#allocation2 + $0x108] sm:$0xf] %vm282, %v207
      %317 = vst.msk [vmem:[#allocation2 + $0x110] sm:$0xf] %vm282, %v208
      %318 = vst.msk [vmem:[#allocation2 + $0x118] sm:$0xf] %vm282, %v209
      %319 = vst.msk [vmem:[#allocation2 + $0x120] sm:$0xf] %vm282, %v210
      %320 = vst.msk [vmem:[#allocation2 + $0x128] sm:$0xf] %vm282, %v211
      %321 = vst.msk [vmem:[#allocation2 + $0x130] sm:$0xf] %vm282, %v212
      %322 = vst.msk [vmem:[#allocation2 + $0x138] sm:$0xf] %vm282, %v213
      %323 = vst.msk [vmem:[#allocation2 + $0x140] sm:$0xf] %vm282, %v214
      %324 = vst.msk [vmem:[#allocation2 + $0x148] sm:$0xf] %vm282, %v215
      %325 = vst.msk [vmem:[#allocation2 + $0x150] sm:$0xf] %vm282, %v216
      %326 = vst.msk [vmem:[#allocation2 + $0x158] sm:$0xf] %vm282, %v217
      %327 = vst.msk [vmem:[#allocation2 + $0x160] sm:$0xf] %vm282, %v218
      %328 = vst.msk [vmem:[#allocation2 + $0x168] sm:$0xf] %vm282, %v219
      %329 = vst.msk [vmem:[#allocation2 + $0x170] sm:$0xf] %vm282, %v220
      %330 = vst.msk [vmem:[#allocation2 + $0x178] sm:$0xf] %vm282, %v221
      %331 = vst.msk [vmem:[#allocation2 + $0x180] sm:$0xf] %vm282, %v222
      %332 = vst.msk [vmem:[#allocation2 + $0x188] sm:$0xf] %vm282, %v223
      %333 = vst.msk [vmem:[#allocation2 + $0x190] sm:$0xf] %vm282, %v224
      %334 = vst.msk [vmem:[#allocation2 + $0x198] sm:$0xf] %vm282, %v225
      %335 = vst.msk [vmem:[#allocation2 + $0x1a0] sm:$0xf] %vm282, %v226
      %336 = vst.msk [vmem:[#allocation2 + $0x1a8] sm:$0xf] %vm282, %v227
      %vm391 = vcmask 1046528
      %v392 = vrot.slane %v228, 1
      %v393 = vrot.slane %v229, 1
      %v394 = vsel %vm391, %v392, %v393
      %v395 = vrot.slane %v230, 1
      %v396 = vsel %vm391, %v393, %v395
      %v397 = vrot.slane %v231, 1
      %v398 = vrot.slane %v232, 1
      %v399 = vsel %vm391, %v397, %v398
      %v400 = vrot.slane %v233, 1
      %v401 = vsel %vm391, %v398, %v400
      %v402 = vrot.slane %v234, 1
      %v403 = vrot.slane %v235, 1
      %v404 = vsel %vm391, %v402, %v403
      %v405 = vrot.slane %v236, 1
      %v406 = vsel %vm391, %v403, %v405
      %v407 = vrot.slane %v237, 1
      %v408 = vrot.slane %v238, 1
      %v409 = vsel %vm391, %v407, %v408
      %v410 = vrot.slane %v239, 1
      %v411 = vsel %vm391, %v408, %v410
      %v412 = vrot.slane %v240, 1
      %v413 = vrot.slane %v241, 1
      %v414 = vsel %vm391, %v412, %v413
      %v415 = vrot.slane %v242, 1
      %v416 = vsel %vm391, %v413, %v415
      %v417 = vrot.slane %v243, 1
      %v418 = vrot.slane %v244, 1
      %v419 = vsel %vm391, %v417, %v418
      %v420 = vrot.slane %v245, 1
      %v421 = vsel %vm391, %v418, %v420
      %v422 = vrot.slane %v246, 1
      %v423 = vrot.slane %v247, 1
      %v424 = vsel %vm391, %v422, %v423
      %v425 = vrot.slane %v248, 1
      %v426 = vsel %vm391, %v423, %v425
      %v427 = vrot.slane %v249, 1
      %v428 = vrot.slane %v250, 1
      %v429 = vsel %vm391, %v427, %v428
      %v430 = vrot.slane %v251, 1
      %v431 = vsel %vm391, %v428, %v430
      %v432 = vrot.slane %v252, 1
      %v433 = vrot.slane %v253, 1
      %v434 = vsel %vm391, %v432, %v433
      %v435 = vrot.slane %v254, 1
      %v436 = vsel %vm391, %v433, %v435
      %v437 = vrot.slane %v255, 1
      %v438 = vrot.slane %v256, 1
      %v439 = vsel %vm391, %v437, %v438
      %v440 = vrot.slane %v257, 1
      %v441 = vsel %vm391, %v438, %v440
      %v442 = vrot.slane %v258, 1
      %v443 = vrot.slane %v259, 1
      %v444 = vsel %vm391, %v442, %v443
      %v445 = vrot.slane %v260, 1
      %v446 = vsel %vm391, %v443, %v445
      %v447 = vrot.slane %v261, 1
      %v448 = vrot.slane %v262, 1
      %v449 = vsel %vm391, %v447, %v448
      %v450 = vrot.slane %v263, 1
      %v451 = vsel %vm391, %v448, %v450
      %v452 = vrot.slane %v264, 1
      %v453 = vrot.slane %v265, 1
      %v454 = vsel %vm391, %v452, %v453
      %v455 = vrot.slane %v266, 1
      %v456 = vsel %vm391, %v453, %v455
      %v457 = vrot.slane %v267, 1
      %v458 = vrot.slane %v268, 1
      %v459 = vsel %vm391, %v457, %v458
      %v460 = vrot.slane %v269, 1
      %v461 = vsel %vm391, %v458, %v460
      %v462 = vrot.slane %v270, 1
      %v463 = vrot.slane %v271, 1
      %v464 = vsel %vm391, %v462, %v463
      %v465 = vrot.slane %v272, 1
      %v466 = vsel %vm391, %v463, %v465
      %v467 = vrot.slane %v273, 1
      %v468 = vrot.slane %v274, 1
      %v469 = vsel %vm391, %v467, %v468
      %v470 = vrot.slane %v275, 1
      %v471 = vsel %vm391, %v468, %v470
      %v472 = vrot.slane %v276, 1
      %v473 = vrot.slane %v277, 1
      %v474 = vsel %vm391, %v472, %v473
      %v475 = vrot.slane %v278, 1
      %v476 = vsel %vm391, %v473, %v475
      %v477 = vrot.slane %v279, 1
      %v478 = vrot.slane %v280, 1
      %v479 = vsel %vm391, %v477, %v478
      %v480 = vrot.slane %v281, 1
      %v481 = vsel %vm391, %v478, %v480
      %v554 = vsel %vm391, %v395, %v392
      %v555 = vsel %vm391, %v400, %v397
      %v556 = vsel %vm391, %v405, %v402
      %v557 = vsel %vm391, %v410, %v407
      %v558 = vsel %vm391, %v415, %v412
      %v559 = vsel %vm391, %v420, %v417
      %v560 = vsel %vm391, %v425, %v422
      %v561 = vsel %vm391, %v430, %v427
      %v562 = vsel %vm391, %v435, %v432
      %v563 = vsel %vm391, %v440, %v437
      %v564 = vsel %vm391, %v445, %v442
      %v565 = vsel %vm391, %v450, %v447
      %v566 = vsel %vm391, %v455, %v452
      %v567 = vsel %vm391, %v460, %v457
      %v568 = vsel %vm391, %v465, %v462
      %v569 = vsel %vm391, %v470, %v467
      %v570 = vsel %vm391, %v475, %v472
      %v571 = vsel %vm391, %v480, %v477
      %v572 = vpack.c.bf16 %v396, %v394
      %v573 = vpack.c.bf16 %v554, %v554
      %v574 = vpack.c.bf16 %v401, %v399
      %v575 = vpack.c.bf16 %v555, %v555
      %v576 = vpack.c.bf16 %v406, %v404
      %v577 = vpack.c.bf16 %v556, %v556
      %v578 = vpack.c.bf16 %v411, %v409
      %v579 = vpack.c.bf16 %v557, %v557
      %v580 = vpack.c.bf16 %v416, %v414
      %v581 = vpack.c.bf16 %v558, %v558
      %v582 = vpack.c.bf16 %v421, %v419
      %v583 = vpack.c.bf16 %v559, %v559
      %v584 = vpack.c.bf16 %v426, %v424
      %v585 = vpack.c.bf16 %v560, %v560
      %v586 = vpack.c.bf16 %v431, %v429
      %v587 = vpack.c.bf16 %v561, %v561
      %v588 = vpack.c.bf16 %v436, %v434
      %v589 = vpack.c.bf16 %v562, %v562
      %v590 = vpack.c.bf16 %v441, %v439
      %v591 = vpack.c.bf16 %v563, %v563
      %v592 = vpack.c.bf16 %v446, %v444
      %v593 = vpack.c.bf16 %v564, %v564
      %v594 = vpack.c.bf16 %v451, %v449
      %v595 = vpack.c.bf16 %v565, %v565
      %v596 = vpack.c.bf16 %v456, %v454
      %v597 = vpack.c.bf16 %v566, %v566
      %v598 = vpack.c.bf16 %v461, %v459
      %v599 = vpack.c.bf16 %v567, %v567
      %v600 = vpack.c.bf16 %v466, %v464
      %v601 = vpack.c.bf16 %v568, %v568
      %v602 = vpack.c.bf16 %v471, %v469
      %v603 = vpack.c.bf16 %v569, %v569
      %v604 = vpack.c.bf16 %v476, %v474
      %v605 = vpack.c.bf16 %v570, %v570
      %v606 = vpack.c.bf16 %v481, %v479
      %v607 = vpack.c.bf16 %v571, %v571
      %v644 = vunpack.c.l.b16 %v572
      %v645 = vunpack.c.h.b16 %v572
      %v646 = vunpack.c.l.b16 %v573
      %v647 = vunpack.c.l.b16 %v574
      %v648 = vunpack.c.h.b16 %v574
      %v649 = vunpack.c.l.b16 %v575
      %v650 = vunpack.c.l.b16 %v576
      %v651 = vunpack.c.h.b16 %v576
      %v652 = vunpack.c.l.b16 %v577
      %v653 = vunpack.c.l.b16 %v578
      %v654 = vunpack.c.h.b16 %v578
      %v655 = vunpack.c.l.b16 %v579
      %v656 = vunpack.c.l.b16 %v580
      %v657 = vunpack.c.h.b16 %v580
      %v658 = vunpack.c.l.b16 %v581
      %v659 = vunpack.c.l.b16 %v582
      %v660 = vunpack.c.h.b16 %v582
      %v661 = vunpack.c.l.b16 %v583
      %v662 = vunpack.c.l.b16 %v584
      %v663 = vunpack.c.h.b16 %v584
      %v664 = vunpack.c.l.b16 %v585
      %v665 = vunpack.c.l.b16 %v586
      %v666 = vunpack.c.h.b16 %v586
      %v667 = vunpack.c.l.b16 %v587
      %v668 = vunpack.c.l.b16 %v588
      %v669 = vunpack.c.h.b16 %v588
      %v670 = vunpack.c.l.b16 %v589
      %v671 = vunpack.c.l.b16 %v590
      %v672 = vunpack.c.h.b16 %v590
      %v673 = vunpack.c.l.b16 %v591
      %v674 = vunpack.c.l.b16 %v592
      %v675 = vunpack.c.h.b16 %v592
      %v676 = vunpack.c.l.b16 %v593
      %v677 = vunpack.c.l.b16 %v594
      %v678 = vunpack.c.h.b16 %v594
      %v679 = vunpack.c.l.b16 %v595
      %v680 = vunpack.c.l.b16 %v596
      %v681 = vunpack.c.h.b16 %v596
      %v682 = vunpack.c.l.b16 %v597
      %v683 = vunpack.c.l.b16 %v598
      %v684 = vunpack.c.h.b16 %v598
      %v685 = vunpack.c.l.b16 %v599
      %v686 = vunpack.c.l.b16 %v600
      %v687 = vunpack.c.h.b16 %v600
      %v688 = vunpack.c.l.b16 %v601
      %v689 = vunpack.c.l.b16 %v602
      %v690 = vunpack.c.h.b16 %v602
      %v691 = vunpack.c.l.b16 %v603
      %v692 = vunpack.c.l.b16 %v604
      %v693 = vunpack.c.h.b16 %v604
      %v694 = vunpack.c.l.b16 %v605
      %v695 = vunpack.c.l.b16 %v606
      %v696 = vunpack.c.h.b16 %v606
      %v697 = vunpack.c.l.b16 %v607
      %v698 = vpack.c.b16 %v644, %v644
      %v699 = vpack.c.b16 %v645, %v645
      %v700 = vpack.c.b16 %v646, %v646
      %v701 = vpack.c.b16 %v647, %v647
      %v702 = vpack.c.b16 %v648, %v648
      %v703 = vpack.c.b16 %v649, %v649
      %v704 = vpack.c.b16 %v650, %v650
      %v705 = vpack.c.b16 %v651, %v651
      %v706 = vpack.c.b16 %v652, %v652
      %v707 = vpack.c.b16 %v653, %v653
      %v708 = vpack.c.b16 %v654, %v654
      %v709 = vpack.c.b16 %v655, %v655
      %v710 = vpack.c.b16 %v656, %v656
      %v711 = vpack.c.b16 %v657, %v657
      %v712 = vpack.c.b16 %v658, %v658
      %v713 = vpack.c.b16 %v659, %v659
      %v714 = vpack.c.b16 %v660, %v660
      %v715 = vpack.c.b16 %v661, %v661
      %v716 = vpack.c.b16 %v662, %v662
      %v717 = vpack.c.b16 %v663, %v663
      %v718 = vpack.c.b16 %v664, %v664
      %v719 = vpack.c.b16 %v665, %v665
      %v720 = vpack.c.b16 %v666, %v666
      %v721 = vpack.c.b16 %v667, %v667
      %v722 = vpack.c.b16 %v668, %v668
      %v723 = vpack.c.b16 %v669, %v669
      %v724 = vpack.c.b16 %v670, %v670
      %v725 = vpack.c.b16 %v671, %v671
      %v726 = vpack.c.b16 %v672, %v672
      %v727 = vpack.c.b16 %v673, %v673
      %v728 = vpack.c.b16 %v674, %v674
      %v729 = vpack.c.b16 %v675, %v675
      %v730 = vpack.c.b16 %v676, %v676
      %v731 = vpack.c.b16 %v677, %v677
      %v732 = vpack.c.b16 %v678, %v678
      %v733 = vpack.c.b16 %v679, %v679
      %v734 = vpack.c.b16 %v680, %v680
      %v735 = vpack.c.b16 %v681, %v681
      %v736 = vpack.c.b16 %v682, %v682
      %v737 = vpack.c.b16 %v683, %v683
      %v738 = vpack.c.b16 %v684, %v684
      %v739 = vpack.c.b16 %v685, %v685
      %v740 = vpack.c.b16 %v686, %v686
      %v741 = vpack.c.b16 %v687, %v687
      %v742 = vpack.c.b16 %v688, %v688
      %v743 = vpack.c.b16 %v689, %v689
      %v744 = vpack.c.b16 %v690, %v690
      %v745 = vpack.c.b16 %v691, %v691
      %v746 = vpack.c.b16 %v692, %v692
      %v747 = vpack.c.b16 %v693, %v693
      %v748 = vpack.c.b16 %v694, %v694
      %v749 = vpack.c.b16 %v695, %v695
      %v750 = vpack.c.b16 %v696, %v696
      %v751 = vpack.c.b16 %v697, %v697
      %752 = vrot.lane.b32.xlu0 %v698, 64
      %v753 = vpop.permute.xlu0 %752
      %754 = vrot.lane.b32.xlu0 %v699, 64
      %v755 = vpop.permute.xlu0 %754
      %756 = vrot.lane.b32.xlu0 %v700, 64
      %v757 = vpop.permute.xlu0 %756
      %758 = vrot.lane.b32.xlu0 %v701, 64
      %v759 = vpop.permute.xlu0 %758
      %760 = vrot.lane.b32.xlu0 %v702, 64
      %v761 = vpop.permute.xlu0 %760
      %762 = vrot.lane.b32.xlu0 %v703, 64
      %v763 = vpop.permute.xlu0 %762
      %764 = vrot.lane.b32.xlu0 %v704, 64
      %v765 = vpop.permute.xlu0 %764
      %766 = vrot.lane.b32.xlu0 %v705, 64
      %v767 = vpop.permute.xlu0 %766
      %768 = vrot.lane.b32.xlu0 %v706, 64
      %v769 = vpop.permute.xlu0 %768
      %770 = vrot.lane.b32.xlu0 %v707, 64
      %v771 = vpop.permute.xlu0 %770
      %772 = vrot.lane.b32.xlu0 %v708, 64
      %v773 = vpop.permute.xlu0 %772
      %774 = vrot.lane.b32.xlu0 %v709, 64
      %v775 = vpop.permute.xlu0 %774
      %776 = vrot.lane.b32.xlu0 %v710, 64
      %v777 = vpop.permute.xlu0 %776
      %778 = vrot.lane.b32.xlu0 %v711, 64
      %v779 = vpop.permute.xlu0 %778
      %780 = vrot.lane.b32.xlu0 %v712, 64
      %v781 = vpop.permute.xlu0 %780
      %782 = vrot.lane.b32.xlu0 %v713, 64
      %v783 = vpop.permute.xlu0 %782
      %784 = vrot.lane.b32.xlu0 %v714, 64
      %v785 = vpop.permute.xlu0 %784
      %786 = vrot.lane.b32.xlu0 %v715, 64
      %v787 = vpop.permute.xlu0 %786
      %788 = vrot.lane.b32.xlu0 %v716, 64
      %v789 = vpop.permute.xlu0 %788
      %790 = vrot.lane.b32.xlu0 %v717, 64
      %v791 = vpop.permute.xlu0 %790
      %792 = vrot.lane.b32.xlu0 %v718, 64
      %v793 = vpop.permute.xlu0 %792
      %794 = vrot.lane.b32.xlu0 %v719, 64
      %v795 = vpop.permute.xlu0 %794
      %796 = vrot.lane.b32.xlu0 %v720, 64
      %v797 = vpop.permute.xlu0 %796
      %798 = vrot.lane.b32.xlu0 %v721, 64
      %v799 = vpop.permute.xlu0 %798
      %800 = vrot.lane.b32.xlu0 %v722, 64
      %v801 = vpop.permute.xlu0 %800
      %802 = vrot.lane.b32.xlu0 %v723, 64
      %v803 = vpop.permute.xlu0 %802
      %804 = vrot.lane.b32.xlu0 %v724, 64
      %v805 = vpop.permute.xlu0 %804
      %806 = vrot.lane.b32.xlu0 %v725, 64
      %v807 = vpop.permute.xlu0 %806
      %808 = vrot.lane.b32.xlu0 %v726, 64
      %v809 = vpop.permute.xlu0 %808
      %810 = vrot.lane.b32.xlu0 %v727, 64
      %v811 = vpop.permute.xlu0 %810
      %812 = vrot.lane.b32.xlu0 %v728, 64
      %v813 = vpop.permute.xlu0 %812
      %814 = vrot.lane.b32.xlu0 %v729, 64
      %v815 = vpop.permute.xlu0 %814
      %816 = vrot.lane.b32.xlu0 %v730, 64
      %v817 = vpop.permute.xlu0 %816
      %818 = vrot.lane.b32.xlu0 %v731, 64
      %v819 = vpop.permute.xlu0 %818
      %820 = vrot.lane.b32.xlu0 %v732, 64
      %v821 = vpop.permute.xlu0 %820
      %822 = vrot.lane.b32.xlu0 %v733, 64
      %v823 = vpop.permute.xlu0 %822
      %824 = vrot.lane.b32.xlu0 %v734, 64
      %v825 = vpop.permute.xlu0 %824
      %826 = vrot.lane.b32.xlu0 %v735, 64
      %v827 = vpop.permute.xlu0 %826
      %828 = vrot.lane.b32.xlu0 %v736, 64
      %v829 = vpop.permute.xlu0 %828
      %830 = vrot.lane.b32.xlu0 %v737, 64
      %v831 = vpop.permute.xlu0 %830
      %832 = vrot.lane.b32.xlu0 %v738, 64
      %v833 = vpop.permute.xlu0 %832
      %834 = vrot.lane.b32.xlu0 %v739, 64
      %v835 = vpop.permute.xlu0 %834
      %836 = vrot.lane.b32.xlu0 %v740, 64
      %v837 = vpop.permute.xlu0 %836
      %838 = vrot.lane.b32.xlu0 %v741, 64
      %v839 = vpop.permute.xlu0 %838
      %840 = vrot.lane.b32.xlu0 %v742, 64
      %v841 = vpop.permute.xlu0 %840
      %842 = vrot.lane.b32.xlu0 %v743, 64
      %v843 = vpop.permute.xlu0 %842
      %844 = vrot.lane.b32.xlu0 %v744, 64
      %v845 = vpop.permute.xlu0 %844
      %846 = vrot.lane.b32.xlu0 %v745, 64
      %v847 = vpop.permute.xlu0 %846
      %848 = vrot.lane.b32.xlu0 %v746, 64
      %v849 = vpop.permute.xlu0 %848
      %850 = vrot.lane.b32.xlu0 %v747, 64
      %v851 = vpop.permute.xlu0 %850
      %852 = vrot.lane.b32.xlu0 %v748, 64
      %v853 = vpop.permute.xlu0 %852
      %854 = vrot.lane.b32.xlu0 %v749, 64
      %v855 = vpop.permute.xlu0 %854
      %856 = vrot.lane.b32.xlu0 %v750, 64
      %v857 = vpop.permute.xlu0 %856
      %858 = vrot.lane.b32.xlu0 %v751, 64
      %v859 = vpop.permute.xlu0 %858
      %vm914 = vcmask 1043968
      %915 = vst.msk [vmem:[#allocation2] sm:$0xf] %vm914, %v753
      %916 = vst.msk [vmem:[#allocation2 + $0x8] sm:$0xf] %vm914, %v755
      %917 = vst.msk [vmem:[#allocation2 + $0x10] sm:$0xf] %vm914, %v757
      %918 = vst.msk [vmem:[#allocation2 + $0x18] sm:$0xf] %vm914, %v759
      %919 = vst.msk [vmem:[#allocation2 + $0x20] sm:$0xf] %vm914, %v761
      %920 = vst.msk [vmem:[#allocation2 + $0x28] sm:$0xf] %vm914, %v763
      %921 = vst.msk [vmem:[#allocation2 + $0x30] sm:$0xf] %vm914, %v765
      %922 = vst.msk [vmem:[#allocation2 + $0x38] sm:$0xf] %vm914, %v767
      %923 = vst.msk [vmem:[#allocation2 + $0x40] sm:$0xf] %vm914, %v769
      %924 = vst.msk [vmem:[#allocation2 + $0x48] sm:$0xf] %vm914, %v771
      %925 = vst.msk [vmem:[#allocation2 + $0x50] sm:$0xf] %vm914, %v773
      %926 = vst.msk [vmem:[#allocation2 + $0x58] sm:$0xf] %vm914, %v775
      %927 = vst.msk [vmem:[#allocation2 + $0x60] sm:$0xf] %vm914, %v777
      %928 = vst.msk [vmem:[#allocation2 + $0x68] sm:$0xf] %vm914, %v779
      %929 = vst.msk [vmem:[#allocation2 + $0x70] sm:$0xf] %vm914, %v781
      %930 = vst.msk [vmem:[#allocation2 + $0x78] sm:$0xf] %vm914, %v783
      %931 = vst.msk [vmem:[#allocation2 + $0x80] sm:$0xf] %vm914, %v785
      %932 = vst.msk [vmem:[#allocation2 + $0x88] sm:$0xf] %vm914, %v787
      %933 = vst.msk [vmem:[#allocation2 + $0x90] sm:$0xf] %vm914, %v789
      %934 = vst.msk [vmem:[#allocation2 + $0x98] sm:$0xf] %vm914, %v791
      %935 = vst.msk [vmem:[#allocation2 + $0xa0] sm:$0xf] %vm914, %v793
      %936 = vst.msk [vmem:[#allocation2 + $0xa8] sm:$0xf] %vm914, %v795
      %937 = vst.msk [vmem:[#allocation2 + $0xb0] sm:$0xf] %vm914, %v797
      %938 = vst.msk [vmem:[#allocation2 + $0xb8] sm:$0xf] %vm914, %v799
      %939 = vst.msk [vmem:[#allocation2 + $0xc0] sm:$0xf] %vm914, %v801
      %940 = vst.msk [vmem:[#allocation2 + $0xc8] sm:$0xf] %vm914, %v803
      %941 = vst.msk [vmem:[#allocation2 + $0xd0] sm:$0xf] %vm914, %v805
      %942 = vst.msk [vmem:[#allocation2 + $0xd8] sm:$0xf] %vm914, %v807
      %943 = vst.msk [vmem:[#allocation2 + $0xe0] sm:$0xf] %vm914, %v809
      %944 = vst.msk [vmem:[#allocation2 + $0xe8] sm:$0xf] %vm914, %v811
      %945 = vst.msk [vmem:[#allocation2 + $0xf0] sm:$0xf] %vm914, %v813
      %946 = vst.msk [vmem:[#allocation2 + $0xf8] sm:$0xf] %vm914, %v815
      %947 = vst.msk [vmem:[#allocation2 + $0x100] sm:$0xf] %vm914, %v817
      %948 = vst.msk [vmem:[#allocation2 + $0x108] sm:$0xf] %vm914, %v819
      %949 = vst.msk [vmem:[#allocation2 + $0x110] sm:$0xf] %vm914, %v821
      %950 = vst.msk [vmem:[#allocation2 + $0x118] sm:$0xf] %vm914, %v823
      %951 = vst.msk [vmem:[#allocation2 + $0x120] sm:$0xf] %vm914, %v825
      %952 = vst.msk [vmem:[#allocation2 + $0x128] sm:$0xf] %vm914, %v827
      %953 = vst.msk [vmem:[#allocation2 + $0x130] sm:$0xf] %vm914, %v829
      %954 = vst.msk [vmem:[#allocation2 + $0x138] sm:$0xf] %vm914, %v831
      %955 = vst.msk [vmem:[#allocation2 + $0x140] sm:$0xf] %vm914, %v833
      %956 = vst.msk [vmem:[#allocation2 + $0x148] sm:$0xf] %vm914, %v835
      %957 = vst.msk [vmem:[#allocation2 + $0x150] sm:$0xf] %vm914, %v837
      %958 = vst.msk [vmem:[#allocation2 + $0x158] sm:$0xf] %vm914, %v839
      %959 = vst.msk [vmem:[#allocation2 + $0x160] sm:$0xf] %vm914, %v841
      %960 = vst.msk [vmem:[#allocation2 + $0x168] sm:$0xf] %vm914, %v843
      %961 = vst.msk [vmem:[#allocation2 + $0x170] sm:$0xf] %vm914, %v845
      %962 = vst.msk [vmem:[#allocation2 + $0x178] sm:$0xf] %vm914, %v847
      %963 = vst.msk [vmem:[#allocation2 + $0x180] sm:$0xf] %vm914, %v849
      %964 = vst.msk [vmem:[#allocation2 + $0x188] sm:$0xf] %vm914, %v851
      %965 = vst.msk [vmem:[#allocation2 + $0x190] sm:$0xf] %vm914, %v853
      %966 = vst.msk [vmem:[#allocation2 + $0x198] sm:$0xf] %vm914, %v855
      %967 = vst.msk [vmem:[#allocation2 + $0x1a0] sm:$0xf] %vm914, %v857
      %968 = vst.msk [vmem:[#allocation2 + $0x1a8] sm:$0xf] %vm914, %v859
      %vm969 = vcmask 1045504
      %v970 = vrot.slane %v228, 2
      %v971 = vrot.slane %v229, 2
      %v972 = vsel %vm969, %v970, %v971
      %v973 = vrot.slane %v230, 2
      %v974 = vsel %vm969, %v971, %v973
      %v975 = vrot.slane %v231, 2
      %v976 = vrot.slane %v232, 2
      %v977 = vsel %vm969, %v975, %v976
      %v978 = vrot.slane %v233, 2
      %v979 = vsel %vm969, %v976, %v978
      %v980 = vrot.slane %v234, 2
      %v981 = vrot.slane %v235, 2
      %v982 = vsel %vm969, %v980, %v981
      %v983 = vrot.slane %v236, 2
      %v984 = vsel %vm969, %v981, %v983
      %v985 = vrot.slane %v237, 2
      %v986 = vrot.slane %v238, 2
      %v987 = vsel %vm969, %v985, %v986
      %v988 = vrot.slane %v239, 2
      %v989 = vsel %vm969, %v986, %v988
      %v990 = vrot.slane %v240, 2
      %v991 = vrot.slane %v241, 2
      %v992 = vsel %vm969, %v990, %v991
      %v993 = vrot.slane %v242, 2
      %v994 = vsel %vm969, %v991, %v993
      %v995 = vrot.slane %v243, 2
      %v996 = vrot.slane %v244, 2
      %v997 = vsel %vm969, %v995, %v996
      %v998 = vrot.slane %v245, 2
      %v999 = vsel %vm969, %v996, %v998
      %v1000 = vrot.slane %v246, 2
      %v1001 = vrot.slane %v247, 2
      %v1002 = vsel %vm969, %v1000, %v1001
      %v1003 = vrot.slane %v248, 2
      %v1004 = vsel %vm969, %v1001, %v1003
      %v1005 = vrot.slane %v249, 2
      %v1006 = vrot.slane %v250, 2
      %v1007 = vsel %vm969, %v1005, %v1006
      %v1008 = vrot.slane %v251, 2
      %v1009 = vsel %vm969, %v1006, %v1008
      %v1010 = vrot.slane %v252, 2
      %v1011 = vrot.slane %v253, 2
      %v1012 = vsel %vm969, %v1010, %v1011
      %v1013 = vrot.slane %v254, 2
      %v1014 = vsel %vm969, %v1011, %v1013
      %v1015 = vrot.slane %v255, 2
      %v1016 = vrot.slane %v256, 2
      %v1017 = vsel %vm969, %v1015, %v1016
      %v1018 = vrot.slane %v257, 2
      %v1019 = vsel %vm969, %v1016, %v1018
      %v1020 = vrot.slane %v258, 2
      %v1021 = vrot.slane %v259, 2
      %v1022 = vsel %vm969, %v1020, %v1021
      %v1023 = vrot.slane %v260, 2
      %v1024 = vsel %vm969, %v1021, %v1023
      %v1025 = vrot.slane %v261, 2
      %v1026 = vrot.slane %v262, 2
      %v1027 = vsel %vm969, %v1025, %v1026
      %v1028 = vrot.slane %v263, 2
      %v1029 = vsel %vm969, %v1026, %v1028
      %v1030 = vrot.slane %v264, 2
      %v1031 = vrot.slane %v265, 2
      %v1032 = vsel %vm969, %v1030, %v1031
      %v1033 = vrot.slane %v266, 2
      %v1034 = vsel %vm969, %v1031, %v1033
      %v1035 = vrot.slane %v267, 2
      %v1036 = vrot.slane %v268, 2
      %v1037 = vsel %vm969, %v1035, %v1036
      %v1038 = vrot.slane %v269, 2
      %v1039 = vsel %vm969, %v1036, %v1038
      %v1040 = vrot.slane %v270, 2
      %v1041 = vrot.slane %v271, 2
      %v1042 = vsel %vm969, %v1040, %v1041
      %v1043 = vrot.slane %v272, 2
      %v1044 = vsel %vm969, %v1041, %v1043
      %v1045 = vrot.slane %v273, 2
      %v1046 = vrot.slane %v274, 2
      %v1047 = vsel %vm969, %v1045, %v1046
      %v1048 = vrot.slane %v275, 2
      %v1049 = vsel %vm969, %v1046, %v1048
      %v1050 = vrot.slane %v276, 2
      %v1051 = vrot.slane %v277, 2
      %v1052 = vsel %vm969, %v1050, %v1051
      %v1053 = vrot.slane %v278, 2
      %v1054 = vsel %vm969, %v1051, %v1053
      %v1055 = vrot.slane %v279, 2
      %v1056 = vrot.slane %v280, 2
      %v1057 = vsel %vm969, %v1055, %v1056
      %v1058 = vrot.slane %v281, 2
      %v1059 = vsel %vm969, %v1056, %v1058
      %v1132 = vsel %vm969, %v973, %v970
      %v1133 = vsel %vm969, %v978, %v975
      %v1134 = vsel %vm969, %v983, %v980
      %v1135 = vsel %vm969, %v988, %v985
      %v1136 = vsel %vm969, %v993, %v990
      %v1137 = vsel %vm969, %v998, %v995
      %v1138 = vsel %vm969, %v1003, %v1000
      %v1139 = vsel %vm969, %v1008, %v1005
      %v1140 = vsel %vm969, %v1013, %v1010
      %v1141 = vsel %vm969, %v1018, %v1015
      %v1142 = vsel %vm969, %v1023, %v1020
      %v1143 = vsel %vm969, %v1028, %v1025
      %v1144 = vsel %vm969, %v1033, %v1030
      %v1145 = vsel %vm969, %v1038, %v1035
      %v1146 = vsel %vm969, %v1043, %v1040
      %v1147 = vsel %vm969, %v1048, %v1045
      %v1148 = vsel %vm969, %v1053, %v1050
      %v1149 = vsel %vm969, %v1058, %v1055
      %v1150 = vpack.c.bf16 %v974, %v972
      %v1151 = vpack.c.bf16 %v1132, %v1132
      %v1152 = vpack.c.bf16 %v979, %v977
      %v1153 = vpack.c.bf16 %v1133, %v1133
      %v1154 = vpack.c.bf16 %v984, %v982
      %v1155 = vpack.c.bf16 %v1134, %v1134
      %v1156 = vpack.c.bf16 %v989, %v987
      %v1157 = vpack.c.bf16 %v1135, %v1135
      %v1158 = vpack.c.bf16 %v994, %v992
      %v1159 = vpack.c.bf16 %v1136, %v1136
      %v1160 = vpack.c.bf16 %v999, %v997
      %v1161 = vpack.c.bf16 %v1137, %v1137
      %v1162 = vpack.c.bf16 %v1004, %v1002
      %v1163 = vpack.c.bf16 %v1138, %v1138
      %v1164 = vpack.c.bf16 %v1009, %v1007
      %v1165 = vpack.c.bf16 %v1139, %v1139
      %v1166 = vpack.c.bf16 %v1014, %v1012
      %v1167 = vpack.c.bf16 %v1140, %v1140
      %v1168 = vpack.c.bf16 %v1019, %v1017
      %v1169 = vpack.c.bf16 %v1141, %v1141
      %v1170 = vpack.c.bf16 %v1024, %v1022
      %v1171 = vpack.c.bf16 %v1142, %v1142
      %v1172 = vpack.c.bf16 %v1029, %v1027
      %v1173 = vpack.c.bf16 %v1143, %v1143
      %v1174 = vpack.c.bf16 %v1034, %v1032
      %v1175 = vpack.c.bf16 %v1144, %v1144
      %v1176 = vpack.c.bf16 %v1039, %v1037
      %v1177 = vpack.c.bf16 %v1145, %v1145
      %v1178 = vpack.c.bf16 %v1044, %v1042
      %v1179 = vpack.c.bf16 %v1146, %v1146
      %v1180 = vpack.c.bf16 %v1049, %v1047
      %v1181 = vpack.c.bf16 %v1147, %v1147
      %v1182 = vpack.c.bf16 %v1054, %v1052
      %v1183 = vpack.c.bf16 %v1148, %v1148
      %v1184 = vpack.c.bf16 %v1059, %v1057
      %v1185 = vpack.c.bf16 %v1149, %v1149
      %v1222 = vunpack.c.l.b16 %v1150
      %v1223 = vunpack.c.h.b16 %v1150
      %v1224 = vunpack.c.l.b16 %v1151
      %v1225 = vunpack.c.l.b16 %v1152
      %v1226 = vunpack.c.h.b16 %v1152
      %v1227 = vunpack.c.l.b16 %v1153
      %v1228 = vunpack.c.l.b16 %v1154
      %v1229 = vunpack.c.h.b16 %v1154
      %v1230 = vunpack.c.l.b16 %v1155
      %v1231 = vunpack.c.l.b16 %v1156
      %v1232 = vunpack.c.h.b16 %v1156
      %v1233 = vunpack.c.l.b16 %v1157
      %v1234 = vunpack.c.l.b16 %v1158
      %v1235 = vunpack.c.h.b16 %v1158
      %v1236 = vunpack.c.l.b16 %v1159
      %v1237 = vunpack.c.l.b16 %v1160
      %v1238 = vunpack.c.h.b16 %v1160
      %v1239 = vunpack.c.l.b16 %v1161
      %v1240 = vunpack.c.l.b16 %v1162
      %v1241 = vunpack.c.h.b16 %v1162
      %v1242 = vunpack.c.l.b16 %v1163
      %v1243 = vunpack.c.l.b16 %v1164
      %v1244 = vunpack.c.h.b16 %v1164
      %v1245 = vunpack.c.l.b16 %v1165
      %v1246 = vunpack.c.l.b16 %v1166
      %v1247 = vunpack.c.h.b16 %v1166
      %v1248 = vunpack.c.l.b16 %v1167
      %v1249 = vunpack.c.l.b16 %v1168
      %v1250 = vunpack.c.h.b16 %v1168
      %v1251 = vunpack.c.l.b16 %v1169
      %v1252 = vunpack.c.l.b16 %v1170
      %v1253 = vunpack.c.h.b16 %v1170
      %v1254 = vunpack.c.l.b16 %v1171
      %v1255 = vunpack.c.l.b16 %v1172
      %v1256 = vunpack.c.h.b16 %v1172
      %v1257 = vunpack.c.l.b16 %v1173
      %v1258 = vunpack.c.l.b16 %v1174
      %v1259 = vunpack.c.h.b16 %v1174
      %v1260 = vunpack.c.l.b16 %v1175
      %v1261 = vunpack.c.l.b16 %v1176
      %v1262 = vunpack.c.h.b16 %v1176
      %v1263 = vunpack.c.l.b16 %v1177
      %v1264 = vunpack.c.l.b16 %v1178
      %v1265 = vunpack.c.h.b16 %v1178
      %v1266 = vunpack.c.l.b16 %v1179
      %v1267 = vunpack.c.l.b16 %v1180
      %v1268 = vunpack.c.h.b16 %v1180
      %v1269 = vunpack.c.l.b16 %v1181
      %v1270 = vunpack.c.l.b16 %v1182
      %v1271 = vunpack.c.h.b16 %v1182
      %v1272 = vunpack.c.l.b16 %v1183
      %v1273 = vunpack.c.l.b16 %v1184
      %v1274 = vunpack.c.h.b16 %v1184
      %v1275 = vunpack.c.l.b16 %v1185
      %v1276 = vpack.c.b16 %v1222, %v1222
      %v1277 = vpack.c.b16 %v1223, %v1223
      %v1278 = vpack.c.b16 %v1224, %v1224
      %v1279 = vpack.c.b16 %v1225, %v1225
      %v1280 = vpack.c.b16 %v1226, %v1226
      %v1281 = vpack.c.b16 %v1227, %v1227
      %v1282 = vpack.c.b16 %v1228, %v1228
      %v1283 = vpack.c.b16 %v1229, %v1229
      %v1284 = vpack.c.b16 %v1230, %v1230
      %v1285 = vpack.c.b16 %v1231, %v1231
      %v1286 = vpack.c.b16 %v1232, %v1232
      %v1287 = vpack.c.b16 %v1233, %v1233
      %v1288 = vpack.c.b16 %v1234, %v1234
      %v1289 = vpack.c.b16 %v1235, %v1235
      %v1290 = vpack.c.b16 %v1236, %v1236
      %v1291 = vpack.c.b16 %v1237, %v1237
      %v1292 = vpack.c.b16 %v1238, %v1238
      %v1293 = vpack.c.b16 %v1239, %v1239
      %v1294 = vpack.c.b16 %v1240, %v1240
      %v1295 = vpack.c.b16 %v1241, %v1241
      %v1296 = vpack.c.b16 %v1242, %v1242
      %v1297 = vpack.c.b16 %v1243, %v1243
      %v1298 = vpack.c.b16 %v1244, %v1244
      %v1299 = vpack.c.b16 %v1245, %v1245
      %v1300 = vpack.c.b16 %v1246, %v1246
      %v1301 = vpack.c.b16 %v1247, %v1247
      %v1302 = vpack.c.b16 %v1248, %v1248
      %v1303 = vpack.c.b16 %v1249, %v1249
      %v1304 = vpack.c.b16 %v1250, %v1250
      %v1305 = vpack.c.b16 %v1251, %v1251
      %v1306 = vpack.c.b16 %v1252, %v1252
      %v1307 = vpack.c.b16 %v1253, %v1253
      %v1308 = vpack.c.b16 %v1254, %v1254
      %v1309 = vpack.c.b16 %v1255, %v1255
      %v1310 = vpack.c.b16 %v1256, %v1256
      %v1311 = vpack.c.b16 %v1257, %v1257
      %v1312 = vpack.c.b16 %v1258, %v1258
      %v1313 = vpack.c.b16 %v1259, %v1259
      %v1314 = vpack.c.b16 %v1260, %v1260
      %v1315 = vpack.c.b16 %v1261, %v1261
      %v1316 = vpack.c.b16 %v1262, %v1262
      %v1317 = vpack.c.b16 %v1263, %v1263
      %v1318 = vpack.c.b16 %v1264, %v1264
      %v1319 = vpack.c.b16 %v1265, %v1265
      %v1320 = vpack.c.b16 %v1266, %v1266
      %v1321 = vpack.c.b16 %v1267, %v1267
      %v1322 = vpack.c.b16 %v1268, %v1268
      %v1323 = vpack.c.b16 %v1269, %v1269
      %v1324 = vpack.c.b16 %v1270, %v1270
      %v1325 = vpack.c.b16 %v1271, %v1271
      %v1326 = vpack.c.b16 %v1272, %v1272
      %v1327 = vpack.c.b16 %v1273, %v1273
      %v1328 = vpack.c.b16 %v1274, %v1274
      %v1329 = vpack.c.b16 %v1275, %v1275
      %1384 = vst.msk [vmem:[#allocation2 + $0x4] sm:$0xf] %vm282, %v1276
      %1385 = vst.msk [vmem:[#allocation2 + $0xc] sm:$0xf] %vm282, %v1277
      %1386 = vst.msk [vmem:[#allocation2 + $0x14] sm:$0xf] %vm282, %v1278
      %1387 = vst.msk [vmem:[#allocation2 + $0x1c] sm:$0xf] %vm282, %v1279
      %1388 = vst.msk [vmem:[#allocation2 + $0x24] sm:$0xf] %vm282, %v1280
      %1389 = vst.msk [vmem:[#allocation2 + $0x2c] sm:$0xf] %vm282, %v1281
      %1390 = vst.msk [vmem:[#allocation2 + $0x34] sm:$0xf] %vm282, %v1282
      %1391 = vst.msk [vmem:[#allocation2 + $0x3c] sm:$0xf] %vm282, %v1283
      %1392 = vst.msk [vmem:[#allocation2 + $0x44] sm:$0xf] %vm282, %v1284
      %1393 = vst.msk [vmem:[#allocation2 + $0x4c] sm:$0xf] %vm282, %v1285
      %1394 = vst.msk [vmem:[#allocation2 + $0x54] sm:$0xf] %vm282, %v1286
      %1395 = vst.msk [vmem:[#allocation2 + $0x5c] sm:$0xf] %vm282, %v1287
      %1396 = vst.msk [vmem:[#allocation2 + $0x64] sm:$0xf] %vm282, %v1288
      %1397 = vst.msk [vmem:[#allocation2 + $0x6c] sm:$0xf] %vm282, %v1289
      %1398 = vst.msk [vmem:[#allocation2 + $0x74] sm:$0xf] %vm282, %v1290
      %1399 = vst.msk [vmem:[#allocation2 + $0x7c] sm:$0xf] %vm282, %v1291
      %1400 = vst.msk [vmem:[#allocation2 + $0x84] sm:$0xf] %vm282, %v1292
      %1401 = vst.msk [vmem:[#allocation2 + $0x8c] sm:$0xf] %vm282, %v1293
      %1402 = vst.msk [vmem:[#allocation2 + $0x94] sm:$0xf] %vm282, %v1294
      %1403 = vst.msk [vmem:[#allocation2 + $0x9c] sm:$0xf] %vm282, %v1295
      %1404 = vst.msk [vmem:[#allocation2 + $0xa4] sm:$0xf] %vm282, %v1296
      %1405 = vst.msk [vmem:[#allocation2 + $0xac] sm:$0xf] %vm282, %v1297
      %1406 = vst.msk [vmem:[#allocation2 + $0xb4] sm:$0xf] %vm282, %v1298
      %1407 = vst.msk [vmem:[#allocation2 + $0xbc] sm:$0xf] %vm282, %v1299
      %1408 = vst.msk [vmem:[#allocation2 + $0xc4] sm:$0xf] %vm282, %v1300
      %1409 = vst.msk [vmem:[#allocation2 + $0xcc] sm:$0xf] %vm282, %v1301
      %1410 = vst.msk [vmem:[#allocation2 + $0xd4] sm:$0xf] %vm282, %v1302
      %1411 = vst.msk [vmem:[#allocation2 + $0xdc] sm:$0xf] %vm282, %v1303
      %1412 = vst.msk [vmem:[#allocation2 + $0xe4] sm:$0xf] %vm282, %v1304
      %1413 = vst.msk [vmem:[#allocation2 + $0xec] sm:$0xf] %vm282, %v1305
      %1414 = vst.msk [vmem:[#allocation2 + $0xf4] sm:$0xf] %vm282, %v1306
      %1415 = vst.msk [vmem:[#allocation2 + $0xfc] sm:$0xf] %vm282, %v1307
      %1416 = vst.msk [vmem:[#allocation2 + $0x104] sm:$0xf] %vm282, %v1308
      %1417 = vst.msk [vmem:[#allocation2 + $0x10c] sm:$0xf] %vm282, %v1309
      %1418 = vst.msk [vmem:[#allocation2 + $0x114] sm:$0xf] %vm282, %v1310
      %1419 = vst.msk [vmem:[#allocation2 + $0x11c] sm:$0xf] %vm282, %v1311
      %1420 = vst.msk [vmem:[#allocation2 + $0x124] sm:$0xf] %vm282, %v1312
      %1421 = vst.msk [vmem:[#allocation2 + $0x12c] sm:$0xf] %vm282, %v1313
      %1422 = vst.msk [vmem:[#allocation2 + $0x134] sm:$0xf] %vm282, %v1314
      %1423 = vst.msk [vmem:[#allocation2 + $0x13c] sm:$0xf] %vm282, %v1315
      %1424 = vst.msk [vmem:[#allocation2 + $0x144] sm:$0xf] %vm282, %v1316
      %1425 = vst.msk [vmem:[#allocation2 + $0x14c] sm:$0xf] %vm282, %v1317
      %1426 = vst.msk [vmem:[#allocation2 + $0x154] sm:$0xf] %vm282, %v1318
      %1427 = vst.msk [vmem:[#allocation2 + $0x15c] sm:$0xf] %vm282, %v1319
      %1428 = vst.msk [vmem:[#allocation2 + $0x164] sm:$0xf] %vm282, %v1320
      %1429 = vst.msk [vmem:[#allocation2 + $0x16c] sm:$0xf] %vm282, %v1321
      %1430 = vst.msk [vmem:[#allocation2 + $0x174] sm:$0xf] %vm282, %v1322
      %1431 = vst.msk [vmem:[#allocation2 + $0x17c] sm:$0xf] %vm282, %v1323
      %1432 = vst.msk [vmem:[#allocation2 + $0x184] sm:$0xf] %vm282, %v1324
      %1433 = vst.msk [vmem:[#allocation2 + $0x18c] sm:$0xf] %vm282, %v1325
      %1434 = vst.msk [vmem:[#allocation2 + $0x194] sm:$0xf] %vm282, %v1326
      %1435 = vst.msk [vmem:[#allocation2 + $0x19c] sm:$0xf] %vm282, %v1327
      %1436 = vst.msk [vmem:[#allocation2 + $0x1a4] sm:$0xf] %vm282, %v1328
      %1437 = vst.msk [vmem:[#allocation2 + $0x1ac] sm:$0xf] %vm282, %v1329
      %s1438 = smul.u32 0, 6
      %s1439 = smul.addr %s1438, 4
      %s1440 = scalar_lea.vmem [#allocation2], %s1439
      %v1441 = vld [vmem:[%s1440] sm:$0xff]
      %v1442 = vld [vmem:[%s1440 + $0x8] sm:$0xff]
      %v1443 = vld [vmem:[%s1440 + $0x10] sm:$0xff]
      %v1444 = vld [vmem:[%s1440 + $0x18] sm:$0xff]
      %v1445 = vld [vmem:[%s1440 + $0x20] sm:$0xff]
      %v1446 = vld [vmem:[%s1440 + $0x28] sm:$0xff]
      %v1447 = vld [vmem:[%s1440 + $0x30] sm:$0xff]
      %v1448 = vld [vmem:[%s1440 + $0x38] sm:$0xff]
      %v1449 = vld [vmem:[%s1440 + $0x40] sm:$0xff]
      %v1450 = vld [vmem:[%s1440 + $0x48] sm:$0xff]
      %v1451 = vld [vmem:[%s1440 + $0x50] sm:$0xff]
      %v1452 = vld [vmem:[%s1440 + $0x58] sm:$0xff]
      %v1453 = vld [vmem:[%s1440 + $0x60] sm:$0xff]
      %v1454 = vld [vmem:[%s1440 + $0x68] sm:$0xff]
      %v1455 = vld [vmem:[%s1440 + $0x70] sm:$0xff]
      %v1456 = vld [vmem:[%s1440 + $0x78] sm:$0xff]
      %v1457 = vld [vmem:[%s1440 + $0x80] sm:$0xff]
      %v1458 = vld [vmem:[%s1440 + $0x88] sm:$0xff]
      %v1459 = vld [vmem:[%s1440 + $0x90] sm:$0xff]
      %v1460 = vld [vmem:[%s1440 + $0x98] sm:$0xff]
      %v1461 = vld [vmem:[%s1440 + $0xa0] sm:$0xff]
      %v1462 = vld [vmem:[%s1440 + $0xa8] sm:$0xff]
      %v1463 = vld [vmem:[%s1440 + $0xb0] sm:$0xff]
      %v1464 = vld [vmem:[%s1440 + $0xb8] sm:$0xff]
      %v1465 = vld [vmem:[%s1] sm:$0xf]
      %v1466 = vld [vmem:[%s1 + $0x4] sm:$0xf]
      %v1467 = vld [vmem:[%s1 + $0x8] sm:$0xf]
      %v1468 = vld [vmem:[%s1 + $0xc] sm:$0xf]
      %v1469 = vld [vmem:[%s1 + $0x10] sm:$0xf]
      %v1470 = vld [vmem:[%s1 + $0x14] sm:$0xf]
      %v1471 = vld [vmem:[%s1 + $0x18] sm:$0xf]
      %v1472 = vld [vmem:[%s1 + $0x1c] sm:$0xf]
      %v1473 = vld [vmem:[%s1 + $0x20] sm:$0xf]
      %v1474 = vld [vmem:[%s1 + $0x24] sm:$0xf]
      %v1475 = vld [vmem:[%s1 + $0x28] sm:$0xf]
      %v1476 = vld [vmem:[%s1 + $0x2c] sm:$0xf]
      %v1477 = vld [vmem:[%s1 + $0x30] sm:$0xf]
      %v1478 = vld [vmem:[%s1 + $0x34] sm:$0xf]
      %v1479 = vld [vmem:[%s1 + $0x38] sm:$0xf]
      %v1480 = vld [vmem:[%s1 + $0x3c] sm:$0xf]
      %v1481 = vld [vmem:[%s1 + $0x40] sm:$0xf]
      %v1482 = vld [vmem:[%s1 + $0x44] sm:$0xf]
      %v1483 = vld [vmem:[%s1 + $0x48] sm:$0xf]
      %v1484 = vld [vmem:[%s1 + $0x4c] sm:$0xf]
      %v1485 = vld [vmem:[%s1 + $0x50] sm:$0xf]
      %v1486 = vld [vmem:[%s1 + $0x54] sm:$0xf]
      %v1487 = vld [vmem:[%s1 + $0x58] sm:$0xf]
      %v1488 = vld [vmem:[%s1 + $0x5c] sm:$0xf]
      %s1489 = sadd.s32 0, 1
      %s1490 = smul.u32 %s1489, 6
      %s1491 = smul.addr %s1490, 4
      %s1492 = scalar_lea.vmem [#allocation2], %s1491
      %v1493 = vld [vmem:[%s1492] sm:$0xff]
      %v1494 = vld [vmem:[%s1492 + $0x8] sm:$0xff]
      %v1495 = vld [vmem:[%s1492 + $0x10] sm:$0xff]
      %v1496 = vld [vmem:[%s1492 + $0x18] sm:$0xff]
      %v1497 = vld [vmem:[%s1492 + $0x20] sm:$0xff]
      %v1498 = vld [vmem:[%s1492 + $0x28] sm:$0xff]
      %v1499 = vld [vmem:[%s1492 + $0x30] sm:$0xff]
      %v1500 = vld [vmem:[%s1492 + $0x38] sm:$0xff]
      %v1501 = vld [vmem:[%s1492 + $0x40] sm:$0xff]
      %v1502 = vld [vmem:[%s1492 + $0x48] sm:$0xff]
      %v1503 = vld [vmem:[%s1492 + $0x50] sm:$0xff]
      %v1504 = vld [vmem:[%s1492 + $0x58] sm:$0xff]
      %v1505 = vld [vmem:[%s1492 + $0x60] sm:$0xff]
      %v1506 = vld [vmem:[%s1492 + $0x68] sm:$0xff]
      %v1507 = vld [vmem:[%s1492 + $0x70] sm:$0xff]
      %v1508 = vld [vmem:[%s1492 + $0x78] sm:$0xff]
      %v1509 = vld [vmem:[%s1492 + $0x80] sm:$0xff]
      %v1510 = vld [vmem:[%s1492 + $0x88] sm:$0xff]
      %v1511 = vld [vmem:[%s1492 + $0x90] sm:$0xff]
      %v1512 = vld [vmem:[%s1492 + $0x98] sm:$0xff]
      %v1513 = vld [vmem:[%s1492 + $0xa0] sm:$0xff]
      %v1514 = vld [vmem:[%s1492 + $0xa8] sm:$0xff]
      %v1515 = vld [vmem:[%s1492 + $0xb0] sm:$0xff]
      %v1516 = vld [vmem:[%s1492 + $0xb8] sm:$0xff]
      %s1517 = scalar_lea.vmem %s1, 96
      %v1518 = vld [vmem:[%s1517] sm:$0xf]
      %v1519 = vld [vmem:[%s1517 + $0x4] sm:$0xf]
      %v1520 = vld [vmem:[%s1517 + $0x8] sm:$0xf]
      %v1521 = vld [vmem:[%s1517 + $0xc] sm:$0xf]
      %v1522 = vld [vmem:[%s1517 + $0x10] sm:$0xf]
      %v1523 = vld [vmem:[%s1517 + $0x14] sm:$0xf]
      %v1524 = vld [vmem:[%s1517 + $0x18] sm:$0xf]
      %v1525 = vld [vmem:[%s1517 + $0x1c] sm:$0xf]
      %v1526 = vld [vmem:[%s1517 + $0x20] sm:$0xf]
      %v1527 = vld [vmem:[%s1517 + $0x24] sm:$0xf]
      %v1528 = vld [vmem:[%s1517 + $0x28] sm:$0xf]
      %v1529 = vld [vmem:[%s1517 + $0x2c] sm:$0xf]
      %v1530 = vld [vmem:[%s1517 + $0x30] sm:$0xf]
      %v1531 = vld [vmem:[%s1517 + $0x34] sm:$0xf]
      %v1532 = vld [vmem:[%s1517 + $0x38] sm:$0xf]
      %v1533 = vld [vmem:[%s1517 + $0x3c] sm:$0xf]
      %v1534 = vld [vmem:[%s1517 + $0x40] sm:$0xf]
      %v1535 = vld [vmem:[%s1517 + $0x44] sm:$0xf]
      %v1536 = vld [vmem:[%s1517 + $0x48] sm:$0xf]
      %v1537 = vld [vmem:[%s1517 + $0x4c] sm:$0xf]
      %v1538 = vld [vmem:[%s1517 + $0x50] sm:$0xf]
      %v1539 = vld [vmem:[%s1517 + $0x54] sm:$0xf]
      %v1540 = vld [vmem:[%s1517 + $0x58] sm:$0xf]
      %v1541 = vld [vmem:[%s1517 + $0x5c] sm:$0xf]
      %v1566 = vunpack.c.l.b16 %v1493
      %v1567 = vunpack.c.h.b16 %v1493
      %v1568 = vunpack.c.l.b16 %v1494
      %v1569 = vunpack.c.h.b16 %v1494
      %v1570 = vunpack.c.l.b16 %v1495
      %v1571 = vunpack.c.h.b16 %v1495
      %v1572 = vunpack.c.l.b16 %v1496
      %v1573 = vunpack.c.h.b16 %v1496
      %v1574 = vunpack.c.l.b16 %v1497
      %v1575 = vunpack.c.h.b16 %v1497
      %v1576 = vunpack.c.l.b16 %v1498
      %v1577 = vunpack.c.h.b16 %v1498
      %v1578 = vunpack.c.l.b16 %v1499
      %v1579 = vunpack.c.h.b16 %v1499
      %v1580 = vunpack.c.l.b16 %v1500
      %v1581 = vunpack.c.h.b16 %v1500
      %v1582 = vunpack.c.l.b16 %v1501
      %v1583 = vunpack.c.h.b16 %v1501
      %v1584 = vunpack.c.l.b16 %v1502
      %v1585 = vunpack.c.h.b16 %v1502
      %v1586 = vunpack.c.l.b16 %v1503
      %v1587 = vunpack.c.h.b16 %v1503
      %v1588 = vunpack.c.l.b16 %v1504
      %v1589 = vunpack.c.h.b16 %v1504
      %v1590 = vunpack.c.l.b16 %v1505
      %v1591 = vunpack.c.h.b16 %v1505
      %v1592 = vunpack.c.l.b16 %v1506
      %v1593 = vunpack.c.h.b16 %v1506
      %v1594 = vunpack.c.l.b16 %v1507
      %v1595 = vunpack.c.h.b16 %v1507
      %v1596 = vunpack.c.l.b16 %v1508
      %v1597 = vunpack.c.h.b16 %v1508
      %v1598 = vunpack.c.l.b16 %v1509
      %v1599 = vunpack.c.h.b16 %v1509
      %v1600 = vunpack.c.l.b16 %v1510
      %v1601 = vunpack.c.h.b16 %v1510
      %v1602 = vunpack.c.l.b16 %v1511
      %v1603 = vunpack.c.h.b16 %v1511
      %v1604 = vunpack.c.l.b16 %v1512
      %v1605 = vunpack.c.h.b16 %v1512
      %v1606 = vunpack.c.l.b16 %v1513
      %v1607 = vunpack.c.h.b16 %v1513
      %v1608 = vunpack.c.l.b16 %v1514
      %v1609 = vunpack.c.h.b16 %v1514
      %v1610 = vunpack.c.l.b16 %v1515
      %v1611 = vunpack.c.h.b16 %v1515
      %v1612 = vunpack.c.l.b16 %v1516
      %v1613 = vunpack.c.h.b16 %v1516
      %v1614 = vpack.c.b16 %v1568, %v1566
      %v1615 = vpack.c.b16 %v1569, %v1567
      %v1616 = vpack.c.b16 %v1572, %v1570
      %v1617 = vpack.c.b16 %v1573, %v1571
      %v1618 = vpack.c.b16 %v1576, %v1574
      %v1619 = vpack.c.b16 %v1577, %v1575
      %v1620 = vpack.c.b16 %v1580, %v1578
      %v1621 = vpack.c.b16 %v1581, %v1579
      %v1622 = vpack.c.b16 %v1584, %v1582
      %v1623 = vpack.c.b16 %v1585, %v1583
      %v1624 = vpack.c.b16 %v1588, %v1586
      %v1625 = vpack.c.b16 %v1589, %v1587
      %v1626 = vpack.c.b16 %v1592, %v1590
      %v1627 = vpack.c.b16 %v1593, %v1591
      %v1628 = vpack.c.b16 %v1596, %v1594
      %v1629 = vpack.c.b16 %v1597, %v1595
      %v1630 = vpack.c.b16 %v1600, %v1598
      %v1631 = vpack.c.b16 %v1601, %v1599
      %v1632 = vpack.c.b16 %v1604, %v1602
      %v1633 = vpack.c.b16 %v1605, %v1603
      %v1634 = vpack.c.b16 %v1608, %v1606
      %v1635 = vpack.c.b16 %v1609, %v1607
      %v1636 = vpack.c.b16 %v1612, %v1610
      %v1637 = vpack.c.b16 %v1613, %v1611
      %v1674 = vunpack.c.l.b16 %v1518
      %v1675 = vunpack.c.l.b16 %v1519
      %v1676 = vunpack.c.l.b16 %v1520
      %v1677 = vunpack.c.l.b16 %v1521
      %v1678 = vunpack.c.l.b16 %v1522
      %v1679 = vunpack.c.l.b16 %v1523
      %v1680 = vunpack.c.l.b16 %v1524
      %v1681 = vunpack.c.l.b16 %v1525
      %v1682 = vunpack.c.l.b16 %v1526
      %v1683 = vunpack.c.l.b16 %v1527
      %v1684 = vunpack.c.l.b16 %v1528
      %v1685 = vunpack.c.l.b16 %v1529
      %v1686 = vunpack.c.l.b16 %v1530
      %v1687 = vunpack.c.l.b16 %v1531
      %v1688 = vunpack.c.l.b16 %v1532
      %v1689 = vunpack.c.l.b16 %v1533
      %v1690 = vunpack.c.l.b16 %v1534
      %v1691 = vunpack.c.l.b16 %v1535
      %v1692 = vunpack.c.l.b16 %v1536
      %v1693 = vunpack.c.l.b16 %v1537
      %v1694 = vunpack.c.l.b16 %v1538
      %v1695 = vunpack.c.l.b16 %v1539
      %v1696 = vunpack.c.l.b16 %v1540
      %v1697 = vunpack.c.l.b16 %v1541
      %v1698 = vpack.c.b16 %v1675, %v1674
      %v1699 = vpack.c.b16 %v1677, %v1676
      %v1700 = vpack.c.b16 %v1679, %v1678
      %v1701 = vpack.c.b16 %v1681, %v1680
      %v1702 = vpack.c.b16 %v1683, %v1682
      %v1703 = vpack.c.b16 %v1685, %v1684
      %v1704 = vpack.c.b16 %v1687, %v1686
      %v1705 = vpack.c.b16 %v1689, %v1688
      %v1706 = vpack.c.b16 %v1691, %v1690
      %v1707 = vpack.c.b16 %v1693, %v1692
      %v1708 = vpack.c.b16 %v1695, %v1694
      %v1709 = vpack.c.b16 %v1697, %v1696
      %vm1722 = vcmask 523264
      %v1724 = vsel %vm1722, %v1615, 0
      %v1727 = vsel %vm1722, %v1617, 0
      %v1730 = vsel %vm1722, %v1619, 0
      %v1733 = vsel %vm1722, %v1621, 0
      %v1736 = vsel %vm1722, %v1623, 0
      %v1739 = vsel %vm1722, %v1625, 0
      %v1742 = vsel %vm1722, %v1627, 0
      %v1745 = vsel %vm1722, %v1629, 0
      %v1748 = vsel %vm1722, %v1631, 0
      %v1751 = vsel %vm1722, %v1633, 0
      %v1754 = vsel %vm1722, %v1635, 0
      %v1757 = vsel %vm1722, %v1637, 0
      %1759 = vmatprep.subr.bf16.mxu0 0
      %1760 = vmatpush1.bf16.msra.mxu0 %v1698
      %1761 = vmatprep.subr.bf16.mxu0 0
      %1762 = vmatpush1.bf16.msra.mxu0 %v1699
      %1763 = vmatprep.subr.bf16.mxu0 0
      %1764 = vmatpush1.bf16.msra.mxu0 %v1700
      %1765 = vmatprep.subr.bf16.mxu0 0
      %1766 = vmatpush1.bf16.msra.mxu0 %v1701
      %1767 = vmatprep.subr.bf16.mxu0 0
      %1768 = vmatpush1.bf16.msra.mxu0 %v1702
      %1769 = vmatprep.subr.bf16.mxu0 0
      %1770 = vmatpush1.bf16.msra.mxu0 %v1703
      %1771 = vmatprep.subr.bf16.mxu0 0
      %1772 = vmatpush1.bf16.msra.mxu0 %v1704
      %1773 = vmatprep.subr.bf16.mxu0 0
      %1774 = vmatpush1.bf16.msra.mxu0 %v1705
      %1775 = vmatprep.subr.bf16.mxu0 0
      %1776 = vmatpush1.bf16.msra.mxu0 %v1706
      %1777 = vmatprep.subr.bf16.mxu0 0
      %1778 = vmatpush1.bf16.msra.mxu0 %v1707
      %1779 = vmatprep.subr.bf16.mxu0 0
      %1780 = vmatpush1.bf16.msra.mxu0 %v1708
      %1781 = vmatprep.subr.bf16.mxu0 0
      %1782 = vmatpush1.bf16.msra.mxu0 %v1709
      %1783 = vmatprep.subr.bf16.mxu0 0
      %1784 = vmatpush1.bf16.msra.mxu0 0
      %1785 = vmatprep.subr.bf16.mxu0 0
      %1786 = vmatpush1.bf16.msra.mxu0 0
      %1787 = vmatprep.subr.bf16.mxu0 0
      %1788 = vmatpush1.bf16.msra.mxu0 0
      %1789 = vmatprep.subr.bf16.mxu0 0
      %1790 = vmatpush1.bf16.msra.mxu0 0
      %1791 = vmatprep.mubr.bf16.mxu0 %v1724
      %1792 = vmatmul.mubr.bf16.gmra.mrb[0].mxu0 %v1614
      %v1793 = vpop.f32.mrb[0].mxu0
      %v1794 = vadd.f32 0.0, %v1793
      %v1795 = vpop.f32.mrb[0].mxu0
      %v1796 = vpop.f32.mrb[0].mxu0
      %v1797 = vadd.f32 0.0, %v1796
      %v1798 = vpop.f32.mrb[0].mxu0
      %1799 = vmatprep.mubr.bf16.mxu0 %v1727
      %1800 = vmatmul.mubr.bf16.gmra.mrb[0].mxu0 %v1616
      %v1801 = vpop.f32.mrb[0].mxu0
      %v1802 = vpop.f32.mrb[0].mxu0
      %v1803 = vpop.f32.mrb[0].mxu0
      %v1804 = vadd.f32 0.0, %v1803
      %v1805 = vpop.f32.mrb[0].mxu0
      %1806 = vmatprep.mubr.bf16.mxu0 %v1730
      %1807 = vmatmul.mubr.bf16.gmra.mrb[0].mxu0 %v1618
      %v1808 = vpop.f32.mrb[0].mxu0
      %v1809 = vadd.f32 0.0, %v1808
      %v1810 = vpop.f32.mrb[0].mxu0
      %v1811 = vpop.f32.mrb[0].mxu0
      %v1812 = vpop.f32.mrb[0].mxu0
      %1813 = vmatprep.mubr.bf16.mxu0 %v1733
      %1814 = vmatmul.mubr.bf16.gmra.mrb[0].mxu0 %v1620
      %v1815 = vpop.f32.mrb[0].mxu0
      %v1816 = vadd.f32 0.0, %v1815
      %v1817 = vpop.f32.mrb[0].mxu0
      %v1818 = vpop.f32.mrb[0].mxu0
      %v1819 = vadd.f32 0.0, %v1818
      %v1820 = vpop.f32.mrb[0].mxu0
      %1821 = vmatprep.mubr.bf16.mxu0 %v1736
      %1822 = vmatmul.mubr.bf16.gmra.mrb[0].mxu0 %v1622
      %v1823 = vpop.f32.mrb[0].mxu0
      %v1824 = vpop.f32.mrb[0].mxu0
      %v1825 = vpop.f32.mrb[0].mxu0
      %v1826 = vadd.f32 0.0, %v1825
      %v1827 = vpop.f32.mrb[0].mxu0
      %1828 = vmatprep.mubr.bf16.mxu0 %v1739
      %1829 = vmatmul.mubr.bf16.gmra.mrb[0].mxu0 %v1624
      %v1830 = vpop.f32.mrb[0].mxu0
      %v1831 = vadd.f32 0.0, %v1830
      %v1832 = vpop.f32.mrb[0].mxu0
      %v1833 = vpop.f32.mrb[0].mxu0
      %v1834 = vpop.f32.mrb[0].mxu0
      %1835 = vmatprep.mubr.bf16.mxu0 %v1742
      %1836 = vmatmul.mubr.bf16.gmra.mrb[0].mxu0 %v1626
      %v1837 = vpop.f32.mrb[0].mxu0
      %v1838 = vadd.f32 0.0, %v1837
      %v1839 = vpop.f32.mrb[0].mxu0
      %v1840 = vpop.f32.mrb[0].mxu0
      %v1841 = vadd.f32 0.0, %v1840
      %v1842 = vpop.f32.mrb[0].mxu0
      %1843 = vmatprep.mubr.bf16.mxu0 %v1745
      %1844 = vmatmul.mubr.bf16.gmra.mrb[0].mxu0 %v1628
      %v1845 = vpop.f32.mrb[0].mxu0
      %v1846 = vpop.f32.mrb[0].mxu0
      %v1847 = vpop.f32.mrb[0].mxu0
      %v1848 = vadd.f32 0.0, %v1847
      %v1849 = vpop.f32.mrb[0].mxu0
      %1850 = vmatprep.mubr.bf16.mxu0 %v1748
      %1851 = vmatmul.mubr.bf16.gmra.mrb[0].mxu0 %v1630
      %v1852 = vpop.f32.mrb[0].mxu0
      %v1853 = vadd.f32 0.0, %v1852
      %v1854 = vpop.f32.mrb[0].mxu0
      %v1855 = vpop.f32.mrb[0].mxu0
      %v1856 = vpop.f32.mrb[0].mxu0
      %1857 = vmatprep.mubr.bf16.mxu0 %v1751
      %1858 = vmatmul.mubr.bf16.gmra.mrb[0].mxu0 %v1632
      %v1859 = vpop.f32.mrb[0].mxu0
      %v1860 = vadd.f32 0.0, %v1859
      %v1861 = vpop.f32.mrb[0].mxu0
      %v1862 = vpop.f32.mrb[0].mxu0
      %v1863 = vadd.f32 0.0, %v1862
      %v1864 = vpop.f32.mrb[0].mxu0
      %1865 = vmatprep.mubr.bf16.mxu0 %v1754
      %1866 = vmatmul.mubr.bf16.gmra.mrb[0].mxu0 %v1634
      %v1867 = vpop.f32.mrb[0].mxu0
      %v1868 = vpop.f32.mrb[0].mxu0
      %v1869 = vpop.f32.mrb[0].mxu0
      %v1870 = vadd.f32 0.0, %v1869
      %v1871 = vpop.f32.mrb[0].mxu0
      %1872 = vmatprep.mubr.bf16.mxu0 %v1757
      %1873 = vmatmul.mubr.bf16.gmra.mrb[0].mxu0 %v1636
      %v1874 = vpop.f32.mrb[0].mxu0
      %v1875 = vadd.f32 0.0, %v1874
      %v1876 = vpop.f32.mrb[0].mxu0
      %v1877 = vpop.f32.mrb[0].mxu0
      %v1878 = vpop.f32.mrb[0].mxu0
      %1879 = vdwg.mxu0
      %v1904 = vunpack.c.l.b16 %v1441
      %v1905 = vunpack.c.h.b16 %v1441
      %v1906 = vunpack.c.l.b16 %v1442
      %v1907 = vunpack.c.h.b16 %v1442
      %v1908 = vunpack.c.l.b16 %v1443
      %v1909 = vunpack.c.h.b16 %v1443
      %v1910 = vunpack.c.l.b16 %v1444
      %v1911 = vunpack.c.h.b16 %v1444
      %v1912 = vunpack.c.l.b16 %v1445
      %v1913 = vunpack.c.h.b16 %v1445
      %v1914 = vunpack.c.l.b16 %v1446
      %v1915 = vunpack.c.h.b16 %v1446
      %v1916 = vunpack.c.l.b16 %v1447
      %v1917 = vunpack.c.h.b16 %v1447
      %v1918 = vunpack.c.l.b16 %v1448
      %v1919 = vunpack.c.h.b16 %v1448
      %v1920 = vunpack.c.l.b16 %v1449
      %v1921 = vunpack.c.h.b16 %v1449
      %v1922 = vunpack.c.l.b16 %v1450
      %v1923 = vunpack.c.h.b16 %v1450
      %v1924 = vunpack.c.l.b16 %v1451
      %v1925 = vunpack.c.h.b16 %v1451
      %v1926 = vunpack.c.l.b16 %v1452
      %v1927 = vunpack.c.h.b16 %v1452
      %v1928 = vunpack.c.l.b16 %v1453
      %v1929 = vunpack.c.h.b16 %v1453
      %v1930 = vunpack.c.l.b16 %v1454
      %v1931 = vunpack.c.h.b16 %v1454
      %v1932 = vunpack.c.l.b16 %v1455
      %v1933 = vunpack.c.h.b16 %v1455
      %v1934 = vunpack.c.l.b16 %v1456
      %v1935 = vunpack.c.h.b16 %v1456
      %v1936 = vunpack.c.l.b16 %v1457
      %v1937 = vunpack.c.h.b16 %v1457
      %v1938 = vunpack.c.l.b16 %v1458
      %v1939 = vunpack.c.h.b16 %v1458
      %v1940 = vunpack.c.l.b16 %v1459
      %v1941 = vunpack.c.h.b16 %v1459
      %v1942 = vunpack.c.l.b16 %v1460
      %v1943 = vunpack.c.h.b16 %v1460
      %v1944 = vunpack.c.l.b16 %v1461
      %v1945 = vunpack.c.h.b16 %v1461
      %v1946 = vunpack.c.l.b16 %v1462
      %v1947 = vunpack.c.h.b16 %v1462
      %v1948 = vunpack.c.l.b16 %v1463
      %v1949 = vunpack.c.h.b16 %v1463
      %v1950 = vunpack.c.l.b16 %v1464
      %v1951 = vunpack.c.h.b16 %v1464
      %v1952 = vpack.c.b16 %v1906, %v1904
      %v1953 = vpack.c.b16 %v1907, %v1905
      %v1954 = vpack.c.b16 %v1910, %v1908
      %v1955 = vpack.c.b16 %v1911, %v1909
      %v1956 = vpack.c.b16 %v1914, %v1912
      %v1957 = vpack.c.b16 %v1915, %v1913
      %v1958 = vpack.c.b16 %v1918, %v1916
      %v1959 = vpack.c.b16 %v1919, %v1917
      %v1960 = vpack.c.b16 %v1922, %v1920
      %v1961 = vpack.c.b16 %v1923, %v1921
      %v1962 = vpack.c.b16 %v1926, %v1924
      %v1963 = vpack.c.b16 %v1927, %v1925
      %v1964 = vpack.c.b16 %v1930, %v1928
      %v1965 = vpack.c.b16 %v1931, %v1929
      %v1966 = vpack.c.b16 %v1934, %v1932
      %v1967 = vpack.c.b16 %v1935, %v1933
      %v1968 = vpack.c.b16 %v1938, %v1936
      %v1969 = vpack.c.b16 %v1939, %v1937
      %v1970 = vpack.c.b16 %v1942, %v1940
      %v1971 = vpack.c.b16 %v1943, %v1941
      %v1972 = vpack.c.b16 %v1946, %v1944
      %v1973 = vpack.c.b16 %v1947, %v1945
      %v1974 = vpack.c.b16 %v1950, %v1948
      %v1975 = vpack.c.b16 %v1951, %v1949
      %v2012 = vunpack.c.l.b16 %v1465
      %v2013 = vunpack.c.l.b16 %v1466
      %v2014 = vunpack.c.l.b16 %v1467
      %v2015 = vunpack.c.l.b16 %v1468
      %v2016 = vunpack.c.l.b16 %v1469
      %v2017 = vunpack.c.l.b16 %v1470
      %v2018 = vunpack.c.l.b16 %v1471
      %v2019 = vunpack.c.l.b16 %v1472
      %v2020 = vunpack.c.l.b16 %v1473
      %v2021 = vunpack.c.l.b16 %v1474
      %v2022 = vunpack.c.l.b16 %v1475
      %v2023 = vunpack.c.l.b16 %v1476
      %v2024 = vunpack.c.l.b16 %v1477
      %v2025 = vunpack.c.l.b16 %v1478
      %v2026 = vunpack.c.l.b16 %v1479
      %v2027 = vunpack.c.l.b16 %v1480
      %v2028 = vunpack.c.l.b16 %v1481
      %v2029 = vunpack.c.l.b16 %v1482
      %v2030 = vunpack.c.l.b16 %v1483
      %v2031 = vunpack.c.l.b16 %v1484
      %v2032 = vunpack.c.l.b16 %v1485
      %v2033 = vunpack.c.l.b16 %v1486
      %v2034 = vunpack.c.l.b16 %v1487
      %v2035 = vunpack.c.l.b16 %v1488
      %v2036 = vpack.c.b16 %v2013, %v2012
      %v2037 = vpack.c.b16 %v2015, %v2014
      %v2038 = vpack.c.b16 %v2017, %v2016
      %v2039 = vpack.c.b16 %v2019, %v2018
      %v2040 = vpack.c.b16 %v2021, %v2020
      %v2041 = vpack.c.b16 %v2023, %v2022
      %v2042 = vpack.c.b16 %v2025, %v2024
      %v2043 = vpack.c.b16 %v2027, %v2026
      %v2044 = vpack.c.b16 %v2029, %v2028
      %v2045 = vpack.c.b16 %v2031, %v2030
      %v2046 = vpack.c.b16 %v2033, %v2032
      %v2047 = vpack.c.b16 %v2035, %v2034
      %v2061 = vsel %vm1722, %v1953, 0
      %v2064 = vsel %vm1722, %v1955, 0
      %v2067 = vsel %vm1722, %v1957, 0
      %v2070 = vsel %vm1722, %v1959, 0
      %v2073 = vsel %vm1722, %v1961, 0
      %v2076 = vsel %vm1722, %v1963, 0
      %v2079 = vsel %vm1722, %v1965, 0
      %v2082 = vsel %vm1722, %v1967, 0
      %v2085 = vsel %vm1722, %v1969, 0
      %v2088 = vsel %vm1722, %v1971, 0
      %v2091 = vsel %vm1722, %v1973, 0
      %v2094 = vsel %vm1722, %v1975, 0
      %2096 = vmatprep.subr.bf16.mxu0 0
      %2097 = vmatpush1.bf16.msra.mxu0 %v2036
      %2098 = vmatprep.subr.bf16.mxu0 0
      %2099 = vmatpush1.bf16.msra.mxu0 %v2037
      %2100 = vmatprep.subr.bf16.mxu0 0
      %2101 = vmatpush1.bf16.msra.mxu0 %v2038
      %2102 = vmatprep.subr.bf16.mxu0 0
      %2103 = vmatpush1.bf16.msra.mxu0 %v2039
      %2104 = vmatprep.subr.bf16.mxu0 0
      %2105 = vmatpush1.bf16.msra.mxu0 %v2040
      %2106 = vmatprep.subr.bf16.mxu0 0
      %2107 = vmatpush1.bf16.msra.mxu0 %v2041
      %2108 = vmatprep.subr.bf16.mxu0 0
      %2109 = vmatpush1.bf16.msra.mxu0 %v2042
      %2110 = vmatprep.subr.bf16.mxu0 0
      %2111 = vmatpush1.bf16.msra.mxu0 %v2043
      %2112 = vmatprep.subr.bf16.mxu0 0
      %2113 = vmatpush1.bf16.msra.mxu0 %v2044
      %2114 = vmatprep.subr.bf16.mxu0 0
      %2115 = vmatpush1.bf16.msra.mxu0 %v2045
      %2116 = vmatprep.subr.bf16.mxu0 0
      %2117 = vmatpush1.bf16.msra.mxu0 %v2046
      %2118 = vmatprep.subr.bf16.mxu0 0
      %2119 = vmatpush1.bf16.msra.mxu0 %v2047
      %2120 = vmatprep.subr.bf16.mxu0 0
      %2121 = vmatpush1.bf16.msra.mxu0 0
      %2122 = vmatprep.subr.bf16.mxu0 0
      %2123 = vmatpush1.bf16.msra.mxu0 0
      %2124 = vmatprep.subr.bf16.mxu0 0
      %2125 = vmatpush1.bf16.msra.mxu0 0
      %2126 = vmatprep.subr.bf16.mxu0 0
      %2127 = vmatpush1.bf16.msra.mxu0 0
      %2128 = vmatprep.mubr.bf16.mxu0 %v2061
      %2129 = vmatmul.mubr.bf16.gmra.mrb[0].mxu0 %v1952
      %v2130 = vpop.f32.mrb[0].mxu0
      %v2131 = vadd.f32 %v1794, %v2130
      %v2132 = vpop.f32.mrb[0].mxu0
      %v2133 = vpop.f32.mrb[0].mxu0
      %v2134 = vadd.f32 %v1797, %v2133
      %v2135 = vpop.f32.mrb[0].mxu0
      %2136 = vmatprep.mubr.bf16.mxu0 %v2064
      %2137 = vmatmul.mubr.bf16.gmra.mrb[0].mxu0 %v1954
      %v2138 = vpop.f32.mrb[0].mxu0
      %v2139 = vpop.f32.mrb[0].mxu0
      %v2140 = vpop.f32.mrb[0].mxu0
      %v2141 = vadd.f32 %v1804, %v2140
      %v2142 = vpop.f32.mrb[0].mxu0
      %2143 = vmatprep.mubr.bf16.mxu0 %v2067
      %2144 = vmatmul.mubr.bf16.gmra.mrb[0].mxu0 %v1956
      %v2145 = vpop.f32.mrb[0].mxu0
      %v2146 = vadd.f32 %v1809, %v2145
      %v2147 = vpop.f32.mrb[0].mxu0
      %v2148 = vpop.f32.mrb[0].mxu0
      %v2149 = vpop.f32.mrb[0].mxu0
      %2150 = vmatprep.mubr.bf16.mxu0 %v2070
      %2151 = vmatmul.mubr.bf16.gmra.mrb[0].mxu0 %v1958
      %v2152 = vpop.f32.mrb[0].mxu0
      %v2153 = vadd.f32 %v1816, %v2152
      %v2154 = vpop.f32.mrb[0].mxu0
      %v2155 = vpop.f32.mrb[0].mxu0
      %v2156 = vadd.f32 %v1819, %v2155
      %v2157 = vpop.f32.mrb[0].mxu0
      %2158 = vmatprep.mubr.bf16.mxu0 %v2073
      %2159 = vmatmul.mubr.bf16.gmra.mrb[0].mxu0 %v1960
      %v2160 = vpop.f32.mrb[0].mxu0
      %v2161 = vpop.f32.mrb[0].mxu0
      %v2162 = vpop.f32.mrb[0].mxu0
      %v2163 = vadd.f32 %v1826, %v2162
      %v2164 = vpop.f32.mrb[0].mxu0
      %2165 = vmatprep.mubr.bf16.mxu0 %v2076
      %2166 = vmatmul.mubr.bf16.gmra.mrb[0].mxu0 %v1962
      %v2167 = vpop.f32.mrb[0].mxu0
      %v2168 = vadd.f32 %v1831, %v2167
      %v2169 = vpop.f32.mrb[0].mxu0
      %v2170 = vpop.f32.mrb[0].mxu0
      %v2171 = vpop.f32.mrb[0].mxu0
      %2172 = vmatprep.mubr.bf16.mxu0 %v2079
      %2173 = vmatmul.mubr.bf16.gmra.mrb[0].mxu0 %v1964
      %v2174 = vpop.f32.mrb[0].mxu0
      %v2175 = vadd.f32 %v1838, %v2174
      %v2176 = vpop.f32.mrb[0].mxu0
      %v2177 = vpop.f32.mrb[0].mxu0
      %v2178 = vadd.f32 %v1841, %v2177
      %v2179 = vpop.f32.mrb[0].mxu0
      %2180 = vmatprep.mubr.bf16.mxu0 %v2082
      %2181 = vmatmul.mubr.bf16.gmra.mrb[0].mxu0 %v1966
      %v2182 = vpop.f32.mrb[0].mxu0
      %v2183 = vpop.f32.mrb[0].mxu0
      %v2184 = vpop.f32.mrb[0].mxu0
      %v2185 = vadd.f32 %v1848, %v2184
      %v2186 = vpop.f32.mrb[0].mxu0
      %2187 = vmatprep.mubr.bf16.mxu0 %v2085
      %2188 = vmatmul.mubr.bf16.gmra.mrb[0].mxu0 %v1968
      %v2189 = vpop.f32.mrb[0].mxu0
      %v2190 = vadd.f32 %v1853, %v2189
      %v2191 = vpop.f32.mrb[0].mxu0
      %v2192 = vpop.f32.mrb[0].mxu0
      %v2193 = vpop.f32.mrb[0].mxu0
      %2194 = vmatprep.mubr.bf16.mxu0 %v2088
      %2195 = vmatmul.mubr.bf16.gmra.mrb[0].mxu0 %v1970
      %v2196 = vpop.f32.mrb[0].mxu0
      %v2197 = vadd.f32 %v1860, %v2196
      %v2198 = vpop.f32.mrb[0].mxu0
      %v2199 = vpop.f32.mrb[0].mxu0
      %v2200 = vadd.f32 %v1863, %v2199
      %v2201 = vpop.f32.mrb[0].mxu0
      %2202 = vmatprep.mubr.bf16.mxu0 %v2091
      %2203 = vmatmul.mubr.bf16.gmra.mrb[0].mxu0 %v1972
      %v2204 = vpop.f32.mrb[0].mxu0
      %v2205 = vpop.f32.mrb[0].mxu0
      %v2206 = vpop.f32.mrb[0].mxu0
      %v2207 = vadd.f32 %v1870, %v2206
      %v2208 = vpop.f32.mrb[0].mxu0
      %2209 = vmatprep.mubr.bf16.mxu0 %v2094
      %2210 = vmatmul.mubr.bf16.gmra.mrb[0].mxu0 %v1974
      %v2211 = vpop.f32.mrb[0].mxu0
      %v2212 = vadd.f32 %v1875, %v2211
      %v2213 = vpop.f32.mrb[0].mxu0
      %v2214 = vpop.f32.mrb[0].mxu0
      %v2215 = vpop.f32.mrb[0].mxu0
      %2216 = vdwg.mxu0
      %s2217 = sadd.s32 0, 2
      %s2218 = smul.u32 %s2217, 6
      %s2219 = smul.addr %s2218, 4
      %s2220 = scalar_lea.vmem [#allocation2], %s2219
      %v2221 = vld [vmem:[%s2220] sm:$0xff]
      %v2222 = vld [vmem:[%s2220 + $0x8] sm:$0xff]
      %v2223 = vld [vmem:[%s2220 + $0x10] sm:$0xff]
      %v2224 = vld [vmem:[%s2220 + $0x18] sm:$0xff]
      %v2225 = vld [vmem:[%s2220 + $0x20] sm:$0xff]
      %v2226 = vld [vmem:[%s2220 + $0x28] sm:$0xff]
      %v2227 = vld [vmem:[%s2220 + $0x30] sm:$0xff]
      %v2228 = vld [vmem:[%s2220 + $0x38] sm:$0xff]
      %v2229 = vld [vmem:[%s2220 + $0x40] sm:$0xff]
      %v2230 = vld [vmem:[%s2220 + $0x48] sm:$0xff]
      %v2231 = vld [vmem:[%s2220 + $0x50] sm:$0xff]
      %v2232 = vld [vmem:[%s2220 + $0x58] sm:$0xff]
      %v2233 = vld [vmem:[%s2220 + $0x60] sm:$0xff]
      %v2234 = vld [vmem:[%s2220 + $0x68] sm:$0xff]
      %v2235 = vld [vmem:[%s2220 + $0x70] sm:$0xff]
      %v2236 = vld [vmem:[%s2220 + $0x78] sm:$0xff]
      %v2237 = vld [vmem:[%s2220 + $0x80] sm:$0xff]
      %v2238 = vld [vmem:[%s2220 + $0x88] sm:$0xff]
      %v2239 = vld [vmem:[%s2220 + $0x90] sm:$0xff]
      %v2240 = vld [vmem:[%s2220 + $0x98] sm:$0xff]
      %v2241 = vld [vmem:[%s2220 + $0xa0] sm:$0xff]
      %v2242 = vld [vmem:[%s2220 + $0xa8] sm:$0xff]
      %v2243 = vld [vmem:[%s2220 + $0xb0] sm:$0xff]
      %v2244 = vld [vmem:[%s2220 + $0xb8] sm:$0xff]
      %s2245 = scalar_lea.vmem %s1, 192
      %v2246 = vld [vmem:[%s2245] sm:$0xf]
      %v2247 = vld [vmem:[%s2245 + $0x4] sm:$0xf]
      %v2248 = vld [vmem:[%s2245 + $0x8] sm:$0xf]
      %v2249 = vld [vmem:[%s2245 + $0xc] sm:$0xf]
      %v2250 = vld [vmem:[%s2245 + $0x10] sm:$0xf]
      %v2251 = vld [vmem:[%s2245 + $0x14] sm:$0xf]
      %v2252 = vld [vmem:[%s2245 + $0x18] sm:$0xf]
      %v2253 = vld [vmem:[%s2245 + $0x1c] sm:$0xf]
      %v2254 = vld [vmem:[%s2245 + $0x20] sm:$0xf]
      %v2255 = vld [vmem:[%s2245 + $0x24] sm:$0xf]
      %v2256 = vld [vmem:[%s2245 + $0x28] sm:$0xf]
      %v2257 = vld [vmem:[%s2245 + $0x2c] sm:$0xf]
      %v2258 = vld [vmem:[%s2245 + $0x30] sm:$0xf]
      %v2259 = vld [vmem:[%s2245 + $0x34] sm:$0xf]
      %v2260 = vld [vmem:[%s2245 + $0x38] sm:$0xf]
      %v2261 = vld [vmem:[%s2245 + $0x3c] sm:$0xf]
      %v2262 = vld [vmem:[%s2245 + $0x40] sm:$0xf]
      %v2263 = vld [vmem:[%s2245 + $0x44] sm:$0xf]
      %v2264 = vld [vmem:[%s2245 + $0x48] sm:$0xf]
      %v2265 = vld [vmem:[%s2245 + $0x4c] sm:$0xf]
      %v2266 = vld [vmem:[%s2245 + $0x50] sm:$0xf]
      %v2267 = vld [vmem:[%s2245 + $0x54] sm:$0xf]
      %v2268 = vld [vmem:[%s2245 + $0x58] sm:$0xf]
      %v2269 = vld [vmem:[%s2245 + $0x5c] sm:$0xf]
      %v2294 = vunpack.c.l.b16 %v2221
      %v2295 = vunpack.c.h.b16 %v2221
      %v2296 = vunpack.c.l.b16 %v2222
      %v2297 = vunpack.c.h.b16 %v2222
      %v2298 = vunpack.c.l.b16 %v2223
      %v2299 = vunpack.c.h.b16 %v2223
      %v2300 = vunpack.c.l.b16 %v2224
      %v2301 = vunpack.c.h.b16 %v2224
      %v2302 = vunpack.c.l.b16 %v2225
      %v2303 = vunpack.c.h.b16 %v2225
      %v2304 = vunpack.c.l.b16 %v2226
      %v2305 = vunpack.c.h.b16 %v2226
      %v2306 = vunpack.c.l.b16 %v2227
      %v2307 = vunpack.c.h.b16 %v2227
      %v2308 = vunpack.c.l.b16 %v2228
      %v2309 = vunpack.c.h.b16 %v2228
      %v2310 = vunpack.c.l.b16 %v2229
      %v2311 = vunpack.c.h.b16 %v2229
      %v2312 = vunpack.c.l.b16 %v2230
      %v2313 = vunpack.c.h.b16 %v2230
      %v2314 = vunpack.c.l.b16 %v2231
      %v2315 = vunpack.c.h.b16 %v2231
      %v2316 = vunpack.c.l.b16 %v2232
      %v2317 = vunpack.c.h.b16 %v2232
      %v2318 = vunpack.c.l.b16 %v2233
      %v2319 = vunpack.c.h.b16 %v2233
      %v2320 = vunpack.c.l.b16 %v2234
      %v2321 = vunpack.c.h.b16 %v2234
      %v2322 = vunpack.c.l.b16 %v2235
      %v2323 = vunpack.c.h.b16 %v2235
      %v2324 = vunpack.c.l.b16 %v2236
      %v2325 = vunpack.c.h.b16 %v2236
      %v2326 = vunpack.c.l.b16 %v2237
      %v2327 = vunpack.c.h.b16 %v2237
      %v2328 = vunpack.c.l.b16 %v2238
      %v2329 = vunpack.c.h.b16 %v2238
      %v2330 = vunpack.c.l.b16 %v2239
      %v2331 = vunpack.c.h.b16 %v2239
      %v2332 = vunpack.c.l.b16 %v2240
      %v2333 = vunpack.c.h.b16 %v2240
      %v2334 = vunpack.c.l.b16 %v2241
      %v2335 = vunpack.c.h.b16 %v2241
      %v2336 = vunpack.c.l.b16 %v2242
      %v2337 = vunpack.c.h.b16 %v2242
      %v2338 = vunpack.c.l.b16 %v2243
      %v2339 = vunpack.c.h.b16 %v2243
      %v2340 = vunpack.c.l.b16 %v2244
      %v2341 = vunpack.c.h.b16 %v2244
      %v2342 = vpack.c.b16 %v2296, %v2294
      %v2343 = vpack.c.b16 %v2297, %v2295
      %v2344 = vpack.c.b16 %v2300, %v2298
      %v2345 = vpack.c.b16 %v2301, %v2299
      %v2346 = vpack.c.b16 %v2304, %v2302
      %v2347 = vpack.c.b16 %v2305, %v2303
      %v2348 = vpack.c.b16 %v2308, %v2306
      %v2349 = vpack.c.b16 %v2309, %v2307
      %v2350 = vpack.c.b16 %v2312, %v2310
      %v2351 = vpack.c.b16 %v2313, %v2311
      %v2352 = vpack.c.b16 %v2316, %v2314
      %v2353 = vpack.c.b16 %v2317, %v2315
      %v2354 = vpack.c.b16 %v2320, %v2318
      %v2355 = vpack.c.b16 %v2321, %v2319
      %v2356 = vpack.c.b16 %v2324, %v2322
      %v2357 = vpack.c.b16 %v2325, %v2323
      %v2358 = vpack.c.b16 %v2328, %v2326
      %v2359 = vpack.c.b16 %v2329, %v2327
      %v2360 = vpack.c.b16 %v2332, %v2330
      %v2361 = vpack.c.b16 %v2333, %v2331
      %v2362 = vpack.c.b16 %v2336, %v2334
      %v2363 = vpack.c.b16 %v2337, %v2335
      %v2364 = vpack.c.b16 %v2340, %v2338
      %v2365 = vpack.c.b16 %v2341, %v2339
      %v2402 = vunpack.c.l.b16 %v2246
      %v2403 = vunpack.c.l.b16 %v2247
      %v2404 = vunpack.c.l.b16 %v2248
      %v2405 = vunpack.c.l.b16 %v2249
      %v2406 = vunpack.c.l.b16 %v2250
      %v2407 = vunpack.c.l.b16 %v2251
      %v2408 = vunpack.c.l.b16 %v2252
      %v2409 = vunpack.c.l.b16 %v2253
      %v2410 = vunpack.c.l.b16 %v2254
      %v2411 = vunpack.c.l.b16 %v2255
      %v2412 = vunpack.c.l.b16 %v2256
      %v2413 = vunpack.c.l.b16 %v2257
      %v2414 = vunpack.c.l.b16 %v2258
      %v2415 = vunpack.c.l.b16 %v2259
      %v2416 = vunpack.c.l.b16 %v2260
      %v2417 = vunpack.c.l.b16 %v2261
      %v2418 = vunpack.c.l.b16 %v2262
      %v2419 = vunpack.c.l.b16 %v2263
      %v2420 = vunpack.c.l.b16 %v2264
      %v2421 = vunpack.c.l.b16 %v2265
      %v2422 = vunpack.c.l.b16 %v2266
      %v2423 = vunpack.c.l.b16 %v2267
      %v2424 = vunpack.c.l.b16 %v2268
      %v2425 = vunpack.c.l.b16 %v2269
      %v2426 = vpack.c.b16 %v2403, %v2402
      %v2427 = vpack.c.b16 %v2405, %v2404
      %v2428 = vpack.c.b16 %v2407, %v2406
      %v2429 = vpack.c.b16 %v2409, %v2408
      %v2430 = vpack.c.b16 %v2411, %v2410
      %v2431 = vpack.c.b16 %v2413, %v2412
      %v2432 = vpack.c.b16 %v2415, %v2414
      %v2433 = vpack.c.b16 %v2417, %v2416
      %v2434 = vpack.c.b16 %v2419, %v2418
      %v2435 = vpack.c.b16 %v2421, %v2420
      %v2436 = vpack.c.b16 %v2423, %v2422
      %v2437 = vpack.c.b16 %v2425, %v2424
      %v2451 = vsel %vm1722, %v2343, 0
      %v2454 = vsel %vm1722, %v2345, 0
      %v2457 = vsel %vm1722, %v2347, 0
      %v2460 = vsel %vm1722, %v2349, 0
      %v2463 = vsel %vm1722, %v2351, 0
      %v2466 = vsel %vm1722, %v2353, 0
      %v2469 = vsel %vm1722, %v2355, 0
      %v2472 = vsel %vm1722, %v2357, 0
      %v2475 = vsel %vm1722, %v2359, 0
      %v2478 = vsel %vm1722, %v2361, 0
      %v2481 = vsel %vm1722, %v2363, 0
      %v2484 = vsel %vm1722, %v2365, 0
      %2486 = vmatprep.subr.bf16.mxu0 0
      %2487 = vmatpush1.bf16.msra.mxu0 %v2426
      %2488 = vmatprep.subr.bf16.mxu0 0
      %2489 = vmatpush1.bf16.msra.mxu0 %v2427
      %2490 = vmatprep.subr.bf16.mxu0 0
      %2491 = vmatpush1.bf16.msra.mxu0 %v2428
      %2492 = vmatprep.subr.bf16.mxu0 0
      %2493 = vmatpush1.bf16.msra.mxu0 %v2429
      %2494 = vmatprep.subr.bf16.mxu0 0
      %2495 = vmatpush1.bf16.msra.mxu0 %v2430
      %2496 = vmatprep.subr.bf16.mxu0 0
      %2497 = vmatpush1.bf16.msra.mxu0 %v2431
      %2498 = vmatprep.subr.bf16.mxu0 0
      %2499 = vmatpush1.bf16.msra.mxu0 %v2432
      %2500 = vmatprep.subr.bf16.mxu0 0
      %2501 = vmatpush1.bf16.msra.mxu0 %v2433
      %2502 = vmatprep.subr.bf16.mxu0 0
      %2503 = vmatpush1.bf16.msra.mxu0 %v2434
      %2504 = vmatprep.subr.bf16.mxu0 0
      %2505 = vmatpush1.bf16.msra.mxu0 %v2435
      %2506 = vmatprep.subr.bf16.mxu0 0
      %2507 = vmatpush1.bf16.msra.mxu0 %v2436
      %2508 = vmatprep.subr.bf16.mxu0 0
      %2509 = vmatpush1.bf16.msra.mxu0 %v2437
      %2510 = vmatprep.subr.bf16.mxu0 0
      %2511 = vmatpush1.bf16.msra.mxu0 0
      %2512 = vmatprep.subr.bf16.mxu0 0
      %2513 = vmatpush1.bf16.msra.mxu0 0
      %2514 = vmatprep.subr.bf16.mxu0 0
      %2515 = vmatpush1.bf16.msra.mxu0 0
      %2516 = vmatprep.subr.bf16.mxu0 0
      %2517 = vmatpush1.bf16.msra.mxu0 0
      %2518 = vmatprep.mubr.bf16.mxu0 %v2451
      %2519 = vmatmul.mubr.bf16.gmra.mrb[0].mxu0 %v2342
      %v2520 = vpop.f32.mrb[0].mxu0
      %v2521 = vadd.f32 0.0, %v2520
      %v2522 = vpop.f32.mrb[0].mxu0
      %v2523 = vpop.f32.mrb[0].mxu0
      %v2524 = vadd.f32 0.0, %v2523
      %v2525 = vpop.f32.mrb[0].mxu0
      %2526 = vmatprep.mubr.bf16.mxu0 %v2454
      %2527 = vmatmul.mubr.bf16.gmra.mrb[0].mxu0 %v2344
      %v2528 = vpop.f32.mrb[0].mxu0
      %v2529 = vpop.f32.mrb[0].mxu0
      %v2530 = vpop.f32.mrb[0].mxu0
      %v2531 = vadd.f32 0.0, %v2530
      %v2532 = vpop.f32.mrb[0].mxu0
      %2533 = vmatprep.mubr.bf16.mxu0 %v2457
      %2534 = vmatmul.mubr.bf16.gmra.mrb[0].mxu0 %v2346
      %v2535 = vpop.f32.mrb[0].mxu0
      %v2536 = vadd.f32 0.0, %v2535
      %v2537 = vpop.f32.mrb[0].mxu0
      %v2538 = vpop.f32.mrb[0].mxu0
      %v2539 = vpop.f32.mrb[0].mxu0
      %2540 = vmatprep.mubr.bf16.mxu0 %v2460
      %2541 = vmatmul.mubr.bf16.gmra.mrb[0].mxu0 %v2348
      %v2542 = vpop.f32.mrb[0].mxu0
      %v2543 = vadd.f32 0.0, %v2542
      %v2544 = vpop.f32.mrb[0].mxu0
      %v2545 = vpop.f32.mrb[0].mxu0
      %v2546 = vadd.f32 0.0, %v2545
      %v2547 = vpop.f32.mrb[0].mxu0
      %2548 = vmatprep.mubr.bf16.mxu0 %v2463
      %2549 = vmatmul.mubr.bf16.gmra.mrb[0].mxu0 %v2350
      %v2550 = vpop.f32.mrb[0].mxu0
      %v2551 = vpop.f32.mrb[0].mxu0
      %v2552 = vpop.f32.mrb[0].mxu0
      %v2553 = vadd.f32 0.0, %v2552
      %v2554 = vpop.f32.mrb[0].mxu0
      %2555 = vmatprep.mubr.bf16.mxu0 %v2466
      %2556 = vmatmul.mubr.bf16.gmra.mrb[0].mxu0 %v2352
      %v2557 = vpop.f32.mrb[0].mxu0
      %v2558 = vadd.f32 0.0, %v2557
      %v2559 = vpop.f32.mrb[0].mxu0
      %v2560 = vpop.f32.mrb[0].mxu0
      %v2561 = vpop.f32.mrb[0].mxu0
      %2562 = vmatprep.mubr.bf16.mxu0 %v2469
      %2563 = vmatmul.mubr.bf16.gmra.mrb[0].mxu0 %v2354
      %v2564 = vpop.f32.mrb[0].mxu0
      %v2565 = vadd.f32 0.0, %v2564
      %v2566 = vpop.f32.mrb[0].mxu0
      %v2567 = vpop.f32.mrb[0].mxu0
      %v2568 = vadd.f32 0.0, %v2567
      %v2569 = vpop.f32.mrb[0].mxu0
      %2570 = vmatprep.mubr.bf16.mxu0 %v2472
      %2571 = vmatmul.mubr.bf16.gmra.mrb[0].mxu0 %v2356
      %v2572 = vpop.f32.mrb[0].mxu0
      %v2573 = vpop.f32.mrb[0].mxu0
      %v2574 = vpop.f32.mrb[0].mxu0
      %v2575 = vadd.f32 0.0, %v2574
      %v2576 = vpop.f32.mrb[0].mxu0
      %2577 = vmatprep.mubr.bf16.mxu0 %v2475
      %2578 = vmatmul.mubr.bf16.gmra.mrb[0].mxu0 %v2358
      %v2579 = vpop.f32.mrb[0].mxu0
      %v2580 = vadd.f32 0.0, %v2579
      %v2581 = vpop.f32.mrb[0].mxu0
      %v2582 = vpop.f32.mrb[0].mxu0
      %v2583 = vpop.f32.mrb[0].mxu0
      %2584 = vmatprep.mubr.bf16.mxu0 %v2478
      %2585 = vmatmul.mubr.bf16.gmra.mrb[0].mxu0 %v2360
      %v2586 = vpop.f32.mrb[0].mxu0
      %v2587 = vadd.f32 0.0, %v2586
      %v2588 = vpop.f32.mrb[0].mxu0
      %v2589 = vpop.f32.mrb[0].mxu0
      %v2590 = vadd.f32 0.0, %v2589
      %v2591 = vpop.f32.mrb[0].mxu0
      %2592 = vmatprep.mubr.bf16.mxu0 %v2481
      %2593 = vmatmul.mubr.bf16.gmra.mrb[0].mxu0 %v2362
      %v2594 = vpop.f32.mrb[0].mxu0
      %v2595 = vpop.f32.mrb[0].mxu0
      %v2596 = vpop.f32.mrb[0].mxu0
      %v2597 = vadd.f32 0.0, %v2596
      %v2598 = vpop.f32.mrb[0].mxu0
      %2599 = vmatprep.mubr.bf16.mxu0 %v2484
      %2600 = vmatmul.mubr.bf16.gmra.mrb[0].mxu0 %v2364
      %v2601 = vpop.f32.mrb[0].mxu0
      %v2602 = vadd.f32 0.0, %v2601
      %v2603 = vpop.f32.mrb[0].mxu0
      %v2604 = vpop.f32.mrb[0].mxu0
      %v2605 = vpop.f32.mrb[0].mxu0
      %2606 = vdwg.mxu0
      %v2607 = vadd.f32 %v2131, %v2521
      %v2608 = vadd.f32 %v2134, %v2524
      %v2609 = vadd.f32 %v2141, %v2531
      %v2610 = vadd.f32 %v2146, %v2536
      %v2611 = vadd.f32 %v2153, %v2543
      %v2612 = vadd.f32 %v2156, %v2546
      %v2613 = vadd.f32 %v2163, %v2553
      %v2614 = vadd.f32 %v2168, %v2558
      %v2615 = vadd.f32 %v2175, %v2565
      %v2616 = vadd.f32 %v2178, %v2568
      %v2617 = vadd.f32 %v2185, %v2575
      %v2618 = vadd.f32 %v2190, %v2580
      %v2619 = vadd.f32 %v2197, %v2587
      %v2620 = vadd.f32 %v2200, %v2590
      %v2621 = vadd.f32 %v2207, %v2597
      %v2622 = vadd.f32 %v2212, %v2602
      %s2623 = smul.u32 0, 16
      %s2624 = scalar_lea.vmem %s167, %s2623
      %2625 = vst [vmem:[%s2624] sm:$0xff] %v2607
      %2626 = vst [vmem:[%s2624 + $0x8] sm:$0xff] %v2608
      %2627 = vst [vmem:[%s2624 + $0x10] sm:$0xff] %v2609
      %2628 = vst [vmem:[%s2624 + $0x18] sm:$0xff] %v2610
      %2629 = vst [vmem:[%s2624 + $0x20] sm:$0xff] %v2611
      %2630 = vst [vmem:[%s2624 + $0x28] sm:$0xff] %v2612
      %2631 = vst [vmem:[%s2624 + $0x30] sm:$0xff] %v2613
      %2632 = vst [vmem:[%s2624 + $0x38] sm:$0xff] %v2614
      %2633 = vst [vmem:[%s2624 + $0x40] sm:$0xff] %v2615
      %2634 = vst [vmem:[%s2624 + $0x48] sm:$0xff] %v2616
      %2635 = vst [vmem:[%s2624 + $0x50] sm:$0xff] %v2617
      %2636 = vst [vmem:[%s2624 + $0x58] sm:$0xff] %v2618
      %2637 = vst [vmem:[%s2624 + $0x60] sm:$0xff] %v2619
      %2638 = vst [vmem:[%s2624 + $0x68] sm:$0xff] %v2620
      %2639 = vst [vmem:[%s2624 + $0x70] sm:$0xff] %v2621
      %2640 = vst [vmem:[%s2624 + $0x78] sm:$0xff] %v2622
      %s2641 = smul.u32 8, 6
      %s2642 = smul.addr %s2641, 4
      %s2643 = scalar_lea.vmem [#allocation2], %s2642
      %v2644 = vld [vmem:[%s2643] sm:$0xff]
      %v2645 = vld [vmem:[%s2643 + $0x8] sm:$0xff]
      %v2646 = vld [vmem:[%s2643 + $0x10] sm:$0xff]
      %v2647 = vld [vmem:[%s2643 + $0x18] sm:$0xff]
      %v2648 = vld [vmem:[%s2643 + $0x20] sm:$0xff]
      %v2649 = vld [vmem:[%s2643 + $0x28] sm:$0xff]
      %v2650 = vld [vmem:[%s2643 + $0x30] sm:$0xff]
      %v2651 = vld [vmem:[%s2643 + $0x38] sm:$0xff]
      %v2652 = vld [vmem:[%s2643 + $0x40] sm:$0xff]
      %v2653 = vld [vmem:[%s2643 + $0x48] sm:$0xff]
      %v2654 = vld [vmem:[%s2643 + $0x50] sm:$0xff]
      %v2655 = vld [vmem:[%s2643 + $0x58] sm:$0xff]
      %v2656 = vld [vmem:[%s2643 + $0x60] sm:$0xff]
      %v2657 = vld [vmem:[%s2643 + $0x68] sm:$0xff]
      %v2658 = vld [vmem:[%s2643 + $0x70] sm:$0xff]
      %v2659 = vld [vmem:[%s2643 + $0x78] sm:$0xff]
      %v2660 = vld [vmem:[%s2643 + $0x80] sm:$0xff]
      %v2661 = vld [vmem:[%s2643 + $0x88] sm:$0xff]
      %v2662 = vld [vmem:[%s2643 + $0x90] sm:$0xff]
      %v2663 = vld [vmem:[%s2643 + $0x98] sm:$0xff]
      %v2664 = vld [vmem:[%s2643 + $0xa0] sm:$0xff]
      %v2665 = vld [vmem:[%s2643 + $0xa8] sm:$0xff]
      %v2666 = vld [vmem:[%s2643 + $0xb0] sm:$0xff]
      %v2667 = vld [vmem:[%s2643 + $0xb8] sm:$0xff]
      %v2668 = vld [vmem:[%s1] sm:$0xf]
      %v2669 = vld [vmem:[%s1 + $0x4] sm:$0xf]
      %v2670 = vld [vmem:[%s1 + $0x8] sm:$0xf]
      %v2671 = vld [vmem:[%s1 + $0xc] sm:$0xf]
      %v2672 = vld [vmem:[%s1 + $0x10] sm:$0xf]
      %v2673 = vld [vmem:[%s1 + $0x14] sm:$0xf]
      %v2674 = vld [vmem:[%s1 + $0x18] sm:$0xf]
      %v2675 = vld [vmem:[%s1 + $0x1c] sm:$0xf]
      %v2676 = vld [vmem:[%s1 + $0x20] sm:$0xf]
      %v2677 = vld [vmem:[%s1 + $0x24] sm:$0xf]
      %v2678 = vld [vmem:[%s1 + $0x28] sm:$0xf]
      %v2679 = vld [vmem:[%s1 + $0x2c] sm:$0xf]
      %v2680 = vld [vmem:[%s1 + $0x30] sm:$0xf]
      %v2681 = vld [vmem:[%s1 + $0x34] sm:$0xf]
      %v2682 = vld [vmem:[%s1 + $0x38] sm:$0xf]
      %v2683 = vld [vmem:[%s1 + $0x3c] sm:$0xf]
      %v2684 = vld [vmem:[%s1 + $0x40] sm:$0xf]
      %v2685 = vld [vmem:[%s1 + $0x44] sm:$0xf]
      %v2686 = vld [vmem:[%s1 + $0x48] sm:$0xf]
      %v2687 = vld [vmem:[%s1 + $0x4c] sm:$0xf]
      %v2688 = vld [vmem:[%s1 + $0x50] sm:$0xf]
      %v2689 = vld [vmem:[%s1 + $0x54] sm:$0xf]
      %v2690 = vld [vmem:[%s1 + $0x58] sm:$0xf]
      %v2691 = vld [vmem:[%s1 + $0x5c] sm:$0xf]
      %s2692 = sadd.s32 8, 1
      %s2693 = smul.u32 %s2692, 6
      %s2694 = smul.addr %s2693, 4
      %s2695 = scalar_lea.vmem [#allocation2], %s2694
      %v2696 = vld [vmem:[%s2695] sm:$0xff]
      %v2697 = vld [vmem:[%s2695 + $0x8] sm:$0xff]
      %v2698 = vld [vmem:[%s2695 + $0x10] sm:$0xff]
      %v2699 = vld [vmem:[%s2695 + $0x18] sm:$0xff]
      %v2700 = vld [vmem:[%s2695 + $0x20] sm:$0xff]
      %v2701 = vld [vmem:[%s2695 + $0x28] sm:$0xff]
      %v2702 = vld [vmem:[%s2695 + $0x30] sm:$0xff]
      %v2703 = vld [vmem:[%s2695 + $0x38] sm:$0xff]
      %v2704 = vld [vmem:[%s2695 + $0x40] sm:$0xff]
      %v2705 = vld [vmem:[%s2695 + $0x48] sm:$0xff]
      %v2706 = vld [vmem:[%s2695 + $0x50] sm:$0xff]
      %v2707 = vld [vmem:[%s2695 + $0x58] sm:$0xff]
      %v2708 = vld [vmem:[%s2695 + $0x60] sm:$0xff]
      %v2709 = vld [vmem:[%s2695 + $0x68] sm:$0xff]
      %v2710 = vld [vmem:[%s2695 + $0x70] sm:$0xff]
      %v2711 = vld [vmem:[%s2695 + $0x78] sm:$0xff]
      %v2712 = vld [vmem:[%s2695 + $0x80] sm:$0xff]
      %v2713 = vld [vmem:[%s2695 + $0x88] sm:$0xff]
      %v2714 = vld [vmem:[%s2695 + $0x90] sm:$0xff]
      %v2715 = vld [vmem:[%s2695 + $0x98] sm:$0xff]
      %v2716 = vld [vmem:[%s2695 + $0xa0] sm:$0xff]
      %v2717 = vld [vmem:[%s2695 + $0xa8] sm:$0xff]
      %v2718 = vld [vmem:[%s2695 + $0xb0] sm:$0xff]
      %v2719 = vld [vmem:[%s2695 + $0xb8] sm:$0xff]
      %v2720 = vld [vmem:[%s1517] sm:$0xf]
      %v2721 = vld [vmem:[%s1517 + $0x4] sm:$0xf]
      %v2722 = vld [vmem:[%s1517 + $0x8] sm:$0xf]
      %v2723 = vld [vmem:[%s1517 + $0xc] sm:$0xf]
      %v2724 = vld [vmem:[%s1517 + $0x10] sm:$0xf]
      %v2725 = vld [vmem:[%s1517 + $0x14] sm:$0xf]
      %v2726 = vld [vmem:[%s1517 + $0x18] sm:$0xf]
      %v2727 = vld [vmem:[%s1517 + $0x1c] sm:$0xf]
      %v2728 = vld [vmem:[%s1517 + $0x20] sm:$0xf]
      %v2729 = vld [vmem:[%s1517 + $0x24] sm:$0xf]
      %v2730 = vld [vmem:[%s1517 + $0x28] sm:$0xf]
      %v2731 = vld [vmem:[%s1517 + $0x2c] sm:$0xf]
      %v2732 = vld [vmem:[%s1517 + $0x30] sm:$0xf]
      %v2733 = vld [vmem:[%s1517 + $0x34] sm:$0xf]
      %v2734 = vld [vmem:[%s1517 + $0x38] sm:$0xf]
      %v2735 = vld [vmem:[%s1517 + $0x3c] sm:$0xf]
      %v2736 = vld [vmem:[%s1517 + $0x40] sm:$0xf]
      %v2737 = vld [vmem:[%s1517 + $0x44] sm:$0xf]
      %v2738 = vld [vmem:[%s1517 + $0x48] sm:$0xf]
      %v2739 = vld [vmem:[%s1517 + $0x4c] sm:$0xf]
      %v2740 = vld [vmem:[%s1517 + $0x50] sm:$0xf]
      %v2741 = vld [vmem:[%s1517 + $0x54] sm:$0xf]
      %v2742 = vld [vmem:[%s1517 + $0x58] sm:$0xf]
      %v2743 = vld [vmem:[%s1517 + $0x5c] sm:$0xf]
      %v2768 = vunpack.c.l.b16 %v2696
      %v2769 = vunpack.c.h.b16 %v2696
      %v2770 = vunpack.c.l.b16 %v2697
      %v2771 = vunpack.c.h.b16 %v2697
      %v2772 = vunpack.c.l.b16 %v2698
      %v2773 = vunpack.c.h.b16 %v2698
      %v2774 = vunpack.c.l.b16 %v2699
      %v2775 = vunpack.c.h.b16 %v2699
      %v2776 = vunpack.c.l.b16 %v2700
      %v2777 = vunpack.c.h.b16 %v2700
      %v2778 = vunpack.c.l.b16 %v2701
      %v2779 = vunpack.c.h.b16 %v2701
      %v2780 = vunpack.c.l.b16 %v2702
      %v2781 = vunpack.c.h.b16 %v2702
      %v2782 = vunpack.c.l.b16 %v2703
      %v2783 = vunpack.c.h.b16 %v2703
      %v2784 = vunpack.c.l.b16 %v2704
      %v2785 = vunpack.c.h.b16 %v2704
      %v2786 = vunpack.c.l.b16 %v2705
      %v2787 = vunpack.c.h.b16 %v2705
      %v2788 = vunpack.c.l.b16 %v2706
      %v2789 = vunpack.c.h.b16 %v2706
      %v2790 = vunpack.c.l.b16 %v2707
      %v2791 = vunpack.c.h.b16 %v2707
      %v2792 = vunpack.c.l.b16 %v2708
      %v2793 = vunpack.c.h.b16 %v2708
      %v2794 = vunpack.c.l.b16 %v2709
      %v2795 = vunpack.c.h.b16 %v2709
      %v2796 = vunpack.c.l.b16 %v2710
      %v2797 = vunpack.c.h.b16 %v2710
      %v2798 = vunpack.c.l.b16 %v2711
      %v2799 = vunpack.c.h.b16 %v2711
      %v2800 = vunpack.c.l.b16 %v2712
      %v2801 = vunpack.c.h.b16 %v2712
      %v2802 = vunpack.c.l.b16 %v2713
      %v2803 = vunpack.c.h.b16 %v2713
      %v2804 = vunpack.c.l.b16 %v2714
      %v2805 = vunpack.c.h.b16 %v2714
      %v2806 = vunpack.c.l.b16 %v2715
      %v2807 = vunpack.c.h.b16 %v2715
      %v2808 = vunpack.c.l.b16 %v2716
      %v2809 = vunpack.c.h.b16 %v2716
      %v2810 = vunpack.c.l.b16 %v2717
      %v2811 = vunpack.c.h.b16 %v2717
      %v2812 = vunpack.c.l.b16 %v2718
      %v2813 = vunpack.c.h.b16 %v2718
      %v2814 = vunpack.c.l.b16 %v2719
      %v2815 = vunpack.c.h.b16 %v2719
      %v2816 = vpack.c.b16 %v2770, %v2768
      %v2817 = vpack.c.b16 %v2771, %v2769
      %v2818 = vpack.c.b16 %v2774, %v2772
      %v2819 = vpack.c.b16 %v2775, %v2773
      %v2820 = vpack.c.b16 %v2778, %v2776
      %v2821 = vpack.c.b16 %v2779, %v2777
      %v2822 = vpack.c.b16 %v2782, %v2780
      %v2823 = vpack.c.b16 %v2783, %v2781
      %v2824 = vpack.c.b16 %v2786, %v2784
      %v2825 = vpack.c.b16 %v2787, %v2785
      %v2826 = vpack.c.b16 %v2790, %v2788
      %v2827 = vpack.c.b16 %v2791, %v2789
      %v2828 = vpack.c.b16 %v2794, %v2792
      %v2829 = vpack.c.b16 %v2795, %v2793
      %v2830 = vpack.c.b16 %v2798, %v2796
      %v2831 = vpack.c.b16 %v2799, %v2797
      %v2832 = vpack.c.b16 %v2802, %v2800
      %v2833 = vpack.c.b16 %v2803, %v2801
      %v2834 = vpack.c.b16 %v2806, %v2804
      %v2835 = vpack.c.b16 %v2807, %v2805
      %v2836 = vpack.c.b16 %v2810, %v2808
      %v2837 = vpack.c.b16 %v2811, %v2809
      %v2838 = vpack.c.b16 %v2814, %v2812
      %v2839 = vpack.c.b16 %v2815, %v2813
      %v2876 = vunpack.c.l.b16 %v2720
      %v2877 = vunpack.c.l.b16 %v2721
      %v2878 = vunpack.c.l.b16 %v2722
      %v2879 = vunpack.c.l.b16 %v2723
      %v2880 = vunpack.c.l.b16 %v2724
      %v2881 = vunpack.c.l.b16 %v2725
      %v2882 = vunpack.c.l.b16 %v2726
      %v2883 = vunpack.c.l.b16 %v2727
      %v2884 = vunpack.c.l.b16 %v2728
      %v2885 = vunpack.c.l.b16 %v2729
      %v2886 = vunpack.c.l.b16 %v2730
      %v2887 = vunpack.c.l.b16 %v2731
      %v2888 = vunpack.c.l.b16 %v2732
      %v2889 = vunpack.c.l.b16 %v2733
      %v2890 = vunpack.c.l.b16 %v2734
      %v2891 = vunpack.c.l.b16 %v2735
      %v2892 = vunpack.c.l.b16 %v2736
      %v2893 = vunpack.c.l.b16 %v2737
      %v2894 = vunpack.c.l.b16 %v2738
      %v2895 = vunpack.c.l.b16 %v2739
      %v2896 = vunpack.c.l.b16 %v2740
      %v2897 = vunpack.c.l.b16 %v2741
      %v2898 = vunpack.c.l.b16 %v2742
      %v2899 = vunpack.c.l.b16 %v2743
      %v2900 = vpack.c.b16 %v2877, %v2876
      %v2901 = vpack.c.b16 %v2879, %v2878
      %v2902 = vpack.c.b16 %v2881, %v2880
      %v2903 = vpack.c.b16 %v2883, %v2882
      %v2904 = vpack.c.b16 %v2885, %v2884
      %v2905 = vpack.c.b16 %v2887, %v2886
      %v2906 = vpack.c.b16 %v2889, %v2888
      %v2907 = vpack.c.b16 %v2891, %v2890
      %v2908 = vpack.c.b16 %v2893, %v2892
      %v2909 = vpack.c.b16 %v2895, %v2894
      %v2910 = vpack.c.b16 %v2897, %v2896
      %v2911 = vpack.c.b16 %v2899, %v2898
      %v2925 = vsel %vm1722, %v2817, 0
      %v2928 = vsel %vm1722, %v2819, 0
      %v2931 = vsel %vm1722, %v2821, 0
      %v2934 = vsel %vm1722, %v2823, 0
      %v2937 = vsel %vm1722, %v2825, 0
      %v2940 = vsel %vm1722, %v2827, 0
      %v2943 = vsel %vm1722, %v2829, 0
      %v2946 = vsel %vm1722, %v2831, 0
      %v2949 = vsel %vm1722, %v2833, 0
      %v2952 = vsel %vm1722, %v2835, 0
      %v2955 = vsel %vm1722, %v2837, 0
      %v2958 = vsel %vm1722, %v2839, 0
      %2960 = vmatprep.subr.bf16.mxu0 0
      %2961 = vmatpush1.bf16.msra.mxu0 %v2900
      %2962 = vmatprep.subr.bf16.mxu0 0
      %2963 = vmatpush1.bf16.msra.mxu0 %v2901
      %2964 = vmatprep.subr.bf16.mxu0 0
      %2965 = vmatpush1.bf16.msra.mxu0 %v2902
      %2966 = vmatprep.subr.bf16.mxu0 0
      %2967 = vmatpush1.bf16.msra.mxu0 %v2903
      %2968 = vmatprep.subr.bf16.mxu0 0
      %2969 = vmatpush1.bf16.msra.mxu0 %v2904
      %2970 = vmatprep.subr.bf16.mxu0 0
      %2971 = vmatpush1.bf16.msra.mxu0 %v2905
      %2972 = vmatprep.subr.bf16.mxu0 0
      %2973 = vmatpush1.bf16.msra.mxu0 %v2906
      %2974 = vmatprep.subr.bf16.mxu0 0
      %2975 = vmatpush1.bf16.msra.mxu0 %v2907
      %2976 = vmatprep.subr.bf16.mxu0 0
      %2977 = vmatpush1.bf16.msra.mxu0 %v2908
      %2978 = vmatprep.subr.bf16.mxu0 0
      %2979 = vmatpush1.bf16.msra.mxu0 %v2909
      %2980 = vmatprep.subr.bf16.mxu0 0
      %2981 = vmatpush1.bf16.msra.mxu0 %v2910
      %2982 = vmatprep.subr.bf16.mxu0 0
      %2983 = vmatpush1.bf16.msra.mxu0 %v2911
      %2984 = vmatprep.subr.bf16.mxu0 0
      %2985 = vmatpush1.bf16.msra.mxu0 0
      %2986 = vmatprep.subr.bf16.mxu0 0
      %2987 = vmatpush1.bf16.msra.mxu0 0
      %2988 = vmatprep.subr.bf16.mxu0 0
      %2989 = vmatpush1.bf16.msra.mxu0 0
      %2990 = vmatprep.subr.bf16.mxu0 0
      %2991 = vmatpush1.bf16.msra.mxu0 0
      %2992 = vmatprep.mubr.bf16.mxu0 %v2925
      %2993 = vmatmul.mubr.bf16.gmra.mrb[0].mxu0 %v2816
      %v2994 = vpop.f32.mrb[0].mxu0
      %v2995 = vadd.f32 0.0, %v2994
      %v2996 = vpop.f32.mrb[0].mxu0
      %v2997 = vpop.f32.mrb[0].mxu0
      %v2998 = vadd.f32 0.0, %v2997
      %v2999 = vpop.f32.mrb[0].mxu0
      %3000 = vmatprep.mubr.bf16.mxu0 %v2928
      %3001 = vmatmul.mubr.bf16.gmra.mrb[0].mxu0 %v2818
      %v3002 = vpop.f32.mrb[0].mxu0
      %v3003 = vpop.f32.mrb[0].mxu0
      %v3004 = vpop.f32.mrb[0].mxu0
      %v3005 = vadd.f32 0.0, %v3004
      %v3006 = vpop.f32.mrb[0].mxu0
      %3007 = vmatprep.mubr.bf16.mxu0 %v2931
      %3008 = vmatmul.mubr.bf16.gmra.mrb[0].mxu0 %v2820
      %v3009 = vpop.f32.mrb[0].mxu0
      %v3010 = vadd.f32 0.0, %v3009
      %v3011 = vpop.f32.mrb[0].mxu0
      %v3012 = vpop.f32.mrb[0].mxu0
      %v3013 = vpop.f32.mrb[0].mxu0
      %3014 = vmatprep.mubr.bf16.mxu0 %v2934
      %3015 = vmatmul.mubr.bf16.gmra.mrb[0].mxu0 %v2822
      %v3016 = vpop.f32.mrb[0].mxu0
      %v3017 = vadd.f32 0.0, %v3016
      %v3018 = vpop.f32.mrb[0].mxu0
      %v3019 = vpop.f32.mrb[0].mxu0
      %v3020 = vadd.f32 0.0, %v3019
      %v3021 = vpop.f32.mrb[0].mxu0
      %3022 = vmatprep.mubr.bf16.mxu0 %v2937
      %3023 = vmatmul.mubr.bf16.gmra.mrb[0].mxu0 %v2824
      %v3024 = vpop.f32.mrb[0].mxu0
      %v3025 = vpop.f32.mrb[0].mxu0
      %v3026 = vpop.f32.mrb[0].mxu0
      %v3027 = vadd.f32 0.0, %v3026
      %v3028 = vpop.f32.mrb[0].mxu0
      %3029 = vmatprep.mubr.bf16.mxu0 %v2940
      %3030 = vmatmul.mubr.bf16.gmra.mrb[0].mxu0 %v2826
      %v3031 = vpop.f32.mrb[0].mxu0
      %v3032 = vadd.f32 0.0, %v3031
      %v3033 = vpop.f32.mrb[0].mxu0
      %v3034 = vpop.f32.mrb[0].mxu0
      %v3035 = vpop.f32.mrb[0].mxu0
      %3036 = vmatprep.mubr.bf16.mxu0 %v2943
      %3037 = vmatmul.mubr.bf16.gmra.mrb[0].mxu0 %v2828
      %v3038 = vpop.f32.mrb[0].mxu0
      %v3039 = vadd.f32 0.0, %v3038
      %v3040 = vpop.f32.mrb[0].mxu0
      %v3041 = vpop.f32.mrb[0].mxu0
      %v3042 = vadd.f32 0.0, %v3041
      %v3043 = vpop.f32.mrb[0].mxu0
      %3044 = vmatprep.mubr.bf16.mxu0 %v2946
      %3045 = vmatmul.mubr.bf16.gmra.mrb[0].mxu0 %v2830
      %v3046 = vpop.f32.mrb[0].mxu0
      %v3047 = vpop.f32.mrb[0].mxu0
      %v3048 = vpop.f32.mrb[0].mxu0
      %v3049 = vadd.f32 0.0, %v3048
      %v3050 = vpop.f32.mrb[0].mxu0
      %3051 = vmatprep.mubr.bf16.mxu0 %v2949
      %3052 = vmatmul.mubr.bf16.gmra.mrb[0].mxu0 %v2832
      %v3053 = vpop.f32.mrb[0].mxu0
      %v3054 = vadd.f32 0.0, %v3053
      %v3055 = vpop.f32.mrb[0].mxu0
      %v3056 = vpop.f32.mrb[0].mxu0
      %v3057 = vpop.f32.mrb[0].mxu0
      %3058 = vmatprep.mubr.bf16.mxu0 %v2952
      %3059 = vmatmul.mubr.bf16.gmra.mrb[0].mxu0 %v2834
      %v3060 = vpop.f32.mrb[0].mxu0
      %v3061 = vadd.f32 0.0, %v3060
      %v3062 = vpop.f32.mrb[0].mxu0
      %v3063 = vpop.f32.mrb[0].mxu0
      %v3064 = vadd.f32 0.0, %v3063
      %v3065 = vpop.f32.mrb[0].mxu0
      %3066 = vmatprep.mubr.bf16.mxu0 %v2955
      %3067 = vmatmul.mubr.bf16.gmra.mrb[0].mxu0 %v2836
      %v3068 = vpop.f32.mrb[0].mxu0
      %v3069 = vpop.f32.mrb[0].mxu0
      %v3070 = vpop.f32.mrb[0].mxu0
      %v3071 = vadd.f32 0.0, %v3070
      %v3072 = vpop.f32.mrb[0].mxu0
      %3073 = vmatprep.mubr.bf16.mxu0 %v2958
      %3074 = vmatmul.mubr.bf16.gmra.mrb[0].mxu0 %v2838
      %v3075 = vpop.f32.mrb[0].mxu0
      %v3076 = vadd.f32 0.0, %v3075
      %v3077 = vpop.f32.mrb[0].mxu0
      %v3078 = vpop.f32.mrb[0].mxu0
      %v3079 = vpop.f32.mrb[0].mxu0
      %3080 = vdwg.mxu0
      %v3105 = vunpack.c.l.b16 %v2644
      %v3106 = vunpack.c.h.b16 %v2644
      %v3107 = vunpack.c.l.b16 %v2645
      %v3108 = vunpack.c.h.b16 %v2645
      %v3109 = vunpack.c.l.b16 %v2646
      %v3110 = vunpack.c.h.b16 %v2646
      %v3111 = vunpack.c.l.b16 %v2647
      %v3112 = vunpack.c.h.b16 %v2647
      %v3113 = vunpack.c.l.b16 %v2648
      %v3114 = vunpack.c.h.b16 %v2648
      %v3115 = vunpack.c.l.b16 %v2649
      %v3116 = vunpack.c.h.b16 %v2649
      %v3117 = vunpack.c.l.b16 %v2650
      %v3118 = vunpack.c.h.b16 %v2650
      %v3119 = vunpack.c.l.b16 %v2651
      %v3120 = vunpack.c.h.b16 %v2651
      %v3121 = vunpack.c.l.b16 %v2652
      %v3122 = vunpack.c.h.b16 %v2652
      %v3123 = vunpack.c.l.b16 %v2653
      %v3124 = vunpack.c.h.b16 %v2653
      %v3125 = vunpack.c.l.b16 %v2654
      %v3126 = vunpack.c.h.b16 %v2654
      %v3127 = vunpack.c.l.b16 %v2655
      %v3128 = vunpack.c.h.b16 %v2655
      %v3129 = vunpack.c.l.b16 %v2656
      %v3130 = vunpack.c.h.b16 %v2656
      %v3131 = vunpack.c.l.b16 %v2657
      %v3132 = vunpack.c.h.b16 %v2657
      %v3133 = vunpack.c.l.b16 %v2658
      %v3134 = vunpack.c.h.b16 %v2658
      %v3135 = vunpack.c.l.b16 %v2659
      %v3136 = vunpack.c.h.b16 %v2659
      %v3137 = vunpack.c.l.b16 %v2660
      %v3138 = vunpack.c.h.b16 %v2660
      %v3139 = vunpack.c.l.b16 %v2661
      %v3140 = vunpack.c.h.b16 %v2661
      %v3141 = vunpack.c.l.b16 %v2662
      %v3142 = vunpack.c.h.b16 %v2662
      %v3143 = vunpack.c.l.b16 %v2663
      %v3144 = vunpack.c.h.b16 %v2663
      %v3145 = vunpack.c.l.b16 %v2664
      %v3146 = vunpack.c.h.b16 %v2664
      %v3147 = vunpack.c.l.b16 %v2665
      %v3148 = vunpack.c.h.b16 %v2665
      %v3149 = vunpack.c.l.b16 %v2666
      %v3150 = vunpack.c.h.b16 %v2666
      %v3151 = vunpack.c.l.b16 %v2667
      %v3152 = vunpack.c.h.b16 %v2667
      %v3153 = vpack.c.b16 %v3107, %v3105
      %v3154 = vpack.c.b16 %v3108, %v3106
      %v3155 = vpack.c.b16 %v3111, %v3109
      %v3156 = vpack.c.b16 %v3112, %v3110
      %v3157 = vpack.c.b16 %v3115, %v3113
      %v3158 = vpack.c.b16 %v3116, %v3114
      %v3159 = vpack.c.b16 %v3119, %v3117
      %v3160 = vpack.c.b16 %v3120, %v3118
      %v3161 = vpack.c.b16 %v3123, %v3121
      %v3162 = vpack.c.b16 %v3124, %v3122
      %v3163 = vpack.c.b16 %v3127, %v3125
      %v3164 = vpack.c.b16 %v3128, %v3126
      %v3165 = vpack.c.b16 %v3131, %v3129
      %v3166 = vpack.c.b16 %v3132, %v3130
      %v3167 = vpack.c.b16 %v3135, %v3133
      %v3168 = vpack.c.b16 %v3136, %v3134
      %v3169 = vpack.c.b16 %v3139, %v3137
      %v3170 = vpack.c.b16 %v3140, %v3138
      %v3171 = vpack.c.b16 %v3143, %v3141
      %v3172 = vpack.c.b16 %v3144, %v3142
      %v3173 = vpack.c.b16 %v3147, %v3145
      %v3174 = vpack.c.b16 %v3148, %v3146
      %v3175 = vpack.c.b16 %v3151, %v3149
      %v3176 = vpack.c.b16 %v3152, %v3150
      %v3213 = vunpack.c.l.b16 %v2668
      %v3214 = vunpack.c.l.b16 %v2669
      %v3215 = vunpack.c.l.b16 %v2670
      %v3216 = vunpack.c.l.b16 %v2671
      %v3217 = vunpack.c.l.b16 %v2672
      %v3218 = vunpack.c.l.b16 %v2673
      %v3219 = vunpack.c.l.b16 %v2674
      %v3220 = vunpack.c.l.b16 %v2675
      %v3221 = vunpack.c.l.b16 %v2676
      %v3222 = vunpack.c.l.b16 %v2677
      %v3223 = vunpack.c.l.b16 %v2678
      %v3224 = vunpack.c.l.b16 %v2679
      %v3225 = vunpack.c.l.b16 %v2680
      %v3226 = vunpack.c.l.b16 %v2681
      %v3227 = vunpack.c.l.b16 %v2682
      %v3228 = vunpack.c.l.b16 %v2683
      %v3229 = vunpack.c.l.b16 %v2684
      %v3230 = vunpack.c.l.b16 %v2685
      %v3231 = vunpack.c.l.b16 %v2686
      %v3232 = vunpack.c.l.b16 %v2687
      %v3233 = vunpack.c.l.b16 %v2688
      %v3234 = vunpack.c.l.b16 %v2689
      %v3235 = vunpack.c.l.b16 %v2690
      %v3236 = vunpack.c.l.b16 %v2691
      %v3237 = vpack.c.b16 %v3214, %v3213
      %v3238 = vpack.c.b16 %v3216, %v3215
      %v3239 = vpack.c.b16 %v3218, %v3217
      %v3240 = vpack.c.b16 %v3220, %v3219
      %v3241 = vpack.c.b16 %v3222, %v3221
      %v3242 = vpack.c.b16 %v3224, %v3223
      %v3243 = vpack.c.b16 %v3226, %v3225
      %v3244 = vpack.c.b16 %v3228, %v3227
      %v3245 = vpack.c.b16 %v3230, %v3229
      %v3246 = vpack.c.b16 %v3232, %v3231
      %v3247 = vpack.c.b16 %v3234, %v3233
      %v3248 = vpack.c.b16 %v3236, %v3235
      %v3262 = vsel %vm1722, %v3154, 0
      %v3265 = vsel %vm1722, %v3156, 0
      %v3268 = vsel %vm1722, %v3158, 0
      %v3271 = vsel %vm1722, %v3160, 0
      %v3274 = vsel %vm1722, %v3162, 0
      %v3277 = vsel %vm1722, %v3164, 0
      %v3280 = vsel %vm1722, %v3166, 0
      %v3283 = vsel %vm1722, %v3168, 0
      %v3286 = vsel %vm1722, %v3170, 0
      %v3289 = vsel %vm1722, %v3172, 0
      %v3292 = vsel %vm1722, %v3174, 0
      %v3295 = vsel %vm1722, %v3176, 0
      %3297 = vmatprep.subr.bf16.mxu0 0
      %3298 = vmatpush1.bf16.msra.mxu0 %v3237
      %3299 = vmatprep.subr.bf16.mxu0 0
      %3300 = vmatpush1.bf16.msra.mxu0 %v3238
      %3301 = vmatprep.subr.bf16.mxu0 0
      %3302 = vmatpush1.bf16.msra.mxu0 %v3239
      %3303 = vmatprep.subr.bf16.mxu0 0
      %3304 = vmatpush1.bf16.msra.mxu0 %v3240
      %3305 = vmatprep.subr.bf16.mxu0 0
      %3306 = vmatpush1.bf16.msra.mxu0 %v3241
      %3307 = vmatprep.subr.bf16.mxu0 0
      %3308 = vmatpush1.bf16.msra.mxu0 %v3242
      %3309 = vmatprep.subr.bf16.mxu0 0
      %3310 = vmatpush1.bf16.msra.mxu0 %v3243
      %3311 = vmatprep.subr.bf16.mxu0 0
      %3312 = vmatpush1.bf16.msra.mxu0 %v3244
      %3313 = vmatprep.subr.bf16.mxu0 0
      %3314 = vmatpush1.bf16.msra.mxu0 %v3245
      %3315 = vmatprep.subr.bf16.mxu0 0
      %3316 = vmatpush1.bf16.msra.mxu0 %v3246
      %3317 = vmatprep.subr.bf16.mxu0 0
      %3318 = vmatpush1.bf16.msra.mxu0 %v3247
      %3319 = vmatprep.subr.bf16.mxu0 0
      %3320 = vmatpush1.bf16.msra.mxu0 %v3248
      %3321 = vmatprep.subr.bf16.mxu0 0
      %3322 = vmatpush1.bf16.msra.mxu0 0
      %3323 = vmatprep.subr.bf16.mxu0 0
      %3324 = vmatpush1.bf16.msra.mxu0 0
      %3325 = vmatprep.subr.bf16.mxu0 0
      %3326 = vmatpush1.bf16.msra.mxu0 0
      %3327 = vmatprep.subr.bf16.mxu0 0
      %3328 = vmatpush1.bf16.msra.mxu0 0
      %3329 = vmatprep.mubr.bf16.mxu0 %v3262
      %3330 = vmatmul.mubr.bf16.gmra.mrb[0].mxu0 %v3153
      %v3331 = vpop.f32.mrb[0].mxu0
      %v3332 = vadd.f32 %v2995, %v3331
      %v3333 = vpop.f32.mrb[0].mxu0
      %v3334 = vpop.f32.mrb[0].mxu0
      %v3335 = vadd.f32 %v2998, %v3334
      %v3336 = vpop.f32.mrb[0].mxu0
      %3337 = vmatprep.mubr.bf16.mxu0 %v3265
      %3338 = vmatmul.mubr.bf16.gmra.mrb[0].mxu0 %v3155
      %v3339 = vpop.f32.mrb[0].mxu0
      %v3340 = vpop.f32.mrb[0].mxu0
      %v3341 = vpop.f32.mrb[0].mxu0
      %v3342 = vadd.f32 %v3005, %v3341
      %v3343 = vpop.f32.mrb[0].mxu0
      %3344 = vmatprep.mubr.bf16.mxu0 %v3268
      %3345 = vmatmul.mubr.bf16.gmra.mrb[0].mxu0 %v3157
      %v3346 = vpop.f32.mrb[0].mxu0
      %v3347 = vadd.f32 %v3010, %v3346
      %v3348 = vpop.f32.mrb[0].mxu0
      %v3349 = vpop.f32.mrb[0].mxu0
      %v3350 = vpop.f32.mrb[0].mxu0
      %3351 = vmatprep.mubr.bf16.mxu0 %v3271
      %3352 = vmatmul.mubr.bf16.gmra.mrb[0].mxu0 %v3159
      %v3353 = vpop.f32.mrb[0].mxu0
      %v3354 = vadd.f32 %v3017, %v3353
      %v3355 = vpop.f32.mrb[0].mxu0
      %v3356 = vpop.f32.mrb[0].mxu0
      %v3357 = vadd.f32 %v3020, %v3356
      %v3358 = vpop.f32.mrb[0].mxu0
      %3359 = vmatprep.mubr.bf16.mxu0 %v3274
      %3360 = vmatmul.mubr.bf16.gmra.mrb[0].mxu0 %v3161
      %v3361 = vpop.f32.mrb[0].mxu0
      %v3362 = vpop.f32.mrb[0].mxu0
      %v3363 = vpop.f32.mrb[0].mxu0
      %v3364 = vadd.f32 %v3027, %v3363
      %v3365 = vpop.f32.mrb[0].mxu0
      %3366 = vmatprep.mubr.bf16.mxu0 %v3277
      %3367 = vmatmul.mubr.bf16.gmra.mrb[0].mxu0 %v3163
      %v3368 = vpop.f32.mrb[0].mxu0
      %v3369 = vadd.f32 %v3032, %v3368
      %v3370 = vpop.f32.mrb[0].mxu0
      %v3371 = vpop.f32.mrb[0].mxu0
      %v3372 = vpop.f32.mrb[0].mxu0
      %3373 = vmatprep.mubr.bf16.mxu0 %v3280
      %3374 = vmatmul.mubr.bf16.gmra.mrb[0].mxu0 %v3165
      %v3375 = vpop.f32.mrb[0].mxu0
      %v3376 = vadd.f32 %v3039, %v3375
      %v3377 = vpop.f32.mrb[0].mxu0
      %v3378 = vpop.f32.mrb[0].mxu0
      %v3379 = vadd.f32 %v3042, %v3378
      %v3380 = vpop.f32.mrb[0].mxu0
      %3381 = vmatprep.mubr.bf16.mxu0 %v3283
      %3382 = vmatmul.mubr.bf16.gmra.mrb[0].mxu0 %v3167
      %v3383 = vpop.f32.mrb[0].mxu0
      %v3384 = vpop.f32.mrb[0].mxu0
      %v3385 = vpop.f32.mrb[0].mxu0
      %v3386 = vadd.f32 %v3049, %v3385
      %v3387 = vpop.f32.mrb[0].mxu0
      %3388 = vmatprep.mubr.bf16.mxu0 %v3286
      %3389 = vmatmul.mubr.bf16.gmra.mrb[0].mxu0 %v3169
      %v3390 = vpop.f32.mrb[0].mxu0
      %v3391 = vadd.f32 %v3054, %v3390
      %v3392 = vpop.f32.mrb[0].mxu0
      %v3393 = vpop.f32.mrb[0].mxu0
      %v3394 = vpop.f32.mrb[0].mxu0
      %3395 = vmatprep.mubr.bf16.mxu0 %v3289
      %3396 = vmatmul.mubr.bf16.gmra.mrb[0].mxu0 %v3171
      %v3397 = vpop.f32.mrb[0].mxu0
      %v3398 = vadd.f32 %v3061, %v3397
      %v3399 = vpop.f32.mrb[0].mxu0
      %v3400 = vpop.f32.mrb[0].mxu0
      %v3401 = vadd.f32 %v3064, %v3400
      %v3402 = vpop.f32.mrb[0].mxu0
      %3403 = vmatprep.mubr.bf16.mxu0 %v3292
      %3404 = vmatmul.mubr.bf16.gmra.mrb[0].mxu0 %v3173
      %v3405 = vpop.f32.mrb[0].mxu0
      %v3406 = vpop.f32.mrb[0].mxu0
      %v3407 = vpop.f32.mrb[0].mxu0
      %v3408 = vadd.f32 %v3071, %v3407
      %v3409 = vpop.f32.mrb[0].mxu0
      %3410 = vmatprep.mubr.bf16.mxu0 %v3295
      %3411 = vmatmul.mubr.bf16.gmra.mrb[0].mxu0 %v3175
      %v3412 = vpop.f32.mrb[0].mxu0
      %v3413 = vadd.f32 %v3076, %v3412
      %v3414 = vpop.f32.mrb[0].mxu0
      %v3415 = vpop.f32.mrb[0].mxu0
      %v3416 = vpop.f32.mrb[0].mxu0
      %3417 = vdwg.mxu0
      %s3418 = sadd.s32 8, 2
      %s3419 = smul.u32 %s3418, 6
      %s3420 = smul.addr %s3419, 4
      %s3421 = scalar_lea.vmem [#allocation2], %s3420
      %v3422 = vld [vmem:[%s3421] sm:$0xff]
      %v3423 = vld [vmem:[%s3421 + $0x8] sm:$0xff]
      %v3424 = vld [vmem:[%s3421 + $0x10] sm:$0xff]
      %v3425 = vld [vmem:[%s3421 + $0x18] sm:$0xff]
      %v3426 = vld [vmem:[%s3421 + $0x20] sm:$0xff]
      %v3427 = vld [vmem:[%s3421 + $0x28] sm:$0xff]
      %v3428 = vld [vmem:[%s3421 + $0x30] sm:$0xff]
      %v3429 = vld [vmem:[%s3421 + $0x38] sm:$0xff]
      %v3430 = vld [vmem:[%s3421 + $0x40] sm:$0xff]
      %v3431 = vld [vmem:[%s3421 + $0x48] sm:$0xff]
      %v3432 = vld [vmem:[%s3421 + $0x50] sm:$0xff]
      %v3433 = vld [vmem:[%s3421 + $0x58] sm:$0xff]
      %v3434 = vld [vmem:[%s3421 + $0x60] sm:$0xff]
      %v3435 = vld [vmem:[%s3421 + $0x68] sm:$0xff]
      %v3436 = vld [vmem:[%s3421 + $0x70] sm:$0xff]
      %v3437 = vld [vmem:[%s3421 + $0x78] sm:$0xff]
      %v3438 = vld [vmem:[%s3421 + $0x80] sm:$0xff]
      %v3439 = vld [vmem:[%s3421 + $0x88] sm:$0xff]
      %v3440 = vld [vmem:[%s3421 + $0x90] sm:$0xff]
      %v3441 = vld [vmem:[%s3421 + $0x98] sm:$0xff]
      %v3442 = vld [vmem:[%s3421 + $0xa0] sm:$0xff]
      %v3443 = vld [vmem:[%s3421 + $0xa8] sm:$0xff]
      %v3444 = vld [vmem:[%s3421 + $0xb0] sm:$0xff]
      %v3445 = vld [vmem:[%s3421 + $0xb8] sm:$0xff]
      %v3446 = vld [vmem:[%s2245] sm:$0xf]
      %v3447 = vld [vmem:[%s2245 + $0x4] sm:$0xf]
      %v3448 = vld [vmem:[%s2245 + $0x8] sm:$0xf]
      %v3449 = vld [vmem:[%s2245 + $0xc] sm:$0xf]
      %v3450 = vld [vmem:[%s2245 + $0x10] sm:$0xf]
      %v3451 = vld [vmem:[%s2245 + $0x14] sm:$0xf]
      %v3452 = vld [vmem:[%s2245 + $0x18] sm:$0xf]
      %v3453 = vld [vmem:[%s2245 + $0x1c] sm:$0xf]
      %v3454 = vld [vmem:[%s2245 + $0x20] sm:$0xf]
      %v3455 = vld [vmem:[%s2245 + $0x24] sm:$0xf]
      %v3456 = vld [vmem:[%s2245 + $0x28] sm:$0xf]
      %v3457 = vld [vmem:[%s2245 + $0x2c] sm:$0xf]
      %v3458 = vld [vmem:[%s2245 + $0x30] sm:$0xf]
      %v3459 = vld [vmem:[%s2245 + $0x34] sm:$0xf]
      %v3460 = vld [vmem:[%s2245 + $0x38] sm:$0xf]
      %v3461 = vld [vmem:[%s2245 + $0x3c] sm:$0xf]
      %v3462 = vld [vmem:[%s2245 + $0x40] sm:$0xf]
      %v3463 = vld [vmem:[%s2245 + $0x44] sm:$0xf]
      %v3464 = vld [vmem:[%s2245 + $0x48] sm:$0xf]
      %v3465 = vld [vmem:[%s2245 + $0x4c] sm:$0xf]
      %v3466 = vld [vmem:[%s2245 + $0x50] sm:$0xf]
      %v3467 = vld [vmem:[%s2245 + $0x54] sm:$0xf]
      %v3468 = vld [vmem:[%s2245 + $0x58] sm:$0xf]
      %v3469 = vld [vmem:[%s2245 + $0x5c] sm:$0xf]
      %v3494 = vunpack.c.l.b16 %v3422
      %v3495 = vunpack.c.h.b16 %v3422
      %v3496 = vunpack.c.l.b16 %v3423
      %v3497 = vunpack.c.h.b16 %v3423
      %v3498 = vunpack.c.l.b16 %v3424
      %v3499 = vunpack.c.h.b16 %v3424
      %v3500 = vunpack.c.l.b16 %v3425
      %v3501 = vunpack.c.h.b16 %v3425
      %v3502 = vunpack.c.l.b16 %v3426
      %v3503 = vunpack.c.h.b16 %v3426
      %v3504 = vunpack.c.l.b16 %v3427
      %v3505 = vunpack.c.h.b16 %v3427
      %v3506 = vunpack.c.l.b16 %v3428
      %v3507 = vunpack.c.h.b16 %v3428
      %v3508 = vunpack.c.l.b16 %v3429
      %v3509 = vunpack.c.h.b16 %v3429
      %v3510 = vunpack.c.l.b16 %v3430
      %v3511 = vunpack.c.h.b16 %v3430
      %v3512 = vunpack.c.l.b16 %v3431
      %v3513 = vunpack.c.h.b16 %v3431
      %v3514 = vunpack.c.l.b16 %v3432
      %v3515 = vunpack.c.h.b16 %v3432
      %v3516 = vunpack.c.l.b16 %v3433
      %v3517 = vunpack.c.h.b16 %v3433
      %v3518 = vunpack.c.l.b16 %v3434
      %v3519 = vunpack.c.h.b16 %v3434
      %v3520 = vunpack.c.l.b16 %v3435
      %v3521 = vunpack.c.h.b16 %v3435
      %v3522 = vunpack.c.l.b16 %v3436
      %v3523 = vunpack.c.h.b16 %v3436
      %v3524 = vunpack.c.l.b16 %v3437
      %v3525 = vunpack.c.h.b16 %v3437
      %v3526 = vunpack.c.l.b16 %v3438
      %v3527 = vunpack.c.h.b16 %v3438
      %v3528 = vunpack.c.l.b16 %v3439
      %v3529 = vunpack.c.h.b16 %v3439
      %v3530 = vunpack.c.l.b16 %v3440
      %v3531 = vunpack.c.h.b16 %v3440
      %v3532 = vunpack.c.l.b16 %v3441
      %v3533 = vunpack.c.h.b16 %v3441
      %v3534 = vunpack.c.l.b16 %v3442
      %v3535 = vunpack.c.h.b16 %v3442
      %v3536 = vunpack.c.l.b16 %v3443
      %v3537 = vunpack.c.h.b16 %v3443
      %v3538 = vunpack.c.l.b16 %v3444
      %v3539 = vunpack.c.h.b16 %v3444
      %v3540 = vunpack.c.l.b16 %v3445
      %v3541 = vunpack.c.h.b16 %v3445
      %v3542 = vpack.c.b16 %v3496, %v3494
      %v3543 = vpack.c.b16 %v3497, %v3495
      %v3544 = vpack.c.b16 %v3500, %v3498
      %v3545 = vpack.c.b16 %v3501, %v3499
      %v3546 = vpack.c.b16 %v3504, %v3502
      %v3547 = vpack.c.b16 %v3505, %v3503
      %v3548 = vpack.c.b16 %v3508, %v3506
      %v3549 = vpack.c.b16 %v3509, %v3507
      %v3550 = vpack.c.b16 %v3512, %v3510
      %v3551 = vpack.c.b16 %v3513, %v3511
      %v3552 = vpack.c.b16 %v3516, %v3514
      %v3553 = vpack.c.b16 %v3517, %v3515
      %v3554 = vpack.c.b16 %v3520, %v3518
      %v3555 = vpack.c.b16 %v3521, %v3519
      %v3556 = vpack.c.b16 %v3524, %v3522
      %v3557 = vpack.c.b16 %v3525, %v3523
      %v3558 = vpack.c.b16 %v3528, %v3526
      %v3559 = vpack.c.b16 %v3529, %v3527
      %v3560 = vpack.c.b16 %v3532, %v3530
      %v3561 = vpack.c.b16 %v3533, %v3531
      %v3562 = vpack.c.b16 %v3536, %v3534
      %v3563 = vpack.c.b16 %v3537, %v3535
      %v3564 = vpack.c.b16 %v3540, %v3538
      %v3565 = vpack.c.b16 %v3541, %v3539
      %v3602 = vunpack.c.l.b16 %v3446
      %v3603 = vunpack.c.l.b16 %v3447
      %v3604 = vunpack.c.l.b16 %v3448
      %v3605 = vunpack.c.l.b16 %v3449
      %v3606 = vunpack.c.l.b16 %v3450
      %v3607 = vunpack.c.l.b16 %v3451
      %v3608 = vunpack.c.l.b16 %v3452
      %v3609 = vunpack.c.l.b16 %v3453
      %v3610 = vunpack.c.l.b16 %v3454
      %v3611 = vunpack.c.l.b16 %v3455
      %v3612 = vunpack.c.l.b16 %v3456
      %v3613 = vunpack.c.l.b16 %v3457
      %v3614 = vunpack.c.l.b16 %v3458
      %v3615 = vunpack.c.l.b16 %v3459
      %v3616 = vunpack.c.l.b16 %v3460
      %v3617 = vunpack.c.l.b16 %v3461
      %v3618 = vunpack.c.l.b16 %v3462
      %v3619 = vunpack.c.l.b16 %v3463
      %v3620 = vunpack.c.l.b16 %v3464
      %v3621 = vunpack.c.l.b16 %v3465
      %v3622 = vunpack.c.l.b16 %v3466
      %v3623 = vunpack.c.l.b16 %v3467
      %v3624 = vunpack.c.l.b16 %v3468
      %v3625 = vunpack.c.l.b16 %v3469
      %v3626 = vpack.c.b16 %v3603, %v3602
      %v3627 = vpack.c.b16 %v3605, %v3604
      %v3628 = vpack.c.b16 %v3607, %v3606
      %v3629 = vpack.c.b16 %v3609, %v3608
      %v3630 = vpack.c.b16 %v3611, %v3610
      %v3631 = vpack.c.b16 %v3613, %v3612
      %v3632 = vpack.c.b16 %v3615, %v3614
      %v3633 = vpack.c.b16 %v3617, %v3616
      %v3634 = vpack.c.b16 %v3619, %v3618
      %v3635 = vpack.c.b16 %v3621, %v3620
      %v3636 = vpack.c.b16 %v3623, %v3622
      %v3637 = vpack.c.b16 %v3625, %v3624
      %v3651 = vsel %vm1722, %v3543, 0
      %v3654 = vsel %vm1722, %v3545, 0
      %v3657 = vsel %vm1722, %v3547, 0
      %v3660 = vsel %vm1722, %v3549, 0
      %v3663 = vsel %vm1722, %v3551, 0
      %v3666 = vsel %vm1722, %v3553, 0
      %v3669 = vsel %vm1722, %v3555, 0
      %v3672 = vsel %vm1722, %v3557, 0
      %v3675 = vsel %vm1722, %v3559, 0
      %v3678 = vsel %vm1722, %v3561, 0
      %v3681 = vsel %vm1722, %v3563, 0
      %v3684 = vsel %vm1722, %v3565, 0
      %3686 = vmatprep.subr.bf16.mxu0 0
      %3687 = vmatpush1.bf16.msra.mxu0 %v3626
      %3688 = vmatprep.subr.bf16.mxu0 0
      %3689 = vmatpush1.bf16.msra.mxu0 %v3627
      %3690 = vmatprep.subr.bf16.mxu0 0
      %3691 = vmatpush1.bf16.msra.mxu0 %v3628
      %3692 = vmatprep.subr.bf16.mxu0 0
      %3693 = vmatpush1.bf16.msra.mxu0 %v3629
      %3694 = vmatprep.subr.bf16.mxu0 0
      %3695 = vmatpush1.bf16.msra.mxu0 %v3630
      %3696 = vmatprep.subr.bf16.mxu0 0
      %3697 = vmatpush1.bf16.msra.mxu0 %v3631
      %3698 = vmatprep.subr.bf16.mxu0 0
      %3699 = vmatpush1.bf16.msra.mxu0 %v3632
      %3700 = vmatprep.subr.bf16.mxu0 0
      %3701 = vmatpush1.bf16.msra.mxu0 %v3633
      %3702 = vmatprep.subr.bf16.mxu0 0
      %3703 = vmatpush1.bf16.msra.mxu0 %v3634
      %3704 = vmatprep.subr.bf16.mxu0 0
      %3705 = vmatpush1.bf16.msra.mxu0 %v3635
      %3706 = vmatprep.subr.bf16.mxu0 0
      %3707 = vmatpush1.bf16.msra.mxu0 %v3636
      %3708 = vmatprep.subr.bf16.mxu0 0
      %3709 = vmatpush1.bf16.msra.mxu0 %v3637
      %3710 = vmatprep.subr.bf16.mxu0 0
      %3711 = vmatpush1.bf16.msra.mxu0 0
      %3712 = vmatprep.subr.bf16.mxu0 0
      %3713 = vmatpush1.bf16.msra.mxu0 0
      %3714 = vmatprep.subr.bf16.mxu0 0
      %3715 = vmatpush1.bf16.msra.mxu0 0
      %3716 = vmatprep.subr.bf16.mxu0 0
      %3717 = vmatpush1.bf16.msra.mxu0 0
      %3718 = vmatprep.mubr.bf16.mxu0 %v3651
      %3719 = vmatmul.mubr.bf16.gmra.mrb[0].mxu0 %v3542
      %v3720 = vpop.f32.mrb[0].mxu0
      %v3721 = vadd.f32 0.0, %v3720
      %v3722 = vpop.f32.mrb[0].mxu0
      %v3723 = vpop.f32.mrb[0].mxu0
      %v3724 = vadd.f32 0.0, %v3723
      %v3725 = vpop.f32.mrb[0].mxu0
      %3726 = vmatprep.mubr.bf16.mxu0 %v3654
      %3727 = vmatmul.mubr.bf16.gmra.mrb[0].mxu0 %v3544
      %v3728 = vpop.f32.mrb[0].mxu0
      %v3729 = vpop.f32.mrb[0].mxu0
      %v3730 = vpop.f32.mrb[0].mxu0
      %v3731 = vadd.f32 0.0, %v3730
      %v3732 = vpop.f32.mrb[0].mxu0
      %3733 = vmatprep.mubr.bf16.mxu0 %v3657
      %3734 = vmatmul.mubr.bf16.gmra.mrb[0].mxu0 %v3546
      %v3735 = vpop.f32.mrb[0].mxu0
      %v3736 = vadd.f32 0.0, %v3735
      %v3737 = vpop.f32.mrb[0].mxu0
      %v3738 = vpop.f32.mrb[0].mxu0
      %v3739 = vpop.f32.mrb[0].mxu0
      %3740 = vmatprep.mubr.bf16.mxu0 %v3660
      %3741 = vmatmul.mubr.bf16.gmra.mrb[0].mxu0 %v3548
      %v3742 = vpop.f32.mrb[0].mxu0
      %v3743 = vadd.f32 0.0, %v3742
      %v3744 = vpop.f32.mrb[0].mxu0
      %v3745 = vpop.f32.mrb[0].mxu0
      %v3746 = vadd.f32 0.0, %v3745
      %v3747 = vpop.f32.mrb[0].mxu0
      %3748 = vmatprep.mubr.bf16.mxu0 %v3663
      %3749 = vmatmul.mubr.bf16.gmra.mrb[0].mxu0 %v3550
      %v3750 = vpop.f32.mrb[0].mxu0
      %v3751 = vpop.f32.mrb[0].mxu0
      %v3752 = vpop.f32.mrb[0].mxu0
      %v3753 = vadd.f32 0.0, %v3752
      %v3754 = vpop.f32.mrb[0].mxu0
      %3755 = vmatprep.mubr.bf16.mxu0 %v3666
      %3756 = vmatmul.mubr.bf16.gmra.mrb[0].mxu0 %v3552
      %v3757 = vpop.f32.mrb[0].mxu0
      %v3758 = vadd.f32 0.0, %v3757
      %v3759 = vpop.f32.mrb[0].mxu0
      %v3760 = vpop.f32.mrb[0].mxu0
      %v3761 = vpop.f32.mrb[0].mxu0
      %3762 = vmatprep.mubr.bf16.mxu0 %v3669
      %3763 = vmatmul.mubr.bf16.gmra.mrb[0].mxu0 %v3554
      %v3764 = vpop.f32.mrb[0].mxu0
      %v3765 = vadd.f32 0.0, %v3764
      %v3766 = vpop.f32.mrb[0].mxu0
      %v3767 = vpop.f32.mrb[0].mxu0
      %v3768 = vadd.f32 0.0, %v3767
      %v3769 = vpop.f32.mrb[0].mxu0
      %3770 = vmatprep.mubr.bf16.mxu0 %v3672
      %3771 = vmatmul.mubr.bf16.gmra.mrb[0].mxu0 %v3556
      %v3772 = vpop.f32.mrb[0].mxu0
      %v3773 = vpop.f32.mrb[0].mxu0
      %v3774 = vpop.f32.mrb[0].mxu0
      %v3775 = vadd.f32 0.0, %v3774
      %v3776 = vpop.f32.mrb[0].mxu0
      %3777 = vmatprep.mubr.bf16.mxu0 %v3675
      %3778 = vmatmul.mubr.bf16.gmra.mrb[0].mxu0 %v3558
      %v3779 = vpop.f32.mrb[0].mxu0
      %v3780 = vadd.f32 0.0, %v3779
      %v3781 = vpop.f32.mrb[0].mxu0
      %v3782 = vpop.f32.mrb[0].mxu0
      %v3783 = vpop.f32.mrb[0].mxu0
      %3784 = vmatprep.mubr.bf16.mxu0 %v3678
      %3785 = vmatmul.mubr.bf16.gmra.mrb[0].mxu0 %v3560
      %v3786 = vpop.f32.mrb[0].mxu0
      %v3787 = vadd.f32 0.0, %v3786
      %v3788 = vpop.f32.mrb[0].mxu0
      %v3789 = vpop.f32.mrb[0].mxu0
      %v3790 = vadd.f32 0.0, %v3789
      %v3791 = vpop.f32.mrb[0].mxu0
      %3792 = vmatprep.mubr.bf16.mxu0 %v3681
      %3793 = vmatmul.mubr.bf16.gmra.mrb[0].mxu0 %v3562
      %v3794 = vpop.f32.mrb[0].mxu0
      %v3795 = vpop.f32.mrb[0].mxu0
      %v3796 = vpop.f32.mrb[0].mxu0
      %v3797 = vadd.f32 0.0, %v3796
      %v3798 = vpop.f32.mrb[0].mxu0
      %3799 = vmatprep.mubr.bf16.mxu0 %v3684
      %3800 = vmatmul.mubr.bf16.gmra.mrb[0].mxu0 %v3564
      %v3801 = vpop.f32.mrb[0].mxu0
      %v3802 = vadd.f32 0.0, %v3801
      %v3803 = vpop.f32.mrb[0].mxu0
      %v3804 = vpop.f32.mrb[0].mxu0
      %v3805 = vpop.f32.mrb[0].mxu0
      %3806 = vdwg.mxu0
      %v3807 = vadd.f32 %v3332, %v3721
      %v3808 = vadd.f32 %v3335, %v3724
      %v3809 = vadd.f32 %v3342, %v3731
      %v3810 = vadd.f32 %v3347, %v3736
      %v3811 = vadd.f32 %v3354, %v3743
      %v3812 = vadd.f32 %v3357, %v3746
      %v3813 = vadd.f32 %v3364, %v3753
      %v3814 = vadd.f32 %v3369, %v3758
      %v3815 = vadd.f32 %v3376, %v3765
      %v3816 = vadd.f32 %v3379, %v3768
      %v3817 = vadd.f32 %v3386, %v3775
      %v3818 = vadd.f32 %v3391, %v3780
      %v3819 = vadd.f32 %v3398, %v3787
      %v3820 = vadd.f32 %v3401, %v3790
      %v3821 = vadd.f32 %v3408, %v3797
      %v3822 = vadd.f32 %v3413, %v3802
      %s3823 = smul.u32 8, 16
      %s3824 = scalar_lea.vmem %s167, %s3823
      %3825 = vst [vmem:[%s3824] sm:$0xff] %v3807
      %3826 = vst [vmem:[%s3824 + $0x8] sm:$0xff] %v3808
      %3827 = vst [vmem:[%s3824 + $0x10] sm:$0xff] %v3809
      %3828 = vst [vmem:[%s3824 + $0x18] sm:$0xff] %v3810
      %3829 = vst [vmem:[%s3824 + $0x20] sm:$0xff] %v3811
      %3830 = vst [vmem:[%s3824 + $0x28] sm:$0xff] %v3812
      %3831 = vst [vmem:[%s3824 + $0x30] sm:$0xff] %v3813
      %3832 = vst [vmem:[%s3824 + $0x38] sm:$0xff] %v3814
      %3833 = vst [vmem:[%s3824 + $0x40] sm:$0xff] %v3815
      %3834 = vst [vmem:[%s3824 + $0x48] sm:$0xff] %v3816
      %3835 = vst [vmem:[%s3824 + $0x50] sm:$0xff] %v3817
      %3836 = vst [vmem:[%s3824 + $0x58] sm:$0xff] %v3818
      %3837 = vst [vmem:[%s3824 + $0x60] sm:$0xff] %v3819
      %3838 = vst [vmem:[%s3824 + $0x68] sm:$0xff] %v3820
      %3839 = vst [vmem:[%s3824 + $0x70] sm:$0xff] %v3821
      %3840 = vst [vmem:[%s3824 + $0x78] sm:$0xff] %v3822
      %s3841 = smul.u32 16, %s18
      %p3842 = scmp.lt.s32.totalorder %s17, 1
      %s3843 = scalar_select %p3842, %s17, 1
      %p3844 = scmp.lt.s32.totalorder %s3841, 15
      %s3845 = scalar_select %p3844, %s3841, 15
      %s3846 = smul.addr %s3845, 2
      %s3847 = smul.addr %s3843, 32
      %s3848 = sadd.s32 %s3846, %s3847
      %s3849 = smul.addr %s3848, 8
      %s3850 = scalar_lea.vmem %s2, %s3849
      // Predicated region
      $region29: #{upsample.1} parent=27 // pred_check
        %p3851 = pneg %p92
      $region30: #{upsample.1} parent=27 // pred_check_branch
        %3853 = sbr.rel (%p3851) target = $region32
      $region31: #{upsample.1} parent=27 // pred_region
        %s3854 = smul.u32 16, %s18
      $region32: #{upsample.1} parent=27 // pred_fallthru
        _
    $region28: #{upsample.1} parent=5 // pred_fallthru
      _
    %p3855 = scmp.le.s32.totalorder 2, %s8
    // Predicated region
    $region33: #{upsample.1} parent=5 // pred_check
      %p3856 = pneg %p3855
    $region34: #{upsample.1} parent=5 // pred_check_branch
      %3858 = sbr.rel (%p3856) target = $region36
    $region35: #{upsample.1} parent=5 // pred_region
      %s3859 = ssub.s32 %s8, 2
      // Predicated region
      $region37: #{upsample.1} parent=35 // pred_check
        %p3860 = pneg %p98
      $region38: #{upsample.1} parent=35 // pred_check_branch
        %3862 = sbr.rel (%p3860) target = $region40
      $region39: #{upsample.1} parent=35 // pred_region
        %s3863 = smul.u32 16, %s20
        %p3864 = scmp.lt.s32.totalorder %s19, 1
        %s3865 = scalar_select %p3864, %s19, 1
        %p3866 = scmp.lt.s32.totalorder %s3863, 15
        %s3867 = scalar_select %p3866, %s3863, 15
        %s3868 = smul.addr %s3867, 2
        %s3869 = smul.addr %s3865, 32
        %s3870 = sadd.s32 %s3868, %s3869
        %s3871 = smul.addr %s3870, 8
        %s3872 = scalar_lea.vmem %s2, %s3871
      $region40: #{upsample.1} parent=35 // pred_fallthru
        _
    $region36: #{upsample.1} parent=5 // pred_fallthru
      _
  $region6: #{upsample.1} parent=0 // loop_footer
    %s12 = sadd.s32 1, %s8
  $region7: #{upsample.1} parent=0 // loop_footer_branch
    %7 = sbr.rel target = $region3
  $region8: #{upsample.1} parent=0 // loop_exit
    _

</llo_original>
